<compile_context>
chip_gen: v7x
topology: tpu7x:2x2x1
jax: 0.10.0
libtpu: 0.0.40
codegen_flags: <defaults>
</compile_context>

<pallas_src>
import functools

import jax
import jax.numpy as jnp
from jax.experimental import pallas as pl
from jax.experimental.pallas import tpu as pltpu


def _cnn_block_kernel(x_ref, w_ref, scale_ref, shift_ref, o_ref,
                      xpad_ref, lhs_ref, yh_ref, *, NB, H, W, KH, KW, ph, pw):
    """One batch-block of: Conv2d('same') -> BN(eval) -> ReLU -> Dropout(eval) -> MaxPool2d(2,2).

    x_ref      : (NB, H, W, Cin)              f32  unpadded NHWC input block
    w_ref      : (KH*KW*Cin, Cp)              bf16 im2col weights (Cout zero-padded to Cp)
    scale/shift: (1, Cp)                      f32  conv-bias + eval-BatchNorm folded per channel
    o_ref      : (NB, H//2, W//2, Cp)         f32  pooled output block (lane-dense)
    xpad_ref   : (NB, H+KH-1, W+KW-1, Cin)    f32  VMEM scratch: 'same' halo built on-chip
    lhs_ref    : (NB, H, W, KH*KW*Cin)        bf16 VMEM scratch: im2col LHS (MXU-ready)
    yh_ref     : (NB, H//2, W, Cp)            f32  VMEM scratch: after H-pool
    """
    Cin = x_ref.shape[-1]
    Cp = o_ref.shape[-1]
    KK = KH * KW * Cin
    Ho, Wo = H // 2, W // 2
    M = NB * H * W

    # ---- 'same' padding on-chip: zero-filled VMEM halo (no padded HBM copy) ----
    xpad_ref[...] = jnp.zeros_like(xpad_ref)
    xpad_ref[:, ph:ph + H, pw:pw + W, :] = x_ref[...]

    # ---- im2col: each of the KH*KW taps goes to its channel slot of the bf16 LHS ----
    for dy in range(KH):
        for dx in range(KW):
            t = (dy * KW + dx) * Cin
            lhs_ref[:, :, :, t:t + Cin] = (
                xpad_ref[:, dy:dy + H, dx:dx + W, :].astype(jnp.bfloat16))

    # ---- ONE fused MXU matmul over K = KH*KW*Cin (bf16 operands, f32 accumulate) ----
    lhs = lhs_ref[...].reshape(M, KK)                                    # bf16, layout-preserving
    acc = jnp.dot(lhs, w_ref[...], preferred_element_type=jnp.float32)   # (M, Cp) f32

    # ---- conv bias + eval-mode BatchNorm folded into scale/shift, then ReLU ----
    y = jnp.maximum(acc * scale_ref[...] + shift_ref[...], 0.0)
    # Dropout(p) is identity in eval mode.
    # TODO(synk): training-mode Dropout mask / batch-statistic BatchNorm not implemented.

    # ---- MaxPool2d(2, 2) ----
    # H-pool: split H into (Ho, 2) on outer dims (layout-preserving) and max.
    y5 = y.reshape(NB, Ho, 2, W, Cp)
    yh_ref[...] = jnp.maximum(y5[:, :, 0], y5[:, :, 1])                  # (NB, Ho, W, Cp)
    # W-pool: strided sublane reads (even/odd columns) + max, one dense store.
    o_ref[...] = jnp.maximum(yh_ref[:, :, pl.ds(0, Wo, stride=2), :],
                             yh_ref[:, :, pl.ds(1, Wo, stride=2), :])


def cnn_block_forward(x_nchw, conv_w, conv_b, bn_gamma, bn_beta, bn_mean, bn_var,
                      eps=1e-5):
    """Eval-mode forward of CNNBlock. Inputs/weights follow PyTorch conventions (NCHW/OIHW)."""
    N, Cin, H, W = x_nchw.shape
    Cout, _, KH, KW = conv_w.shape
    assert H % 2 == 0 and W % 2 == 0
    Ho, Wo = H // 2, W // 2

    Cp = ((Cout + 127) // 128) * 128          # lane-dense padded channel count
    KK = KH * KW * Cin

    # Fold as much batch as possible into each grid step (amortize per-step
    # overhead); the remaining grid axis stays "parallel" for megacore sharding.
    NB = 1
    for d in range(1, min(N, 8) + 1):
        if N % d == 0:
            NB = d
    grid = (N // NB,)

    # NCHW -> NHWC (channels on the TPU lane dim).
    x = jnp.transpose(x_nchw, (0, 2, 3, 1)).astype(jnp.float32)

    # (Cout, Cin, KH, KW) -> (KH, KW, Cin, Cout) -> (KK, Cout) -> pad Cout -> bf16.
    w2d = jnp.transpose(conv_w, (2, 3, 1, 0)).astype(jnp.float32).reshape(KK, Cout)
    w2d = jnp.pad(w2d, ((0, 0), (0, Cp - Cout))).astype(jnp.bfloat16)

    # Fold conv bias + eval-mode BatchNorm into per-channel scale/shift (f32), pad to Cp.
    inv_std = 1.0 / jnp.sqrt(bn_var.astype(jnp.float32) + eps)
    scale = bn_gamma.astype(jnp.float32) * inv_std
    shift = bn_beta.astype(jnp.float32) + scale * (conv_b.astype(jnp.float32)
                                                   - bn_mean.astype(jnp.float32))
    scale = jnp.pad(scale, (0, Cp - Cout)).reshape(1, Cp)
    shift = jnp.pad(shift, (0, Cp - Cout)).reshape(1, Cp)

    # PyTorch 'same' split: begin = (k-1)//2, remainder at the end.
    ph, pw = (KH - 1) // 2, (KW - 1) // 2

    kernel = functools.partial(_cnn_block_kernel, NB=NB, H=H, W=W, KH=KH, KW=KW,
                               ph=ph, pw=pw)

    out = pl.pallas_call(
        kernel,
        out_shape=jax.ShapeDtypeStruct((N, Ho, Wo, Cp), jnp.float32),
        grid=grid,
        in_specs=[
            pl.BlockSpec((NB, H, W, Cin), lambda b: (b, 0, 0, 0)),
            pl.BlockSpec((KK, Cp), lambda b: (0, 0)),
            pl.BlockSpec((1, Cp), lambda b: (0, 0)),
            pl.BlockSpec((1, Cp), lambda b: (0, 0)),
        ],
        out_specs=pl.BlockSpec((NB, Ho, Wo, Cp), lambda b: (b, 0, 0, 0)),
        scratch_shapes=[
            pltpu.VMEM((NB, H + KH - 1, W + KW - 1, Cin), jnp.float32),   # padded input
            pltpu.VMEM((NB, H, W, KK), jnp.bfloat16),                     # im2col LHS (bf16)
            pltpu.VMEM((NB, Ho, W, Cp), jnp.float32),                     # H-pooled rows
        ],
        compiler_params=pltpu.CompilerParams(
            dimension_semantics=("parallel",),
            vmem_limit_bytes=32 * 1024 * 1024),
    )(x, w2d, scale, shift)

    # Drop channel padding; NHWC -> NCHW to match the PyTorch output convention.
    return jnp.transpose(out[..., :Cout], (0, 3, 1, 2))


def _reference_forward(x, conv_w, conv_b, gamma, beta, mean, var, eps=1e-5):
    """Pure-JAX reference (eval-mode), for correctness checking only."""
    y = jax.lax.conv_general_dilated(
        x, conv_w, window_strides=(1, 1), padding="SAME",
        dimension_numbers=("NCHW", "OIHW", "NCHW"),
        precision=jax.lax.Precision.HIGHEST)
    y = y + conv_b.reshape(1, -1, 1, 1)
    y = gamma.reshape(1, -1, 1, 1) * (y - mean.reshape(1, -1, 1, 1)) \
        / jnp.sqrt(var.reshape(1, -1, 1, 1) + eps) + beta.reshape(1, -1, 1, 1)
    y = jnp.maximum(y, 0.0)
    y = jax.lax.reduce_window(y, -jnp.inf, jax.lax.max,
                              (1, 1, 2, 2), (1, 1, 2, 2), "VALID")
    return y


if __name__ == "__main__":
    N, Cin, Cout, H, W, K = 2, 4, 8, 16, 16, 3

    key = jax.random.PRNGKey(0)
    k_x, k_w, k_b, k_g, k_be, k_m, k_v = jax.random.split(key, 7)

    x = jax.random.normal(k_x, (N, Cin, H, W), dtype=jnp.float32)
    conv_w = 0.1 * jax.random.normal(k_w, (Cout, Cin, K, K), dtype=jnp.float32)
    conv_b = 0.1 * jax.random.normal(k_b, (Cout,), dtype=jnp.float32)
    bn_gamma = 0.5 + jax.random.uniform(k_g, (Cout,), dtype=jnp.float32)
    bn_beta = 0.1 * jax.random.normal(k_be, (Cout,), dtype=jnp.float32)
    bn_mean = 0.1 * jax.random.normal(k_m, (Cout,), dtype=jnp.float32)
    bn_var = 0.5 + jax.random.uniform(k_v, (Cout,), dtype=jnp.float32)

    out = cnn_block_forward(x, conv_w, conv_b, bn_gamma, bn_beta, bn_mean, bn_var)
    out = jax.block_until_ready(out)

    # Reference uses the same bf16-rounded matmul operands as the kernel
    # (kernel keeps f32 accumulation; BN/ReLU/pool are f32 in both).
    x_r = x.astype(jnp.bfloat16).astype(jnp.float32)
    w_r = conv_w.astype(jnp.bfloat16).astype(jnp.float32)
    ref = _reference_forward(x_r, w_r, conv_b, bn_gamma, bn_beta, bn_mean, bn_var)

    assert out.shape == (N, Cout, H // 2, W // 2), out.shape
    err = float(jnp.max(jnp.abs(out - ref)))
    assert jnp.allclose(out, ref, rtol=1e-3, atol=1e-3), err

    print("KERNEL_OK")
</pallas_src>

<mosaic_0001>
module attributes {stable_mosaic.version = 11 : i64} {
  func.func @_cnn_block_kernel(%arg0: i32, %arg1: memref<2x16x16x4xf32, #tpu.memory_space<vmem>>, %arg2: memref<36x128xbf16, #tpu.memory_space<vmem>>, %arg3: memref<1x128xf32, #tpu.memory_space<vmem>>, %arg4: memref<1x128xf32, #tpu.memory_space<vmem>>, %arg5: memref<2x8x8x128xf32, #tpu.memory_space<vmem>>, %arg6: memref<2x18x18x4xf32, #tpu.memory_space<vmem>>, %arg7: memref<2x16x16x36xbf16, #tpu.memory_space<vmem>>, %arg8: memref<2x8x16x128xf32, #tpu.memory_space<vmem>>) attributes {dimension_semantics = [#tpu.dimension_semantics<parallel>], iteration_bounds = array<i64: 1>, scalar_prefetch = 0 : i64, scratch_operands = 3 : i64, tpu.core_type = #tpu.core_type<tc>, window_params = [{transform_indices = @transform_0, window_bounds = array<i64: 2, 16, 16, 4>}, {pipeline_mode = #tpu.pipeline_mode<synchronous>, transform_indices = @transform_1, window_bounds = array<i64: 36, 128>}, {pipeline_mode = #tpu.pipeline_mode<synchronous>, transform_indices = @transform_2, window_bounds = array<i64: 1, 128>}, {pipeline_mode = #tpu.pipeline_mode<synchronous>, transform_indices = @transform_3, window_bounds = array<i64: 1, 128>}, {transform_indices = @transform_4, window_bounds = array<i64: 2, 8, 8, 128>}]} {
    %cst = arith.constant 0.000000e+00 : f32
    %0 = vector.broadcast %cst : f32 to vector<2x18x18x4xf32>
    %c0 = arith.constant 0 : index
    %c0_0 = arith.constant 0 : index
    %c0_1 = arith.constant 0 : index
    %c0_2 = arith.constant 0 : index
    %1 = vector.load %arg6[%c0, %c0_0, %c0_1, %c0_2] : memref<2x18x18x4xf32, #tpu.memory_space<vmem>>, vector<2x18x18x4xf32>
    tpu.vector_store %arg6[%c0, %c0_0, %c0_1, %c0_2], %0 {strides = array<i32>} : memref<2x18x18x4xf32, #tpu.memory_space<vmem>>, vector<2x18x18x4xf32>,
    %c0_3 = arith.constant 0 : index
    %c0_4 = arith.constant 0 : index
    %c0_5 = arith.constant 0 : index
    %c0_6 = arith.constant 0 : index
    %2 = vector.load %arg1[%c0_3, %c0_4, %c0_5, %c0_6] : memref<2x16x16x4xf32, #tpu.memory_space<vmem>>, vector<2x16x16x4xf32>
    %c0_7 = arith.constant 0 : index
    %c1 = arith.constant 1 : index
    %c1_8 = arith.constant 1 : index
    %c0_9 = arith.constant 0 : index
    %3 = vector.load %arg6[%c0_7, %c1, %c1_8, %c0_9] : memref<2x18x18x4xf32, #tpu.memory_space<vmem>>, vector<2x16x16x4xf32>
    tpu.vector_store %arg6[%c0_7, %c1, %c1_8, %c0_9], %2 {strides = array<i32>} : memref<2x18x18x4xf32, #tpu.memory_space<vmem>>, vector<2x16x16x4xf32>,
    %c0_10 = arith.constant 0 : index
    %c0_11 = arith.constant 0 : index
    %c0_12 = arith.constant 0 : index
    %c0_13 = arith.constant 0 : index
    %4 = vector.load %arg6[%c0_10, %c0_11, %c0_12, %c0_13] : memref<2x18x18x4xf32, #tpu.memory_space<vmem>>, vector<2x16x16x4xf32>
    %5 = arith.truncf %4 : vector<2x16x16x4xf32> to vector<2x16x16x4xbf16>
    %c0_14 = arith.constant 0 : index
    %c0_15 = arith.constant 0 : index
    %c0_16 = arith.constant 0 : index
    %c0_17 = arith.constant 0 : index
    %6 = vector.load %arg7[%c0_14, %c0_15, %c0_16, %c0_17] : memref<2x16x16x36xbf16, #tpu.memory_space<vmem>>, vector<2x16x16x4xbf16>
    tpu.vector_store %arg7[%c0_14, %c0_15, %c0_16, %c0_17], %5 {strides = array<i32>} : memref<2x16x16x36xbf16, #tpu.memory_space<vmem>>, vector<2x16x16x4xbf16>,
    %c0_18 = arith.constant 0 : index
    %c0_19 = arith.constant 0 : index
    %c1_20 = arith.constant 1 : index
    %c0_21 = arith.constant 0 : index
    %7 = vector.load %arg6[%c0_18, %c0_19, %c1_20, %c0_21] : memref<2x18x18x4xf32, #tpu.memory_space<vmem>>, vector<2x16x16x4xf32>
    %8 = arith.truncf %7 : vector<2x16x16x4xf32> to vector<2x16x16x4xbf16>
    %c0_22 = arith.constant 0 : index
    %c0_23 = arith.constant 0 : index
    %c0_24 = arith.constant 0 : index
    %c4 = arith.constant 4 : index
    %9 = vector.load %arg7[%c0_22, %c0_23, %c0_24, %c4] : memref<2x16x16x36xbf16, #tpu.memory_space<vmem>>, vector<2x16x16x4xbf16>
    tpu.vector_store %arg7[%c0_22, %c0_23, %c0_24, %c4], %8 {strides = array<i32>} : memref<2x16x16x36xbf16, #tpu.memory_space<vmem>>, vector<2x16x16x4xbf16>,
    %c0_25 = arith.constant 0 : index
    %c0_26 = arith.constant 0 : index
    %c2 = arith.constant 2 : index
    %c0_27 = arith.constant 0 : index
    %10 = vector.load %arg6[%c0_25, %c0_26, %c2, %c0_27] : memref<2x18x18x4xf32, #tpu.memory_space<vmem>>, vector<2x16x16x4xf32>
    %11 = arith.truncf %10 : vector<2x16x16x4xf32> to vector<2x16x16x4xbf16>
    %c0_28 = arith.constant 0 : index
    %c0_29 = arith.constant 0 : index
    %c0_30 = arith.constant 0 : index
    %c8 = arith.constant 8 : index
    %12 = vector.load %arg7[%c0_28, %c0_29, %c0_30, %c8] : memref<2x16x16x36xbf16, #tpu.memory_space<vmem>>, vector<2x16x16x4xbf16>
    tpu.vector_store %arg7[%c0_28, %c0_29, %c0_30, %c8], %11 {strides = array<i32>} : memref<2x16x16x36xbf16, #tpu.memory_space<vmem>>, vector<2x16x16x4xbf16>,
    %c0_31 = arith.constant 0 : index
    %c1_32 = arith.constant 1 : index
    %c0_33 = arith.constant 0 : index
    %c0_34 = arith.constant 0 : index
    %13 = vector.load %arg6[%c0_31, %c1_32, %c0_33, %c0_34] : memref<2x18x18x4xf32, #tpu.memory_space<vmem>>, vector<2x16x16x4xf32>
    %14 = arith.truncf %13 : vector<2x16x16x4xf32> to vector<2x16x16x4xbf16>
    %c0_35 = arith.constant 0 : index
    %c0_36 = arith.constant 0 : index
    %c0_37 = arith.constant 0 : index
    %c12 = arith.constant 12 : index
    %15 = vector.load %arg7[%c0_35, %c0_36, %c0_37, %c12] : memref<2x16x16x36xbf16, #tpu.memory_space<vmem>>, vector<2x16x16x4xbf16>
    tpu.vector_store %arg7[%c0_35, %c0_36, %c0_37, %c12], %14 {strides = array<i32>} : memref<2x16x16x36xbf16, #tpu.memory_space<vmem>>, vector<2x16x16x4xbf16>,
    %c0_38 = arith.constant 0 : index
    %c1_39 = arith.constant 1 : index
    %c1_40 = arith.constant 1 : index
    %c0_41 = arith.constant 0 : index
    %16 = vector.load %arg6[%c0_38, %c1_39, %c1_40, %c0_41] : memref<2x18x18x4xf32, #tpu.memory_space<vmem>>, vector<2x16x16x4xf32>
    %17 = arith.truncf %16 : vector<2x16x16x4xf32> to vector<2x16x16x4xbf16>
    %c0_42 = arith.constant 0 : index
    %c0_43 = arith.constant 0 : index
    %c0_44 = arith.constant 0 : index
    %c16 = arith.constant 16 : index
    %18 = vector.load %arg7[%c0_42, %c0_43, %c0_44, %c16] : memref<2x16x16x36xbf16, #tpu.memory_space<vmem>>, vector<2x16x16x4xbf16>
    tpu.vector_store %arg7[%c0_42, %c0_43, %c0_44, %c16], %17 {strides = array<i32>} : memref<2x16x16x36xbf16, #tpu.memory_space<vmem>>, vector<2x16x16x4xbf16>,
    %c0_45 = arith.constant 0 : index
    %c1_46 = arith.constant 1 : index
    %c2_47 = arith.constant 2 : index
    %c0_48 = arith.constant 0 : index
    %19 = vector.load %arg6[%c0_45, %c1_46, %c2_47, %c0_48] : memref<2x18x18x4xf32, #tpu.memory_space<vmem>>, vector<2x16x16x4xf32>
    %20 = arith.truncf %19 : vector<2x16x16x4xf32> to vector<2x16x16x4xbf16>
    %c0_49 = arith.constant 0 : index
    %c0_50 = arith.constant 0 : index
    %c0_51 = arith.constant 0 : index
    %c20 = arith.constant 20 : index
    %21 = vector.load %arg7[%c0_49, %c0_50, %c0_51, %c20] : memref<2x16x16x36xbf16, #tpu.memory_space<vmem>>, vector<2x16x16x4xbf16>
    tpu.vector_store %arg7[%c0_49, %c0_50, %c0_51, %c20], %20 {strides = array<i32>} : memref<2x16x16x36xbf16, #tpu.memory_space<vmem>>, vector<2x16x16x4xbf16>,
    %c0_52 = arith.constant 0 : index
    %c2_53 = arith.constant 2 : index
    %c0_54 = arith.constant 0 : index
    %c0_55 = arith.constant 0 : index
    %22 = vector.load %arg6[%c0_52, %c2_53, %c0_54, %c0_55] : memref<2x18x18x4xf32, #tpu.memory_space<vmem>>, vector<2x16x16x4xf32>
    %23 = arith.truncf %22 : vector<2x16x16x4xf32> to vector<2x16x16x4xbf16>
    %c0_56 = arith.constant 0 : index
    %c0_57 = arith.constant 0 : index
    %c0_58 = arith.constant 0 : index
    %c24 = arith.constant 24 : index
    %24 = vector.load %arg7[%c0_56, %c0_57, %c0_58, %c24] : memref<2x16x16x36xbf16, #tpu.memory_space<vmem>>, vector<2x16x16x4xbf16>
    tpu.vector_store %arg7[%c0_56, %c0_57, %c0_58, %c24], %23 {strides = array<i32>} : memref<2x16x16x36xbf16, #tpu.memory_space<vmem>>, vector<2x16x16x4xbf16>,
    %c0_59 = arith.constant 0 : index
    %c2_60 = arith.constant 2 : index
    %c1_61 = arith.constant 1 : index
    %c0_62 = arith.constant 0 : index
    %25 = vector.load %arg6[%c0_59, %c2_60, %c1_61, %c0_62] : memref<2x18x18x4xf32, #tpu.memory_space<vmem>>, vector<2x16x16x4xf32>
    %26 = arith.truncf %25 : vector<2x16x16x4xf32> to vector<2x16x16x4xbf16>
    %c0_63 = arith.constant 0 : index
    %c0_64 = arith.constant 0 : index
    %c0_65 = arith.constant 0 : index
    %c28 = arith.constant 28 : index
    %27 = vector.load %arg7[%c0_63, %c0_64, %c0_65, %c28] : memref<2x16x16x36xbf16, #tpu.memory_space<vmem>>, vector<2x16x16x4xbf16>
    tpu.vector_store %arg7[%c0_63, %c0_64, %c0_65, %c28], %26 {strides = array<i32>} : memref<2x16x16x36xbf16, #tpu.memory_space<vmem>>, vector<2x16x16x4xbf16>,
    %c0_66 = arith.constant 0 : index
    %c2_67 = arith.constant 2 : index
    %c2_68 = arith.constant 2 : index
    %c0_69 = arith.constant 0 : index
    %28 = vector.load %arg6[%c0_66, %c2_67, %c2_68, %c0_69] : memref<2x18x18x4xf32, #tpu.memory_space<vmem>>, vector<2x16x16x4xf32>
    %29 = arith.truncf %28 : vector<2x16x16x4xf32> to vector<2x16x16x4xbf16>
    %c0_70 = arith.constant 0 : index
    %c0_71 = arith.constant 0 : index
    %c0_72 = arith.constant 0 : index
    %c32 = arith.constant 32 : index
    %30 = vector.load %arg7[%c0_70, %c0_71, %c0_72, %c32] : memref<2x16x16x36xbf16, #tpu.memory_space<vmem>>, vector<2x16x16x4xbf16>
    tpu.vector_store %arg7[%c0_70, %c0_71, %c0_72, %c32], %29 {strides = array<i32>} : memref<2x16x16x36xbf16, #tpu.memory_space<vmem>>, vector<2x16x16x4xbf16>,
    %c0_73 = arith.constant 0 : index
    %c0_74 = arith.constant 0 : index
    %c0_75 = arith.constant 0 : index
    %c0_76 = arith.constant 0 : index
    %31 = vector.load %arg7[%c0_73, %c0_74, %c0_75, %c0_76] : memref<2x16x16x36xbf16, #tpu.memory_space<vmem>>, vector<2x16x16x36xbf16>
    %32 = vector.shape_cast %31 : vector<2x16x16x36xbf16> to vector<512x36xbf16>
    %c0_77 = arith.constant 0 : index
    %c0_78 = arith.constant 0 : index
    %33 = vector.load %arg2[%c0_77, %c0_78] : memref<36x128xbf16, #tpu.memory_space<vmem>>, vector<36x128xbf16>
    %cst_79 = arith.constant dense<0.000000e+00> : vector<512x128xf32>
    %34 = tpu.matmul %32, %33, %cst_79 {dimension_numbers = #tpu.dot_dimension_numbers<[1], [0], [0], [1], [0, 0, 1, 1], [], []>} : vector<512x36xbf16>, vector<36x128xbf16>, vector<512x128xf32> -> vector<512x128xf32>
    %c0_80 = arith.constant 0 : index
    %c0_81 = arith.constant 0 : index
    %35 = vector.load %arg3[%c0_80, %c0_81] : memref<1x128xf32, #tpu.memory_space<vmem>>, vector<1x128xf32>
    %36 = vector.broadcast %35 : vector<1x128xf32> to vector<512x128xf32>
    %37 = arith.mulf %34, %36 : vector<512x128xf32>
    %c0_82 = arith.constant 0 : index
    %c0_83 = arith.constant 0 : index
    %38 = vector.load %arg4[%c0_82, %c0_83] : memref<1x128xf32, #tpu.memory_space<vmem>>, vector<1x128xf32>
    %39 = vector.broadcast %38 : vector<1x128xf32> to vector<512x128xf32>
    %40 = arith.addf %37, %39 : vector<512x128xf32>
    %cst_84 = arith.constant 0.000000e+00 : f32
    %41 = vector.broadcast %cst_84 : f32 to vector<512x128xf32>
    %42 = arith.maximumf %40, %41 : vector<512x128xf32>
    %43 = vector.shape_cast %42 : vector<512x128xf32> to vector<2x8x2x16x128xf32>
    %44 = vector.extract_strided_slice %43 {offsets = [0, 0, 0, 0, 0], sizes = [2, 8, 1, 16, 128], strides = [1, 1, 1, 1, 1]} : vector<2x8x2x16x128xf32> to vector<2x8x1x16x128xf32>
    %45 = vector.shape_cast %44 : vector<2x8x1x16x128xf32> to vector<2x8x16x128xf32>
    %46 = vector.extract_strided_slice %43 {offsets = [0, 0, 1, 0, 0], sizes = [2, 8, 1, 16, 128], strides = [1, 1, 1, 1, 1]} : vector<2x8x2x16x128xf32> to vector<2x8x1x16x128xf32>
    %47 = vector.shape_cast %46 : vector<2x8x1x16x128xf32> to vector<2x8x16x128xf32>
    %48 = arith.maximumf %45, %47 : vector<2x8x16x128xf32>
    %c0_85 = arith.constant 0 : index
    %c0_86 = arith.constant 0 : index
    %c0_87 = arith.constant 0 : index
    %c0_88 = arith.constant 0 : index
    %49 = vector.load %arg8[%c0_85, %c0_86, %c0_87, %c0_88] : memref<2x8x16x128xf32, #tpu.memory_space<vmem>>, vector<2x8x16x128xf32>
    tpu.vector_store %arg8[%c0_85, %c0_86, %c0_87, %c0_88], %48 {strides = array<i32>} : memref<2x8x16x128xf32, #tpu.memory_space<vmem>>, vector<2x8x16x128xf32>,
    %c0_89 = arith.constant 0 : index
    %c0_90 = arith.constant 0 : index
    %c0_91 = arith.constant 0 : index
    %c0_92 = arith.constant 0 : index
    %50 = tpu.strided_load %arg8[%c0_89, %c0_90, %c0_91, %c0_92] {strides = array<i32: 1, 1, 2, 1>} : memref<2x8x16x128xf32, #tpu.memory_space<vmem>>, vector<2x8x8x128xf32>
    %c0_93 = arith.constant 0 : index
    %c0_94 = arith.constant 0 : index
    %c1_95 = arith.constant 1 : index
    %c0_96 = arith.constant 0 : index
    %51 = tpu.strided_load %arg8[%c0_93, %c0_94, %c1_95, %c0_96] {strides = array<i32: 1, 1, 2, 1>} : memref<2x8x16x128xf32, #tpu.memory_space<vmem>>, vector<2x8x8x128xf32>
    %52 = arith.maximumf %50, %51 : vector<2x8x8x128xf32>
    %c0_97 = arith.constant 0 : index
    %c0_98 = arith.constant 0 : index
    %c0_99 = arith.constant 0 : index
    %c0_100 = arith.constant 0 : index
    %53 = vector.load %arg5[%c0_97, %c0_98, %c0_99, %c0_100] : memref<2x8x8x128xf32, #tpu.memory_space<vmem>>, vector<2x8x8x128xf32>
    tpu.vector_store %arg5[%c0_97, %c0_98, %c0_99, %c0_100], %52 {strides = array<i32>} : memref<2x8x8x128xf32, #tpu.memory_space<vmem>>, vector<2x8x8x128xf32>,
    return
  }
  func.func @transform_0(%arg0: i32) -> (i32, i32, i32, i32) {
    %c0_i32 = arith.constant 0 : i32
    %c0_i32_0 = arith.constant 0 : i32
    %c0_i32_1 = arith.constant 0 : i32
    %c0_i32_2 = arith.constant 0 : i32
    return %arg0, %c0_i32, %c0_i32_0, %c0_i32_1 : i32, i32, i32, i32
  }
  func.func @transform_1(%arg0: i32) -> (i32, i32) {
    %c0_i32 = arith.constant 0 : i32
    %c0_i32_0 = arith.constant 0 : i32
    %c0_i32_1 = arith.constant 0 : i32
    return %c0_i32, %c0_i32_0 : i32, i32
  }
  func.func @transform_2(%arg0: i32) -> (i32, i32) {
    %c0_i32 = arith.constant 0 : i32
    %c0_i32_0 = arith.constant 0 : i32
    %c0_i32_1 = arith.constant 0 : i32
    return %c0_i32, %c0_i32_0 : i32, i32
  }
  func.func @transform_3(%arg0: i32) -> (i32, i32) {
    %c0_i32 = arith.constant 0 : i32
    %c0_i32_0 = arith.constant 0 : i32
    %c0_i32_1 = arith.constant 0 : i32
    return %c0_i32, %c0_i32_0 : i32, i32
  }
  func.func @transform_4(%arg0: i32) -> (i32, i32, i32, i32) {
    %c0_i32 = arith.constant 0 : i32
    %c0_i32_0 = arith.constant 0 : i32
    %c0_i32_1 = arith.constant 0 : i32
    %c0_i32_2 = arith.constant 0 : i32
    return %arg0, %c0_i32, %c0_i32_0, %c0_i32_1 : i32, i32, i32, i32
  }
}

</mosaic_0001>

<llo_original>
// kernel: tpu_custom_call.1
$region0: #{tpu_custom_call.1}
  #allocation0 [shape = 'u32[]', space=smem, size = 0x4, offset = 0x4, fixed_abs, tag = 'smem constant byte address 0x4 - core index']
  #allocation1 [shape = 'u32[144,128]{1,0:T(1,128)}', space=vmem, size = 0x12000, scoped, tag = 'internal scratch']
  #allocation2 [shape = 'f32[2,18,18,4]{3,2,1,0:T(8,128)}', space=vmem, size = 0x6c000, scoped, tag = 'scratch operand']
  #allocation3 [shape = 'bf16[2,16,16,36]{3,2,1,0:T(16,128)(2,1)}', space=vmem, size = 0x20000, scoped, tag = 'scratch operand']
  #allocation4 [shape = 'f32[2,8,16,128]{3,2,1,0:T(8,128)}', space=vmem, size = 0x20000, scoped, tag = 'scratch operand']
  %s0 = inlined_call_operand.vmem [shape: f32[2,16,16,4], index: 0, kind: input, shape index: {}]
  %s1 = inlined_call_operand.vmem [shape: bf16[36,128], index: 1, kind: input, shape index: {}]
  %s2 = inlined_call_operand.vmem [shape: f32[1,128], index: 2, kind: input, shape index: {}]
  %s3 = inlined_call_operand.vmem [shape: f32[1,128], index: 3, kind: input, shape index: {}]
  %s4 = inlined_call_operand.hbm [shape: f32[2,8,8,128], index: 4, kind: output, shape index: {}]
  %s5 = sld [smem:[#allocation0]]
  $region26: #{tpu_custom_call.1} parent=0
    _
  %s7 = ssub.s32 1, %s5
  %s8 = scalar_select 0, %s7, %s5
  $region1: #{tpu_custom_call.1} parent=0
    #allocation5 [shape = 'u8[65536]{0}', space=vmem, size = 0x10000, scoped, tag = 'output window, operand 0, single buffered']
    #allocation6 [shape = 's32[1]{0}', space=sflag, size = 0x4, scoped, tag = 'scoped memory for tpu_custom_call.1']
    %9 = vsyncpa [#allocation6], 0
    // Predicated region
    $region2: #{tpu_custom_call.1} parent=1 // pred_check
      _
    $region3: #{tpu_custom_call.1} parent=1 // pred_check_branch
      %11 = sbr.rel (0) target = $region5
    $region4: #{tpu_custom_call.1} parent=1 // pred_region
      _
    $region5: #{tpu_custom_call.1} parent=1 // pred_fallthru
      _
    // Predicated region
    $region6: #{tpu_custom_call.1} parent=1 // pred_check
      _
    $region7: #{tpu_custom_call.1} parent=1 // pred_check_branch
      %13 = sbr.rel (0) target = $region9
    $region8: #{tpu_custom_call.1} parent=1 // pred_region
      _
    $region9: #{tpu_custom_call.1} parent=1 // pred_fallthru
      _
    // Predicated region
    $region10: #{tpu_custom_call.1} parent=1 // pred_check
      _
    $region11: #{tpu_custom_call.1} parent=1 // pred_check_branch
      %15 = sbr.rel (0) target = $region13
    $region12: #{tpu_custom_call.1} parent=1 // pred_region
      _
    $region13: #{tpu_custom_call.1} parent=1 // pred_fallthru
      _
    // Predicated region
    $region14: #{tpu_custom_call.1} parent=1 // pred_check
      _
    $region15: #{tpu_custom_call.1} parent=1 // pred_check_branch
      %17 = sbr.rel (0) target = $region17
    $region16: #{tpu_custom_call.1} parent=1 // pred_region
      _
    $region17: #{tpu_custom_call.1} parent=1 // pred_fallthru
      _
    %vm19 = vcmask 31744
    %20 = vst.msk [vmem:[#allocation2] sm:$0xff] %vm19, 0.0
    %21 = vst.msk [vmem:[#allocation2 + $0x8] sm:$0xff] %vm19, 0.0
    %vm22 = vcmask 25600
    %23 = vst.msk [vmem:[#allocation2 + $0x10] sm:$0x3] %vm22, 0.0
    %24 = vst.msk [vmem:[#allocation2 + $0x18] sm:$0xff] %vm19, 0.0
    %25 = vst.msk [vmem:[#allocation2 + $0x20] sm:$0xff] %vm19, 0.0
    %26 = vst.msk [vmem:[#allocation2 + $0x28] sm:$0x3] %vm22, 0.0
    %27 = vst.msk [vmem:[#allocation2 + $0x30] sm:$0xff] %vm19, 0.0
    %28 = vst.msk [vmem:[#allocation2 + $0x38] sm:$0xff] %vm19, 0.0
    %29 = vst.msk [vmem:[#allocation2 + $0x40] sm:$0x3] %vm22, 0.0
    %30 = vst.msk [vmem:[#allocation2 + $0x48] sm:$0xff] %vm19, 0.0
    %31 = vst.msk [vmem:[#allocation2 + $0x50] sm:$0xff] %vm19, 0.0
    %32 = vst.msk [vmem:[#allocation2 + $0x58] sm:$0x3] %vm22, 0.0
    %33 = vst.msk [vmem:[#allocation2 + $0x60] sm:$0xff] %vm19, 0.0
    %34 = vst.msk [vmem:[#allocation2 + $0x68] sm:$0xff] %vm19, 0.0
    %35 = vst.msk [vmem:[#allocation2 + $0x70] sm:$0x3] %vm22, 0.0
    %36 = vst.msk [vmem:[#allocation2 + $0x78] sm:$0xff] %vm19, 0.0
    %37 = vst.msk [vmem:[#allocation2 + $0x80] sm:$0xff] %vm19, 0.0
    %38 = vst.msk [vmem:[#allocation2 + $0x88] sm:$0x3] %vm22, 0.0
    %39 = vst.msk [vmem:[#allocation2 + $0x90] sm:$0xff] %vm19, 0.0
    %40 = vst.msk [vmem:[#allocation2 + $0x98] sm:$0xff] %vm19, 0.0
    %41 = vst.msk [vmem:[#allocation2 + $0xa0] sm:$0x3] %vm22, 0.0
    %42 = vst.msk [vmem:[#allocation2 + $0xa8] sm:$0xff] %vm19, 0.0
    %43 = vst.msk [vmem:[#allocation2 + $0xb0] sm:$0xff] %vm19, 0.0
    %44 = vst.msk [vmem:[#allocation2 + $0xb8] sm:$0x3] %vm22, 0.0
    %45 = vst.msk [vmem:[#allocation2 + $0xc0] sm:$0xff] %vm19, 0.0
    %46 = vst.msk [vmem:[#allocation2 + $0xc8] sm:$0xff] %vm19, 0.0
    %47 = vst.msk [vmem:[#allocation2 + $0xd0] sm:$0x3] %vm22, 0.0
    %48 = vst.msk [vmem:[#allocation2 + $0xd8] sm:$0xff] %vm19, 0.0
    %49 = vst.msk [vmem:[#allocation2 + $0xe0] sm:$0xff] %vm19, 0.0
    %50 = vst.msk [vmem:[#allocation2 + $0xe8] sm:$0x3] %vm22, 0.0
    %51 = vst.msk [vmem:[#allocation2 + $0xf0] sm:$0xff] %vm19, 0.0
    %52 = vst.msk [vmem:[#allocation2 + $0xf8] sm:$0xff] %vm19, 0.0
    %53 = vst.msk [vmem:[#allocation2 + $0x100] sm:$0x3] %vm22, 0.0
    %54 = vst.msk [vmem:[#allocation2 + $0x108] sm:$0xff] %vm19, 0.0
    %55 = vst.msk [vmem:[#allocation2 + $0x110] sm:$0xff] %vm19, 0.0
    %56 = vst.msk [vmem:[#allocation2 + $0x118] sm:$0x3] %vm22, 0.0
    %57 = vst.msk [vmem:[#allocation2 + $0x120] sm:$0xff] %vm19, 0.0
    %58 = vst.msk [vmem:[#allocation2 + $0x128] sm:$0xff] %vm19, 0.0
    %59 = vst.msk [vmem:[#allocation2 + $0x130] sm:$0x3] %vm22, 0.0
    %60 = vst.msk [vmem:[#allocation2 + $0x138] sm:$0xff] %vm19, 0.0
    %61 = vst.msk [vmem:[#allocation2 + $0x140] sm:$0xff] %vm19, 0.0
    %62 = vst.msk [vmem:[#allocation2 + $0x148] sm:$0x3] %vm22, 0.0
    %63 = vst.msk [vmem:[#allocation2 + $0x150] sm:$0xff] %vm19, 0.0
    %64 = vst.msk [vmem:[#allocation2 + $0x158] sm:$0xff] %vm19, 0.0
    %65 = vst.msk [vmem:[#allocation2 + $0x160] sm:$0x3] %vm22, 0.0
    %66 = vst.msk [vmem:[#allocation2 + $0x168] sm:$0xff] %vm19, 0.0
    %67 = vst.msk [vmem:[#allocation2 + $0x170] sm:$0xff] %vm19, 0.0
    %68 = vst.msk [vmem:[#allocation2 + $0x178] sm:$0x3] %vm22, 0.0
    %69 = vst.msk [vmem:[#allocation2 + $0x180] sm:$0xff] %vm19, 0.0
    %70 = vst.msk [vmem:[#allocation2 + $0x188] sm:$0xff] %vm19, 0.0
    %71 = vst.msk [vmem:[#allocation2 + $0x190] sm:$0x3] %vm22, 0.0
    %72 = vst.msk [vmem:[#allocation2 + $0x198] sm:$0xff] %vm19, 0.0
    %73 = vst.msk [vmem:[#allocation2 + $0x1a0] sm:$0xff] %vm19, 0.0
    %74 = vst.msk [vmem:[#allocation2 + $0x1a8] sm:$0x3] %vm22, 0.0
    %75 = vst.msk [vmem:[#allocation2 + $0x1b0] sm:$0xff] %vm19, 0.0
    %76 = vst.msk [vmem:[#allocation2 + $0x1b8] sm:$0xff] %vm19, 0.0
    %77 = vst.msk [vmem:[#allocation2 + $0x1c0] sm:$0x3] %vm22, 0.0
    %78 = vst.msk [vmem:[#allocation2 + $0x1c8] sm:$0xff] %vm19, 0.0
    %79 = vst.msk [vmem:[#allocation2 + $0x1d0] sm:$0xff] %vm19, 0.0
    %80 = vst.msk [vmem:[#allocation2 + $0x1d8] sm:$0x3] %vm22, 0.0
    %81 = vst.msk [vmem:[#allocation2 + $0x1e0] sm:$0xff] %vm19, 0.0
    %82 = vst.msk [vmem:[#allocation2 + $0x1e8] sm:$0xff] %vm19, 0.0
    %83 = vst.msk [vmem:[#allocation2 + $0x1f0] sm:$0x3] %vm22, 0.0
    %84 = vst.msk [vmem:[#allocation2 + $0x1f8] sm:$0xff] %vm19, 0.0
    %85 = vst.msk [vmem:[#allocation2 + $0x200] sm:$0xff] %vm19, 0.0
    %86 = vst.msk [vmem:[#allocation2 + $0x208] sm:$0x3] %vm22, 0.0
    %87 = vst.msk [vmem:[#allocation2 + $0x210] sm:$0xff] %vm19, 0.0
    %88 = vst.msk [vmem:[#allocation2 + $0x218] sm:$0xff] %vm19, 0.0
    %89 = vst.msk [vmem:[#allocation2 + $0x220] sm:$0x3] %vm22, 0.0
    %90 = vst.msk [vmem:[#allocation2 + $0x228] sm:$0xff] %vm19, 0.0
    %91 = vst.msk [vmem:[#allocation2 + $0x230] sm:$0xff] %vm19, 0.0
    %92 = vst.msk [vmem:[#allocation2 + $0x238] sm:$0x3] %vm22, 0.0
    %93 = vst.msk [vmem:[#allocation2 + $0x240] sm:$0xff] %vm19, 0.0
    %94 = vst.msk [vmem:[#allocation2 + $0x248] sm:$0xff] %vm19, 0.0
    %95 = vst.msk [vmem:[#allocation2 + $0x250] sm:$0x3] %vm22, 0.0
    %96 = vst.msk [vmem:[#allocation2 + $0x258] sm:$0xff] %vm19, 0.0
    %97 = vst.msk [vmem:[#allocation2 + $0x260] sm:$0xff] %vm19, 0.0
    %98 = vst.msk [vmem:[#allocation2 + $0x268] sm:$0x3] %vm22, 0.0
    %99 = vst.msk [vmem:[#allocation2 + $0x270] sm:$0xff] %vm19, 0.0
    %100 = vst.msk [vmem:[#allocation2 + $0x278] sm:$0xff] %vm19, 0.0
    %101 = vst.msk [vmem:[#allocation2 + $0x280] sm:$0x3] %vm22, 0.0
    %102 = vst.msk [vmem:[#allocation2 + $0x288] sm:$0xff] %vm19, 0.0
    %103 = vst.msk [vmem:[#allocation2 + $0x290] sm:$0xff] %vm19, 0.0
    %104 = vst.msk [vmem:[#allocation2 + $0x298] sm:$0x3] %vm22, 0.0
    %105 = vst.msk [vmem:[#allocation2 + $0x2a0] sm:$0xff] %vm19, 0.0
    %106 = vst.msk [vmem:[#allocation2 + $0x2a8] sm:$0xff] %vm19, 0.0
    %107 = vst.msk [vmem:[#allocation2 + $0x2b0] sm:$0x3] %vm22, 0.0
    %108 = vst.msk [vmem:[#allocation2 + $0x2b8] sm:$0xff] %vm19, 0.0
    %109 = vst.msk [vmem:[#allocation2 + $0x2c0] sm:$0xff] %vm19, 0.0
    %110 = vst.msk [vmem:[#allocation2 + $0x2c8] sm:$0x3] %vm22, 0.0
    %111 = vst.msk [vmem:[#allocation2 + $0x2d0] sm:$0xff] %vm19, 0.0
    %112 = vst.msk [vmem:[#allocation2 + $0x2d8] sm:$0xff] %vm19, 0.0
    %113 = vst.msk [vmem:[#allocation2 + $0x2e0] sm:$0x3] %vm22, 0.0
    %114 = vst.msk [vmem:[#allocation2 + $0x2e8] sm:$0xff] %vm19, 0.0
    %115 = vst.msk [vmem:[#allocation2 + $0x2f0] sm:$0xff] %vm19, 0.0
    %116 = vst.msk [vmem:[#allocation2 + $0x2f8] sm:$0x3] %vm22, 0.0
    %117 = vst.msk [vmem:[#allocation2 + $0x300] sm:$0xff] %vm19, 0.0
    %118 = vst.msk [vmem:[#allocation2 + $0x308] sm:$0xff] %vm19, 0.0
    %119 = vst.msk [vmem:[#allocation2 + $0x310] sm:$0x3] %vm22, 0.0
    %120 = vst.msk [vmem:[#allocation2 + $0x318] sm:$0xff] %vm19, 0.0
    %121 = vst.msk [vmem:[#allocation2 + $0x320] sm:$0xff] %vm19, 0.0
    %122 = vst.msk [vmem:[#allocation2 + $0x328] sm:$0x3] %vm22, 0.0
    %123 = vst.msk [vmem:[#allocation2 + $0x330] sm:$0xff] %vm19, 0.0
    %124 = vst.msk [vmem:[#allocation2 + $0x338] sm:$0xff] %vm19, 0.0
    %125 = vst.msk [vmem:[#allocation2 + $0x340] sm:$0x3] %vm22, 0.0
    %126 = vst.msk [vmem:[#allocation2 + $0x348] sm:$0xff] %vm19, 0.0
    %127 = vst.msk [vmem:[#allocation2 + $0x350] sm:$0xff] %vm19, 0.0
    %128 = vst.msk [vmem:[#allocation2 + $0x358] sm:$0x3] %vm22, 0.0
    %v129 = vld [vmem:[%s0] sm:$0xff]
    %v130 = vld [vmem:[%s0 + $0x8] sm:$0xff]
    %v131 = vld [vmem:[%s0 + $0x10] sm:$0xff]
    %v132 = vld [vmem:[%s0 + $0x18] sm:$0xff]
    %v133 = vld [vmem:[%s0 + $0x20] sm:$0xff]
    %v134 = vld [vmem:[%s0 + $0x28] sm:$0xff]
    %v135 = vld [vmem:[%s0 + $0x30] sm:$0xff]
    %v136 = vld [vmem:[%s0 + $0x38] sm:$0xff]
    %v137 = vld [vmem:[%s0 + $0x40] sm:$0xff]
    %v138 = vld [vmem:[%s0 + $0x48] sm:$0xff]
    %v139 = vld [vmem:[%s0 + $0x50] sm:$0xff]
    %v140 = vld [vmem:[%s0 + $0x58] sm:$0xff]
    %v141 = vld [vmem:[%s0 + $0x60] sm:$0xff]
    %v142 = vld [vmem:[%s0 + $0x68] sm:$0xff]
    %v143 = vld [vmem:[%s0 + $0x70] sm:$0xff]
    %v144 = vld [vmem:[%s0 + $0x78] sm:$0xff]
    %v145 = vld [vmem:[%s0 + $0x80] sm:$0xff]
    %v146 = vld [vmem:[%s0 + $0x88] sm:$0xff]
    %v147 = vld [vmem:[%s0 + $0x90] sm:$0xff]
    %v148 = vld [vmem:[%s0 + $0x98] sm:$0xff]
    %v149 = vld [vmem:[%s0 + $0xa0] sm:$0xff]
    %v150 = vld [vmem:[%s0 + $0xa8] sm:$0xff]
    %v151 = vld [vmem:[%s0 + $0xb0] sm:$0xff]
    %v152 = vld [vmem:[%s0 + $0xb8] sm:$0xff]
    %v153 = vld [vmem:[%s0 + $0xc0] sm:$0xff]
    %v154 = vld [vmem:[%s0 + $0xc8] sm:$0xff]
    %v155 = vld [vmem:[%s0 + $0xd0] sm:$0xff]
    %v156 = vld [vmem:[%s0 + $0xd8] sm:$0xff]
    %v157 = vld [vmem:[%s0 + $0xe0] sm:$0xff]
    %v158 = vld [vmem:[%s0 + $0xe8] sm:$0xff]
    %v159 = vld [vmem:[%s0 + $0xf0] sm:$0xff]
    %v160 = vld [vmem:[%s0 + $0xf8] sm:$0xff]
    %v161 = vld [vmem:[%s0 + $0x100] sm:$0xff]
    %v162 = vld [vmem:[%s0 + $0x108] sm:$0xff]
    %v163 = vld [vmem:[%s0 + $0x110] sm:$0xff]
    %v164 = vld [vmem:[%s0 + $0x118] sm:$0xff]
    %v165 = vld [vmem:[%s0 + $0x120] sm:$0xff]
    %v166 = vld [vmem:[%s0 + $0x128] sm:$0xff]
    %v167 = vld [vmem:[%s0 + $0x130] sm:$0xff]
    %v168 = vld [vmem:[%s0 + $0x138] sm:$0xff]
    %v169 = vld [vmem:[%s0 + $0x140] sm:$0xff]
    %v170 = vld [vmem:[%s0 + $0x148] sm:$0xff]
    %v171 = vld [vmem:[%s0 + $0x150] sm:$0xff]
    %v172 = vld [vmem:[%s0 + $0x158] sm:$0xff]
    %v173 = vld [vmem:[%s0 + $0x160] sm:$0xff]
    %v174 = vld [vmem:[%s0 + $0x168] sm:$0xff]
    %v175 = vld [vmem:[%s0 + $0x170] sm:$0xff]
    %v176 = vld [vmem:[%s0 + $0x178] sm:$0xff]
    %v177 = vld [vmem:[%s0 + $0x180] sm:$0xff]
    %v178 = vld [vmem:[%s0 + $0x188] sm:$0xff]
    %v179 = vld [vmem:[%s0 + $0x190] sm:$0xff]
    %v180 = vld [vmem:[%s0 + $0x198] sm:$0xff]
    %v181 = vld [vmem:[%s0 + $0x1a0] sm:$0xff]
    %v182 = vld [vmem:[%s0 + $0x1a8] sm:$0xff]
    %v183 = vld [vmem:[%s0 + $0x1b0] sm:$0xff]
    %v184 = vld [vmem:[%s0 + $0x1b8] sm:$0xff]
    %v185 = vld [vmem:[%s0 + $0x1c0] sm:$0xff]
    %v186 = vld [vmem:[%s0 + $0x1c8] sm:$0xff]
    %v187 = vld [vmem:[%s0 + $0x1d0] sm:$0xff]
    %v188 = vld [vmem:[%s0 + $0x1d8] sm:$0xff]
    %v189 = vld [vmem:[%s0 + $0x1e0] sm:$0xff]
    %v190 = vld [vmem:[%s0 + $0x1e8] sm:$0xff]
    %v191 = vld [vmem:[%s0 + $0x1f0] sm:$0xff]
    %v192 = vld [vmem:[%s0 + $0x1f8] sm:$0xff]
    %s193 = scalar_lea.vmem [#allocation2], 24
    %194 = vst.msk [vmem:[%s193 + $0x1] sm:$0xff] %vm19, %v129
    %195 = vst.msk [vmem:[%s193 + $0x9] sm:$0xff] %vm19, %v130
    %196 = vst.msk [vmem:[%s193 + $0x19] sm:$0xff] %vm19, %v131
    %197 = vst.msk [vmem:[%s193 + $0x21] sm:$0xff] %vm19, %v132
    %198 = vst.msk [vmem:[%s193 + $0x31] sm:$0xff] %vm19, %v133
    %199 = vst.msk [vmem:[%s193 + $0x39] sm:$0xff] %vm19, %v134
    %200 = vst.msk [vmem:[%s193 + $0x49] sm:$0xff] %vm19, %v135
    %201 = vst.msk [vmem:[%s193 + $0x51] sm:$0xff] %vm19, %v136
    %202 = vst.msk [vmem:[%s193 + $0x61] sm:$0xff] %vm19, %v137
    %203 = vst.msk [vmem:[%s193 + $0x69] sm:$0xff] %vm19, %v138
    %204 = vst.msk [vmem:[%s193 + $0x79] sm:$0xff] %vm19, %v139
    %205 = vst.msk [vmem:[%s193 + $0x81] sm:$0xff] %vm19, %v140
    %206 = vst.msk [vmem:[%s193 + $0x91] sm:$0xff] %vm19, %v141
    %207 = vst.msk [vmem:[%s193 + $0x99] sm:$0xff] %vm19, %v142
    %208 = vst.msk [vmem:[%s193 + $0xa9] sm:$0xff] %vm19, %v143
    %209 = vst.msk [vmem:[%s193 + $0xb1] sm:$0xff] %vm19, %v144
    %210 = vst.msk [vmem:[%s193 + $0xc1] sm:$0xff] %vm19, %v145
    %211 = vst.msk [vmem:[%s193 + $0xc9] sm:$0xff] %vm19, %v146
    %212 = vst.msk [vmem:[%s193 + $0xd9] sm:$0xff] %vm19, %v147
    %213 = vst.msk [vmem:[%s193 + $0xe1] sm:$0xff] %vm19, %v148
    %214 = vst.msk [vmem:[%s193 + $0xf1] sm:$0xff] %vm19, %v149
    %215 = vst.msk [vmem:[%s193 + $0xf9] sm:$0xff] %vm19, %v150
    %216 = vst.msk [vmem:[%s193 + $0x109] sm:$0xff] %vm19, %v151
    %217 = vst.msk [vmem:[%s193 + $0x111] sm:$0xff] %vm19, %v152
    %218 = vst.msk [vmem:[%s193 + $0x121] sm:$0xff] %vm19, %v153
    %219 = vst.msk [vmem:[%s193 + $0x129] sm:$0xff] %vm19, %v154
    %220 = vst.msk [vmem:[%s193 + $0x139] sm:$0xff] %vm19, %v155
    %221 = vst.msk [vmem:[%s193 + $0x141] sm:$0xff] %vm19, %v156
    %222 = vst.msk [vmem:[%s193 + $0x151] sm:$0xff] %vm19, %v157
    %223 = vst.msk [vmem:[%s193 + $0x159] sm:$0xff] %vm19, %v158
    %224 = vst.msk [vmem:[%s193 + $0x169] sm:$0xff] %vm19, %v159
    %225 = vst.msk [vmem:[%s193 + $0x171] sm:$0xff] %vm19, %v160
    %226 = vst.msk [vmem:[%s193 + $0x1b1] sm:$0xff] %vm19, %v161
    %227 = vst.msk [vmem:[%s193 + $0x1b9] sm:$0xff] %vm19, %v162
    %228 = vst.msk [vmem:[%s193 + $0x1c9] sm:$0xff] %vm19, %v163
    %229 = vst.msk [vmem:[%s193 + $0x1d1] sm:$0xff] %vm19, %v164
    %230 = vst.msk [vmem:[%s193 + $0x1e1] sm:$0xff] %vm19, %v165
    %231 = vst.msk [vmem:[%s193 + $0x1e9] sm:$0xff] %vm19, %v166
    %232 = vst.msk [vmem:[%s193 + $0x1f9] sm:$0xff] %vm19, %v167
    %233 = vst.msk [vmem:[%s193 + $0x201] sm:$0xff] %vm19, %v168
    %234 = vst.msk [vmem:[%s193 + $0x211] sm:$0xff] %vm19, %v169
    %235 = vst.msk [vmem:[%s193 + $0x219] sm:$0xff] %vm19, %v170
    %236 = vst.msk [vmem:[%s193 + $0x229] sm:$0xff] %vm19, %v171
    %237 = vst.msk [vmem:[%s193 + $0x231] sm:$0xff] %vm19, %v172
    %238 = vst.msk [vmem:[%s193 + $0x241] sm:$0xff] %vm19, %v173
    %239 = vst.msk [vmem:[%s193 + $0x249] sm:$0xff] %vm19, %v174
    %240 = vst.msk [vmem:[%s193 + $0x259] sm:$0xff] %vm19, %v175
    %241 = vst.msk [vmem:[%s193 + $0x261] sm:$0xff] %vm19, %v176
    %242 = vst.msk [vmem:[%s193 + $0x271] sm:$0xff] %vm19, %v177
    %243 = vst.msk [vmem:[%s193 + $0x279] sm:$0xff] %vm19, %v178
    %244 = vst.msk [vmem:[%s193 + $0x289] sm:$0xff] %vm19, %v179
    %245 = vst.msk [vmem:[%s193 + $0x291] sm:$0xff] %vm19, %v180
    %246 = vst.msk [vmem:[%s193 + $0x2a1] sm:$0xff] %vm19, %v181
    %247 = vst.msk [vmem:[%s193 + $0x2a9] sm:$0xff] %vm19, %v182
    %248 = vst.msk [vmem:[%s193 + $0x2b9] sm:$0xff] %vm19, %v183
    %249 = vst.msk [vmem:[%s193 + $0x2c1] sm:$0xff] %vm19, %v184
    %250 = vst.msk [vmem:[%s193 + $0x2d1] sm:$0xff] %vm19, %v185
    %251 = vst.msk [vmem:[%s193 + $0x2d9] sm:$0xff] %vm19, %v186
    %252 = vst.msk [vmem:[%s193 + $0x2e9] sm:$0xff] %vm19, %v187
    %253 = vst.msk [vmem:[%s193 + $0x2f1] sm:$0xff] %vm19, %v188
    %254 = vst.msk [vmem:[%s193 + $0x301] sm:$0xff] %vm19, %v189
    %255 = vst.msk [vmem:[%s193 + $0x309] sm:$0xff] %vm19, %v190
    %256 = vst.msk [vmem:[%s193 + $0x319] sm:$0xff] %vm19, %v191
    %257 = vst.msk [vmem:[%s193 + $0x321] sm:$0xff] %vm19, %v192
    %v258 = vld [vmem:[#allocation2] sm:$0xff]
    %v259 = vld [vmem:[#allocation2 + $0x8] sm:$0xff]
    %v260 = vld [vmem:[#allocation2 + $0x18] sm:$0xff]
    %v261 = vld [vmem:[#allocation2 + $0x20] sm:$0xff]
    %v262 = vld [vmem:[#allocation2 + $0x30] sm:$0xff]
    %v263 = vld [vmem:[#allocation2 + $0x38] sm:$0xff]
    %v264 = vld [vmem:[#allocation2 + $0x48] sm:$0xff]
    %v265 = vld [vmem:[#allocation2 + $0x50] sm:$0xff]
    %v266 = vld [vmem:[#allocation2 + $0x60] sm:$0xff]
    %v267 = vld [vmem:[#allocation2 + $0x68] sm:$0xff]
    %v268 = vld [vmem:[#allocation2 + $0x78] sm:$0xff]
    %v269 = vld [vmem:[#allocation2 + $0x80] sm:$0xff]
    %v270 = vld [vmem:[#allocation2 + $0x90] sm:$0xff]
    %v271 = vld [vmem:[#allocation2 + $0x98] sm:$0xff]
    %v272 = vld [vmem:[#allocation2 + $0xa8] sm:$0xff]
    %v273 = vld [vmem:[#allocation2 + $0xb0] sm:$0xff]
    %v274 = vld [vmem:[#allocation2 + $0xc0] sm:$0xff]
    %v275 = vld [vmem:[#allocation2 + $0xc8] sm:$0xff]
    %v276 = vld [vmem:[#allocation2 + $0xd8] sm:$0xff]
    %v277 = vld [vmem:[#allocation2 + $0xe0] sm:$0xff]
    %v278 = vld [vmem:[#allocation2 + $0xf0] sm:$0xff]
    %v279 = vld [vmem:[#allocation2 + $0xf8] sm:$0xff]
    %v280 = vld [vmem:[#allocation2 + $0x108] sm:$0xff]
    %v281 = vld [vmem:[#allocation2 + $0x110] sm:$0xff]
    %v282 = vld [vmem:[#allocation2 + $0x120] sm:$0xff]
    %v283 = vld [vmem:[#allocation2 + $0x128] sm:$0xff]
    %v284 = vld [vmem:[#allocation2 + $0x138] sm:$0xff]
    %v285 = vld [vmem:[#allocation2 + $0x140] sm:$0xff]
    %v286 = vld [vmem:[#allocation2 + $0x150] sm:$0xff]
    %v287 = vld [vmem:[#allocation2 + $0x158] sm:$0xff]
    %v288 = vld [vmem:[#allocation2 + $0x168] sm:$0xff]
    %v289 = vld [vmem:[#allocation2 + $0x170] sm:$0xff]
    %v290 = vld [vmem:[#allocation2 + $0x1b0] sm:$0xff]
    %v291 = vld [vmem:[#allocation2 + $0x1b8] sm:$0xff]
    %v292 = vld [vmem:[#allocation2 + $0x1c8] sm:$0xff]
    %v293 = vld [vmem:[#allocation2 + $0x1d0] sm:$0xff]
    %v294 = vld [vmem:[#allocation2 + $0x1e0] sm:$0xff]
    %v295 = vld [vmem:[#allocation2 + $0x1e8] sm:$0xff]
    %v296 = vld [vmem:[#allocation2 + $0x1f8] sm:$0xff]
    %v297 = vld [vmem:[#allocation2 + $0x200] sm:$0xff]
    %v298 = vld [vmem:[#allocation2 + $0x210] sm:$0xff]
    %v299 = vld [vmem:[#allocation2 + $0x218] sm:$0xff]
    %v300 = vld [vmem:[#allocation2 + $0x228] sm:$0xff]
    %v301 = vld [vmem:[#allocation2 + $0x230] sm:$0xff]
    %v302 = vld [vmem:[#allocation2 + $0x240] sm:$0xff]
    %v303 = vld [vmem:[#allocation2 + $0x248] sm:$0xff]
    %v304 = vld [vmem:[#allocation2 + $0x258] sm:$0xff]
    %v305 = vld [vmem:[#allocation2 + $0x260] sm:$0xff]
    %v306 = vld [vmem:[#allocation2 + $0x270] sm:$0xff]
    %v307 = vld [vmem:[#allocation2 + $0x278] sm:$0xff]
    %v308 = vld [vmem:[#allocation2 + $0x288] sm:$0xff]
    %v309 = vld [vmem:[#allocation2 + $0x290] sm:$0xff]
    %v310 = vld [vmem:[#allocation2 + $0x2a0] sm:$0xff]
    %v311 = vld [vmem:[#allocation2 + $0x2a8] sm:$0xff]
    %v312 = vld [vmem:[#allocation2 + $0x2b8] sm:$0xff]
    %v313 = vld [vmem:[#allocation2 + $0x2c0] sm:$0xff]
    %v314 = vld [vmem:[#allocation2 + $0x2d0] sm:$0xff]
    %v315 = vld [vmem:[#allocation2 + $0x2d8] sm:$0xff]
    %v316 = vld [vmem:[#allocation2 + $0x2e8] sm:$0xff]
    %v317 = vld [vmem:[#allocation2 + $0x2f0] sm:$0xff]
    %v318 = vld [vmem:[#allocation2 + $0x300] sm:$0xff]
    %v319 = vld [vmem:[#allocation2 + $0x308] sm:$0xff]
    %v320 = vld [vmem:[#allocation2 + $0x318] sm:$0xff]
    %v321 = vld [vmem:[#allocation2 + $0x320] sm:$0xff]
    %v322 = vpack.c.bf16 %v259, %v258
    %v323 = vpack.c.bf16 %v261, %v260
    %v324 = vpack.c.bf16 %v263, %v262
    %v325 = vpack.c.bf16 %v265, %v264
    %v326 = vpack.c.bf16 %v267, %v266
    %v327 = vpack.c.bf16 %v269, %v268
    %v328 = vpack.c.bf16 %v271, %v270
    %v329 = vpack.c.bf16 %v273, %v272
    %v330 = vpack.c.bf16 %v275, %v274
    %v331 = vpack.c.bf16 %v277, %v276
    %v332 = vpack.c.bf16 %v279, %v278
    %v333 = vpack.c.bf16 %v281, %v280
    %v334 = vpack.c.bf16 %v283, %v282
    %v335 = vpack.c.bf16 %v285, %v284
    %v336 = vpack.c.bf16 %v287, %v286
    %v337 = vpack.c.bf16 %v289, %v288
    %v338 = vpack.c.bf16 %v291, %v290
    %v339 = vpack.c.bf16 %v293, %v292
    %v340 = vpack.c.bf16 %v295, %v294
    %v341 = vpack.c.bf16 %v297, %v296
    %v342 = vpack.c.bf16 %v299, %v298
    %v343 = vpack.c.bf16 %v301, %v300
    %v344 = vpack.c.bf16 %v303, %v302
    %v345 = vpack.c.bf16 %v305, %v304
    %v346 = vpack.c.bf16 %v307, %v306
    %v347 = vpack.c.bf16 %v309, %v308
    %v348 = vpack.c.bf16 %v311, %v310
    %v349 = vpack.c.bf16 %v313, %v312
    %v350 = vpack.c.bf16 %v315, %v314
    %v351 = vpack.c.bf16 %v317, %v316
    %v352 = vpack.c.bf16 %v319, %v318
    %v353 = vpack.c.bf16 %v321, %v320
    %354 = vst.msk [vmem:[#allocation3] sm:$0xff] %vm19, %v322
    %355 = vst.msk [vmem:[#allocation3 + $0x8] sm:$0xff] %vm19, %v323
    %356 = vst.msk [vmem:[#allocation3 + $0x10] sm:$0xff] %vm19, %v324
    %357 = vst.msk [vmem:[#allocation3 + $0x18] sm:$0xff] %vm19, %v325
    %358 = vst.msk [vmem:[#allocation3 + $0x20] sm:$0xff] %vm19, %v326
    %359 = vst.msk [vmem:[#allocation3 + $0x28] sm:$0xff] %vm19, %v327
    %360 = vst.msk [vmem:[#allocation3 + $0x30] sm:$0xff] %vm19, %v328
    %361 = vst.msk [vmem:[#allocation3 + $0x38] sm:$0xff] %vm19, %v329
    %362 = vst.msk [vmem:[#allocation3 + $0x40] sm:$0xff] %vm19, %v330
    %363 = vst.msk [vmem:[#allocation3 + $0x48] sm:$0xff] %vm19, %v331
    %364 = vst.msk [vmem:[#allocation3 + $0x50] sm:$0xff] %vm19, %v332
    %365 = vst.msk [vmem:[#allocation3 + $0x58] sm:$0xff] %vm19, %v333
    %366 = vst.msk [vmem:[#allocation3 + $0x60] sm:$0xff] %vm19, %v334
    %367 = vst.msk [vmem:[#allocation3 + $0x68] sm:$0xff] %vm19, %v335
    %368 = vst.msk [vmem:[#allocation3 + $0x70] sm:$0xff] %vm19, %v336
    %369 = vst.msk [vmem:[#allocation3 + $0x78] sm:$0xff] %vm19, %v337
    %370 = vst.msk [vmem:[#allocation3 + $0x80] sm:$0xff] %vm19, %v338
    %371 = vst.msk [vmem:[#allocation3 + $0x88] sm:$0xff] %vm19, %v339
    %372 = vst.msk [vmem:[#allocation3 + $0x90] sm:$0xff] %vm19, %v340
    %373 = vst.msk [vmem:[#allocation3 + $0x98] sm:$0xff] %vm19, %v341
    %374 = vst.msk [vmem:[#allocation3 + $0xa0] sm:$0xff] %vm19, %v342
    %375 = vst.msk [vmem:[#allocation3 + $0xa8] sm:$0xff] %vm19, %v343
    %376 = vst.msk [vmem:[#allocation3 + $0xb0] sm:$0xff] %vm19, %v344
    %377 = vst.msk [vmem:[#allocation3 + $0xb8] sm:$0xff] %vm19, %v345
    %378 = vst.msk [vmem:[#allocation3 + $0xc0] sm:$0xff] %vm19, %v346
    %379 = vst.msk [vmem:[#allocation3 + $0xc8] sm:$0xff] %vm19, %v347
    %380 = vst.msk [vmem:[#allocation3 + $0xd0] sm:$0xff] %vm19, %v348
    %381 = vst.msk [vmem:[#allocation3 + $0xd8] sm:$0xff] %vm19, %v349
    %382 = vst.msk [vmem:[#allocation3 + $0xe0] sm:$0xff] %vm19, %v350
    %383 = vst.msk [vmem:[#allocation3 + $0xe8] sm:$0xff] %vm19, %v351
    %384 = vst.msk [vmem:[#allocation3 + $0xf0] sm:$0xff] %vm19, %v352
    %385 = vst.msk [vmem:[#allocation3 + $0xf8] sm:$0xff] %vm19, %v353
    %v386 = vld [vmem:[#allocation2 + $0x1] sm:$0xff]
    %v387 = vld [vmem:[#allocation2 + $0x9] sm:$0xff]
    %v388 = vld [vmem:[#allocation2 + $0x19] sm:$0xff]
    %v389 = vld [vmem:[#allocation2 + $0x21] sm:$0xff]
    %v390 = vld [vmem:[#allocation2 + $0x31] sm:$0xff]
    %v391 = vld [vmem:[#allocation2 + $0x39] sm:$0xff]
    %v392 = vld [vmem:[#allocation2 + $0x49] sm:$0xff]
    %v393 = vld [vmem:[#allocation2 + $0x51] sm:$0xff]
    %v394 = vld [vmem:[#allocation2 + $0x61] sm:$0xff]
    %v395 = vld [vmem:[#allocation2 + $0x69] sm:$0xff]
    %v396 = vld [vmem:[#allocation2 + $0x79] sm:$0xff]
    %v397 = vld [vmem:[#allocation2 + $0x81] sm:$0xff]
    %v398 = vld [vmem:[#allocation2 + $0x91] sm:$0xff]
    %v399 = vld [vmem:[#allocation2 + $0x99] sm:$0xff]
    %v400 = vld [vmem:[#allocation2 + $0xa9] sm:$0xff]
    %v401 = vld [vmem:[#allocation2 + $0xb1] sm:$0xff]
    %v402 = vld [vmem:[#allocation2 + $0xc1] sm:$0xff]
    %v403 = vld [vmem:[#allocation2 + $0xc9] sm:$0xff]
    %v404 = vld [vmem:[#allocation2 + $0xd9] sm:$0xff]
    %v405 = vld [vmem:[#allocation2 + $0xe1] sm:$0xff]
    %v406 = vld [vmem:[#allocation2 + $0xf1] sm:$0xff]
    %v407 = vld [vmem:[#allocation2 + $0xf9] sm:$0xff]
    %v408 = vld [vmem:[#allocation2 + $0x109] sm:$0xff]
    %v409 = vld [vmem:[#allocation2 + $0x111] sm:$0xff]
    %v410 = vld [vmem:[#allocation2 + $0x121] sm:$0xff]
    %v411 = vld [vmem:[#allocation2 + $0x129] sm:$0xff]
    %v412 = vld [vmem:[#allocation2 + $0x139] sm:$0xff]
    %v413 = vld [vmem:[#allocation2 + $0x141] sm:$0xff]
    %v414 = vld [vmem:[#allocation2 + $0x151] sm:$0xff]
    %v415 = vld [vmem:[#allocation2 + $0x159] sm:$0xff]
    %v416 = vld [vmem:[#allocation2 + $0x169] sm:$0xff]
    %v417 = vld [vmem:[#allocation2 + $0x171] sm:$0xff]
    %v418 = vld [vmem:[#allocation2 + $0x1b1] sm:$0xff]
    %v419 = vld [vmem:[#allocation2 + $0x1b9] sm:$0xff]
    %v420 = vld [vmem:[#allocation2 + $0x1c9] sm:$0xff]
    %v421 = vld [vmem:[#allocation2 + $0x1d1] sm:$0xff]
    %v422 = vld [vmem:[#allocation2 + $0x1e1] sm:$0xff]
    %v423 = vld [vmem:[#allocation2 + $0x1e9] sm:$0xff]
    %v424 = vld [vmem:[#allocation2 + $0x1f9] sm:$0xff]
    %v425 = vld [vmem:[#allocation2 + $0x201] sm:$0xff]
    %v426 = vld [vmem:[#allocation2 + $0x211] sm:$0xff]
    %v427 = vld [vmem:[#allocation2 + $0x219] sm:$0xff]
    %v428 = vld [vmem:[#allocation2 + $0x229] sm:$0xff]
    %v429 = vld [vmem:[#allocation2 + $0x231] sm:$0xff]
    %v430 = vld [vmem:[#allocation2 + $0x241] sm:$0xff]
    %v431 = vld [vmem:[#allocation2 + $0x249] sm:$0xff]
    %v432 = vld [vmem:[#allocation2 + $0x259] sm:$0xff]
    %v433 = vld [vmem:[#allocation2 + $0x261] sm:$0xff]
    %v434 = vld [vmem:[#allocation2 + $0x271] sm:$0xff]
    %v435 = vld [vmem:[#allocation2 + $0x279] sm:$0xff]
    %v436 = vld [vmem:[#allocation2 + $0x289] sm:$0xff]
    %v437 = vld [vmem:[#allocation2 + $0x291] sm:$0xff]
    %v438 = vld [vmem:[#allocation2 + $0x2a1] sm:$0xff]
    %v439 = vld [vmem:[#allocation2 + $0x2a9] sm:$0xff]
    %v440 = vld [vmem:[#allocation2 + $0x2b9] sm:$0xff]
    %v441 = vld [vmem:[#allocation2 + $0x2c1] sm:$0xff]
    %v442 = vld [vmem:[#allocation2 + $0x2d1] sm:$0xff]
    %v443 = vld [vmem:[#allocation2 + $0x2d9] sm:$0xff]
    %v444 = vld [vmem:[#allocation2 + $0x2e9] sm:$0xff]
    %v445 = vld [vmem:[#allocation2 + $0x2f1] sm:$0xff]
    %v446 = vld [vmem:[#allocation2 + $0x301] sm:$0xff]
    %v447 = vld [vmem:[#allocation2 + $0x309] sm:$0xff]
    %v448 = vld [vmem:[#allocation2 + $0x319] sm:$0xff]
    %v449 = vld [vmem:[#allocation2 + $0x321] sm:$0xff]
    %v450 = vpack.c.bf16 %v387, %v386
    %v451 = vpack.c.bf16 %v389, %v388
    %v452 = vpack.c.bf16 %v391, %v390
    %v453 = vpack.c.bf16 %v393, %v392
    %v454 = vpack.c.bf16 %v395, %v394
    %v455 = vpack.c.bf16 %v397, %v396
    %v456 = vpack.c.bf16 %v399, %v398
    %v457 = vpack.c.bf16 %v401, %v400
    %v458 = vpack.c.bf16 %v403, %v402
    %v459 = vpack.c.bf16 %v405, %v404
    %v460 = vpack.c.bf16 %v407, %v406
    %v461 = vpack.c.bf16 %v409, %v408
    %v462 = vpack.c.bf16 %v411, %v410
    %v463 = vpack.c.bf16 %v413, %v412
    %v464 = vpack.c.bf16 %v415, %v414
    %v465 = vpack.c.bf16 %v417, %v416
    %v466 = vpack.c.bf16 %v419, %v418
    %v467 = vpack.c.bf16 %v421, %v420
    %v468 = vpack.c.bf16 %v423, %v422
    %v469 = vpack.c.bf16 %v425, %v424
    %v470 = vpack.c.bf16 %v427, %v426
    %v471 = vpack.c.bf16 %v429, %v428
    %v472 = vpack.c.bf16 %v431, %v430
    %v473 = vpack.c.bf16 %v433, %v432
    %v474 = vpack.c.bf16 %v435, %v434
    %v475 = vpack.c.bf16 %v437, %v436
    %v476 = vpack.c.bf16 %v439, %v438
    %v477 = vpack.c.bf16 %v441, %v440
    %v478 = vpack.c.bf16 %v443, %v442
    %v479 = vpack.c.bf16 %v445, %v444
    %v480 = vpack.c.bf16 %v447, %v446
    %v481 = vpack.c.bf16 %v449, %v448
    %514 = vrot.lane.b32.xlu0 %v450, 4
    %v515 = vpop.permute.xlu0 %514
    %516 = vrot.lane.b32.xlu0 %v451, 4
    %v517 = vpop.permute.xlu0 %516
    %518 = vrot.lane.b32.xlu0 %v452, 4
    %v519 = vpop.permute.xlu0 %518
    %520 = vrot.lane.b32.xlu0 %v453, 4
    %v521 = vpop.permute.xlu0 %520
    %522 = vrot.lane.b32.xlu0 %v454, 4
    %v523 = vpop.permute.xlu0 %522
    %524 = vrot.lane.b32.xlu0 %v455, 4
    %v525 = vpop.permute.xlu0 %524
    %526 = vrot.lane.b32.xlu0 %v456, 4
    %v527 = vpop.permute.xlu0 %526
    %528 = vrot.lane.b32.xlu0 %v457, 4
    %v529 = vpop.permute.xlu0 %528
    %530 = vrot.lane.b32.xlu0 %v458, 4
    %v531 = vpop.permute.xlu0 %530
    %532 = vrot.lane.b32.xlu0 %v459, 4
    %v533 = vpop.permute.xlu0 %532
    %534 = vrot.lane.b32.xlu0 %v460, 4
    %v535 = vpop.permute.xlu0 %534
    %536 = vrot.lane.b32.xlu0 %v461, 4
    %v537 = vpop.permute.xlu0 %536
    %538 = vrot.lane.b32.xlu0 %v462, 4
    %v539 = vpop.permute.xlu0 %538
    %540 = vrot.lane.b32.xlu0 %v463, 4
    %v541 = vpop.permute.xlu0 %540
    %542 = vrot.lane.b32.xlu0 %v464, 4
    %v543 = vpop.permute.xlu0 %542
    %544 = vrot.lane.b32.xlu0 %v465, 4
    %v545 = vpop.permute.xlu0 %544
    %546 = vrot.lane.b32.xlu0 %v466, 4
    %v547 = vpop.permute.xlu0 %546
    %548 = vrot.lane.b32.xlu0 %v467, 4
    %v549 = vpop.permute.xlu0 %548
    %550 = vrot.lane.b32.xlu0 %v468, 4
    %v551 = vpop.permute.xlu0 %550
    %552 = vrot.lane.b32.xlu0 %v469, 4
    %v553 = vpop.permute.xlu0 %552
    %554 = vrot.lane.b32.xlu0 %v470, 4
    %v555 = vpop.permute.xlu0 %554
    %556 = vrot.lane.b32.xlu0 %v471, 4
    %v557 = vpop.permute.xlu0 %556
    %558 = vrot.lane.b32.xlu0 %v472, 4
    %v559 = vpop.permute.xlu0 %558
    %560 = vrot.lane.b32.xlu0 %v473, 4
    %v561 = vpop.permute.xlu0 %560
    %562 = vrot.lane.b32.xlu0 %v474, 4
    %v563 = vpop.permute.xlu0 %562
    %564 = vrot.lane.b32.xlu0 %v475, 4
    %v565 = vpop.permute.xlu0 %564
    %566 = vrot.lane.b32.xlu0 %v476, 4
    %v567 = vpop.permute.xlu0 %566
    %568 = vrot.lane.b32.xlu0 %v477, 4
    %v569 = vpop.permute.xlu0 %568
    %570 = vrot.lane.b32.xlu0 %v478, 4
    %v571 = vpop.permute.xlu0 %570
    %572 = vrot.lane.b32.xlu0 %v479, 4
    %v573 = vpop.permute.xlu0 %572
    %574 = vrot.lane.b32.xlu0 %v480, 4
    %v575 = vpop.permute.xlu0 %574
    %576 = vrot.lane.b32.xlu0 %v481, 4
    %v577 = vpop.permute.xlu0 %576
    %vm610 = vcmask 64544
    %611 = vst.msk [vmem:[#allocation3] sm:$0xff] %vm610, %v515
    %612 = vst.msk [vmem:[#allocation3 + $0x8] sm:$0xff] %vm610, %v517
    %613 = vst.msk [vmem:[#allocation3 + $0x10] sm:$0xff] %vm610, %v519
    %614 = vst.msk [vmem:[#allocation3 + $0x18] sm:$0xff] %vm610, %v521
    %615 = vst.msk [vmem:[#allocation3 + $0x20] sm:$0xff] %vm610, %v523
    %616 = vst.msk [vmem:[#allocation3 + $0x28] sm:$0xff] %vm610, %v525
    %617 = vst.msk [vmem:[#allocation3 + $0x30] sm:$0xff] %vm610, %v527
    %618 = vst.msk [vmem:[#allocation3 + $0x38] sm:$0xff] %vm610, %v529
    %619 = vst.msk [vmem:[#allocation3 + $0x40] sm:$0xff] %vm610, %v531
    %620 = vst.msk [vmem:[#allocation3 + $0x48] sm:$0xff] %vm610, %v533
    %621 = vst.msk [vmem:[#allocation3 + $0x50] sm:$0xff] %vm610, %v535
    %622 = vst.msk [vmem:[#allocation3 + $0x58] sm:$0xff] %vm610, %v537
    %623 = vst.msk [vmem:[#allocation3 + $0x60] sm:$0xff] %vm610, %v539
    %624 = vst.msk [vmem:[#allocation3 + $0x68] sm:$0xff] %vm610, %v541
    %625 = vst.msk [vmem:[#allocation3 + $0x70] sm:$0xff] %vm610, %v543
    %626 = vst.msk [vmem:[#allocation3 + $0x78] sm:$0xff] %vm610, %v545
    %627 = vst.msk [vmem:[#allocation3 + $0x80] sm:$0xff] %vm610, %v547
    %628 = vst.msk [vmem:[#allocation3 + $0x88] sm:$0xff] %vm610, %v549
    %629 = vst.msk [vmem:[#allocation3 + $0x90] sm:$0xff] %vm610, %v551
    %630 = vst.msk [vmem:[#allocation3 + $0x98] sm:$0xff] %vm610, %v553
    %631 = vst.msk [vmem:[#allocation3 + $0xa0] sm:$0xff] %vm610, %v555
    %632 = vst.msk [vmem:[#allocation3 + $0xa8] sm:$0xff] %vm610, %v557
    %633 = vst.msk [vmem:[#allocation3 + $0xb0] sm:$0xff] %vm610, %v559
    %634 = vst.msk [vmem:[#allocation3 + $0xb8] sm:$0xff] %vm610, %v561
    %635 = vst.msk [vmem:[#allocation3 + $0xc0] sm:$0xff] %vm610, %v563
    %636 = vst.msk [vmem:[#allocation3 + $0xc8] sm:$0xff] %vm610, %v565
    %637 = vst.msk [vmem:[#allocation3 + $0xd0] sm:$0xff] %vm610, %v567
    %638 = vst.msk [vmem:[#allocation3 + $0xd8] sm:$0xff] %vm610, %v569
    %639 = vst.msk [vmem:[#allocation3 + $0xe0] sm:$0xff] %vm610, %v571
    %640 = vst.msk [vmem:[#allocation3 + $0xe8] sm:$0xff] %vm610, %v573
    %641 = vst.msk [vmem:[#allocation3 + $0xf0] sm:$0xff] %vm610, %v575
    %642 = vst.msk [vmem:[#allocation3 + $0xf8] sm:$0xff] %vm610, %v577
    %v643 = vld [vmem:[#allocation2 + $0x2] sm:$0xff]
    %v644 = vld [vmem:[#allocation2 + $0xa] sm:$0xff]
    %v645 = vld [vmem:[#allocation2 + $0x1a] sm:$0xff]
    %v646 = vld [vmem:[#allocation2 + $0x22] sm:$0xff]
    %v647 = vld [vmem:[#allocation2 + $0x32] sm:$0xff]
    %v648 = vld [vmem:[#allocation2 + $0x3a] sm:$0xff]
    %v649 = vld [vmem:[#allocation2 + $0x4a] sm:$0xff]
    %v650 = vld [vmem:[#allocation2 + $0x52] sm:$0xff]
    %v651 = vld [vmem:[#allocation2 + $0x62] sm:$0xff]
    %v652 = vld [vmem:[#allocation2 + $0x6a] sm:$0xff]
    %v653 = vld [vmem:[#allocation2 + $0x7a] sm:$0xff]
    %v654 = vld [vmem:[#allocation2 + $0x82] sm:$0xff]
    %v655 = vld [vmem:[#allocation2 + $0x92] sm:$0xff]
    %v656 = vld [vmem:[#allocation2 + $0x9a] sm:$0xff]
    %v657 = vld [vmem:[#allocation2 + $0xaa] sm:$0xff]
    %v658 = vld [vmem:[#allocation2 + $0xb2] sm:$0xff]
    %v659 = vld [vmem:[#allocation2 + $0xc2] sm:$0xff]
    %v660 = vld [vmem:[#allocation2 + $0xca] sm:$0xff]
    %v661 = vld [vmem:[#allocation2 + $0xda] sm:$0xff]
    %v662 = vld [vmem:[#allocation2 + $0xe2] sm:$0xff]
    %v663 = vld [vmem:[#allocation2 + $0xf2] sm:$0xff]
    %v664 = vld [vmem:[#allocation2 + $0xfa] sm:$0xff]
    %v665 = vld [vmem:[#allocation2 + $0x10a] sm:$0xff]
    %v666 = vld [vmem:[#allocation2 + $0x112] sm:$0xff]
    %v667 = vld [vmem:[#allocation2 + $0x122] sm:$0xff]
    %v668 = vld [vmem:[#allocation2 + $0x12a] sm:$0xff]
    %v669 = vld [vmem:[#allocation2 + $0x13a] sm:$0xff]
    %v670 = vld [vmem:[#allocation2 + $0x142] sm:$0xff]
    %v671 = vld [vmem:[#allocation2 + $0x152] sm:$0xff]
    %v672 = vld [vmem:[#allocation2 + $0x15a] sm:$0xff]
    %v673 = vld [vmem:[#allocation2 + $0x16a] sm:$0xff]
    %v674 = vld [vmem:[#allocation2 + $0x172] sm:$0xff]
    %v675 = vld [vmem:[#allocation2 + $0x1b2] sm:$0xff]
    %v676 = vld [vmem:[#allocation2 + $0x1ba] sm:$0xff]
    %v677 = vld [vmem:[#allocation2 + $0x1ca] sm:$0xff]
    %v678 = vld [vmem:[#allocation2 + $0x1d2] sm:$0xff]
    %v679 = vld [vmem:[#allocation2 + $0x1e2] sm:$0xff]
    %v680 = vld [vmem:[#allocation2 + $0x1ea] sm:$0xff]
    %v681 = vld [vmem:[#allocation2 + $0x1fa] sm:$0xff]
    %v682 = vld [vmem:[#allocation2 + $0x202] sm:$0xff]
    %v683 = vld [vmem:[#allocation2 + $0x212] sm:$0xff]
    %v684 = vld [vmem:[#allocation2 + $0x21a] sm:$0xff]
    %v685 = vld [vmem:[#allocation2 + $0x22a] sm:$0xff]
    %v686 = vld [vmem:[#allocation2 + $0x232] sm:$0xff]
    %v687 = vld [vmem:[#allocation2 + $0x242] sm:$0xff]
    %v688 = vld [vmem:[#allocation2 + $0x24a] sm:$0xff]
    %v689 = vld [vmem:[#allocation2 + $0x25a] sm:$0xff]
    %v690 = vld [vmem:[#allocation2 + $0x262] sm:$0xff]
    %v691 = vld [vmem:[#allocation2 + $0x272] sm:$0xff]
    %v692 = vld [vmem:[#allocation2 + $0x27a] sm:$0xff]
    %v693 = vld [vmem:[#allocation2 + $0x28a] sm:$0xff]
    %v694 = vld [vmem:[#allocation2 + $0x292] sm:$0xff]
    %v695 = vld [vmem:[#allocation2 + $0x2a2] sm:$0xff]
    %v696 = vld [vmem:[#allocation2 + $0x2aa] sm:$0xff]
    %v697 = vld [vmem:[#allocation2 + $0x2ba] sm:$0xff]
    %v698 = vld [vmem:[#allocation2 + $0x2c2] sm:$0xff]
    %v699 = vld [vmem:[#allocation2 + $0x2d2] sm:$0xff]
    %v700 = vld [vmem:[#allocation2 + $0x2da] sm:$0xff]
    %v701 = vld [vmem:[#allocation2 + $0x2ea] sm:$0xff]
    %v702 = vld [vmem:[#allocation2 + $0x2f2] sm:$0xff]
    %v703 = vld [vmem:[#allocation2 + $0x302] sm:$0xff]
    %v704 = vld [vmem:[#allocation2 + $0x30a] sm:$0xff]
    %v705 = vld [vmem:[#allocation2 + $0x31a] sm:$0xff]
    %v706 = vld [vmem:[#allocation2 + $0x322] sm:$0xff]
    %v707 = vpack.c.bf16 %v644, %v643
    %v708 = vpack.c.bf16 %v646, %v645
    %v709 = vpack.c.bf16 %v648, %v647
    %v710 = vpack.c.bf16 %v650, %v649
    %v711 = vpack.c.bf16 %v652, %v651
    %v712 = vpack.c.bf16 %v654, %v653
    %v713 = vpack.c.bf16 %v656, %v655
    %v714 = vpack.c.bf16 %v658, %v657
    %v715 = vpack.c.bf16 %v660, %v659
    %v716 = vpack.c.bf16 %v662, %v661
    %v717 = vpack.c.bf16 %v664, %v663
    %v718 = vpack.c.bf16 %v666, %v665
    %v719 = vpack.c.bf16 %v668, %v667
    %v720 = vpack.c.bf16 %v670, %v669
    %v721 = vpack.c.bf16 %v672, %v671
    %v722 = vpack.c.bf16 %v674, %v673
    %v723 = vpack.c.bf16 %v676, %v675
    %v724 = vpack.c.bf16 %v678, %v677
    %v725 = vpack.c.bf16 %v680, %v679
    %v726 = vpack.c.bf16 %v682, %v681
    %v727 = vpack.c.bf16 %v684, %v683
    %v728 = vpack.c.bf16 %v686, %v685
    %v729 = vpack.c.bf16 %v688, %v687
    %v730 = vpack.c.bf16 %v690, %v689
    %v731 = vpack.c.bf16 %v692, %v691
    %v732 = vpack.c.bf16 %v694, %v693
    %v733 = vpack.c.bf16 %v696, %v695
    %v734 = vpack.c.bf16 %v698, %v697
    %v735 = vpack.c.bf16 %v700, %v699
    %v736 = vpack.c.bf16 %v702, %v701
    %v737 = vpack.c.bf16 %v704, %v703
    %v738 = vpack.c.bf16 %v706, %v705
    %771 = vrot.lane.b32.xlu0 %v707, 8
    %v772 = vpop.permute.xlu0 %771
    %773 = vrot.lane.b32.xlu0 %v708, 8
    %v774 = vpop.permute.xlu0 %773
    %775 = vrot.lane.b32.xlu0 %v709, 8
    %v776 = vpop.permute.xlu0 %775
    %777 = vrot.lane.b32.xlu0 %v710, 8
    %v778 = vpop.permute.xlu0 %777
    %779 = vrot.lane.b32.xlu0 %v711, 8
    %v780 = vpop.permute.xlu0 %779
    %781 = vrot.lane.b32.xlu0 %v712, 8
    %v782 = vpop.permute.xlu0 %781
    %783 = vrot.lane.b32.xlu0 %v713, 8
    %v784 = vpop.permute.xlu0 %783
    %785 = vrot.lane.b32.xlu0 %v714, 8
    %v786 = vpop.permute.xlu0 %785
    %787 = vrot.lane.b32.xlu0 %v715, 8
    %v788 = vpop.permute.xlu0 %787
    %789 = vrot.lane.b32.xlu0 %v716, 8
    %v790 = vpop.permute.xlu0 %789
    %791 = vrot.lane.b32.xlu0 %v717, 8
    %v792 = vpop.permute.xlu0 %791
    %793 = vrot.lane.b32.xlu0 %v718, 8
    %v794 = vpop.permute.xlu0 %793
    %795 = vrot.lane.b32.xlu0 %v719, 8
    %v796 = vpop.permute.xlu0 %795
    %797 = vrot.lane.b32.xlu0 %v720, 8
    %v798 = vpop.permute.xlu0 %797
    %799 = vrot.lane.b32.xlu0 %v721, 8
    %v800 = vpop.permute.xlu0 %799
    %801 = vrot.lane.b32.xlu0 %v722, 8
    %v802 = vpop.permute.xlu0 %801
    %803 = vrot.lane.b32.xlu0 %v723, 8
    %v804 = vpop.permute.xlu0 %803
    %805 = vrot.lane.b32.xlu0 %v724, 8
    %v806 = vpop.permute.xlu0 %805
    %807 = vrot.lane.b32.xlu0 %v725, 8
    %v808 = vpop.permute.xlu0 %807
    %809 = vrot.lane.b32.xlu0 %v726, 8
    %v810 = vpop.permute.xlu0 %809
    %811 = vrot.lane.b32.xlu0 %v727, 8
    %v812 = vpop.permute.xlu0 %811
    %813 = vrot.lane.b32.xlu0 %v728, 8
    %v814 = vpop.permute.xlu0 %813
    %815 = vrot.lane.b32.xlu0 %v729, 8
    %v816 = vpop.permute.xlu0 %815
    %817 = vrot.lane.b32.xlu0 %v730, 8
    %v818 = vpop.permute.xlu0 %817
    %819 = vrot.lane.b32.xlu0 %v731, 8
    %v820 = vpop.permute.xlu0 %819
    %821 = vrot.lane.b32.xlu0 %v732, 8
    %v822 = vpop.permute.xlu0 %821
    %823 = vrot.lane.b32.xlu0 %v733, 8
    %v824 = vpop.permute.xlu0 %823
    %825 = vrot.lane.b32.xlu0 %v734, 8
    %v826 = vpop.permute.xlu0 %825
    %827 = vrot.lane.b32.xlu0 %v735, 8
    %v828 = vpop.permute.xlu0 %827
    %829 = vrot.lane.b32.xlu0 %v736, 8
    %v830 = vpop.permute.xlu0 %829
    %831 = vrot.lane.b32.xlu0 %v737, 8
    %v832 = vpop.permute.xlu0 %831
    %833 = vrot.lane.b32.xlu0 %v738, 8
    %v834 = vpop.permute.xlu0 %833
    %vm867 = vcmask 97344
    %868 = vst.msk [vmem:[#allocation3] sm:$0xff] %vm867, %v772
    %869 = vst.msk [vmem:[#allocation3 + $0x8] sm:$0xff] %vm867, %v774
    %870 = vst.msk [vmem:[#allocation3 + $0x10] sm:$0xff] %vm867, %v776
    %871 = vst.msk [vmem:[#allocation3 + $0x18] sm:$0xff] %vm867, %v778
    %872 = vst.msk [vmem:[#allocation3 + $0x20] sm:$0xff] %vm867, %v780
    %873 = vst.msk [vmem:[#allocation3 + $0x28] sm:$0xff] %vm867, %v782
    %874 = vst.msk [vmem:[#allocation3 + $0x30] sm:$0xff] %vm867, %v784
    %875 = vst.msk [vmem:[#allocation3 + $0x38] sm:$0xff] %vm867, %v786
    %876 = vst.msk [vmem:[#allocation3 + $0x40] sm:$0xff] %vm867, %v788
    %877 = vst.msk [vmem:[#allocation3 + $0x48] sm:$0xff] %vm867, %v790
    %878 = vst.msk [vmem:[#allocation3 + $0x50] sm:$0xff] %vm867, %v792
    %879 = vst.msk [vmem:[#allocation3 + $0x58] sm:$0xff] %vm867, %v794
    %880 = vst.msk [vmem:[#allocation3 + $0x60] sm:$0xff] %vm867, %v796
    %881 = vst.msk [vmem:[#allocation3 + $0x68] sm:$0xff] %vm867, %v798
    %882 = vst.msk [vmem:[#allocation3 + $0x70] sm:$0xff] %vm867, %v800
    %883 = vst.msk [vmem:[#allocation3 + $0x78] sm:$0xff] %vm867, %v802
    %884 = vst.msk [vmem:[#allocation3 + $0x80] sm:$0xff] %vm867, %v804
    %885 = vst.msk [vmem:[#allocation3 + $0x88] sm:$0xff] %vm867, %v806
    %886 = vst.msk [vmem:[#allocation3 + $0x90] sm:$0xff] %vm867, %v808
    %887 = vst.msk [vmem:[#allocation3 + $0x98] sm:$0xff] %vm867, %v810
    %888 = vst.msk [vmem:[#allocation3 + $0xa0] sm:$0xff] %vm867, %v812
    %889 = vst.msk [vmem:[#allocation3 + $0xa8] sm:$0xff] %vm867, %v814
    %890 = vst.msk [vmem:[#allocation3 + $0xb0] sm:$0xff] %vm867, %v816
    %891 = vst.msk [vmem:[#allocation3 + $0xb8] sm:$0xff] %vm867, %v818
    %892 = vst.msk [vmem:[#allocation3 + $0xc0] sm:$0xff] %vm867, %v820
    %893 = vst.msk [vmem:[#allocation3 + $0xc8] sm:$0xff] %vm867, %v822
    %894 = vst.msk [vmem:[#allocation3 + $0xd0] sm:$0xff] %vm867, %v824
    %895 = vst.msk [vmem:[#allocation3 + $0xd8] sm:$0xff] %vm867, %v826
    %896 = vst.msk [vmem:[#allocation3 + $0xe0] sm:$0xff] %vm867, %v828
    %897 = vst.msk [vmem:[#allocation3 + $0xe8] sm:$0xff] %vm867, %v830
    %898 = vst.msk [vmem:[#allocation3 + $0xf0] sm:$0xff] %vm867, %v832
    %899 = vst.msk [vmem:[#allocation3 + $0xf8] sm:$0xff] %vm867, %v834
    %v900 = vld [vmem:[%s193] sm:$0xff]
    %v901 = vld [vmem:[%s193 + $0x8] sm:$0xff]
    %v902 = vld [vmem:[%s193 + $0x18] sm:$0xff]
    %v903 = vld [vmem:[%s193 + $0x20] sm:$0xff]
    %v904 = vld [vmem:[%s193 + $0x30] sm:$0xff]
    %v905 = vld [vmem:[%s193 + $0x38] sm:$0xff]
    %v906 = vld [vmem:[%s193 + $0x48] sm:$0xff]
    %v907 = vld [vmem:[%s193 + $0x50] sm:$0xff]
    %v908 = vld [vmem:[%s193 + $0x60] sm:$0xff]
    %v909 = vld [vmem:[%s193 + $0x68] sm:$0xff]
    %v910 = vld [vmem:[%s193 + $0x78] sm:$0xff]
    %v911 = vld [vmem:[%s193 + $0x80] sm:$0xff]
    %v912 = vld [vmem:[%s193 + $0x90] sm:$0xff]
    %v913 = vld [vmem:[%s193 + $0x98] sm:$0xff]
    %v914 = vld [vmem:[%s193 + $0xa8] sm:$0xff]
    %v915 = vld [vmem:[%s193 + $0xb0] sm:$0xff]
    %v916 = vld [vmem:[%s193 + $0xc0] sm:$0xff]
    %v917 = vld [vmem:[%s193 + $0xc8] sm:$0xff]
    %v918 = vld [vmem:[%s193 + $0xd8] sm:$0xff]
    %v919 = vld [vmem:[%s193 + $0xe0] sm:$0xff]
    %v920 = vld [vmem:[%s193 + $0xf0] sm:$0xff]
    %v921 = vld [vmem:[%s193 + $0xf8] sm:$0xff]
    %v922 = vld [vmem:[%s193 + $0x108] sm:$0xff]
    %v923 = vld [vmem:[%s193 + $0x110] sm:$0xff]
    %v924 = vld [vmem:[%s193 + $0x120] sm:$0xff]
    %v925 = vld [vmem:[%s193 + $0x128] sm:$0xff]
    %v926 = vld [vmem:[%s193 + $0x138] sm:$0xff]
    %v927 = vld [vmem:[%s193 + $0x140] sm:$0xff]
    %v928 = vld [vmem:[%s193 + $0x150] sm:$0xff]
    %v929 = vld [vmem:[%s193 + $0x158] sm:$0xff]
    %v930 = vld [vmem:[%s193 + $0x168] sm:$0xff]
    %v931 = vld [vmem:[%s193 + $0x170] sm:$0xff]
    %v932 = vld [vmem:[%s193 + $0x1b0] sm:$0xff]
    %v933 = vld [vmem:[%s193 + $0x1b8] sm:$0xff]
    %v934 = vld [vmem:[%s193 + $0x1c8] sm:$0xff]
    %v935 = vld [vmem:[%s193 + $0x1d0] sm:$0xff]
    %v936 = vld [vmem:[%s193 + $0x1e0] sm:$0xff]
    %v937 = vld [vmem:[%s193 + $0x1e8] sm:$0xff]
    %v938 = vld [vmem:[%s193 + $0x1f8] sm:$0xff]
    %v939 = vld [vmem:[%s193 + $0x200] sm:$0xff]
    %v940 = vld [vmem:[%s193 + $0x210] sm:$0xff]
    %v941 = vld [vmem:[%s193 + $0x218] sm:$0xff]
    %v942 = vld [vmem:[%s193 + $0x228] sm:$0xff]
    %v943 = vld [vmem:[%s193 + $0x230] sm:$0xff]
    %v944 = vld [vmem:[%s193 + $0x240] sm:$0xff]
    %v945 = vld [vmem:[%s193 + $0x248] sm:$0xff]
    %v946 = vld [vmem:[%s193 + $0x258] sm:$0xff]
    %v947 = vld [vmem:[%s193 + $0x260] sm:$0xff]
    %v948 = vld [vmem:[%s193 + $0x270] sm:$0xff]
    %v949 = vld [vmem:[%s193 + $0x278] sm:$0xff]
    %v950 = vld [vmem:[%s193 + $0x288] sm:$0xff]
    %v951 = vld [vmem:[%s193 + $0x290] sm:$0xff]
    %v952 = vld [vmem:[%s193 + $0x2a0] sm:$0xff]
    %v953 = vld [vmem:[%s193 + $0x2a8] sm:$0xff]
    %v954 = vld [vmem:[%s193 + $0x2b8] sm:$0xff]
    %v955 = vld [vmem:[%s193 + $0x2c0] sm:$0xff]
    %v956 = vld [vmem:[%s193 + $0x2d0] sm:$0xff]
    %v957 = vld [vmem:[%s193 + $0x2d8] sm:$0xff]
    %v958 = vld [vmem:[%s193 + $0x2e8] sm:$0xff]
    %v959 = vld [vmem:[%s193 + $0x2f0] sm:$0xff]
    %v960 = vld [vmem:[%s193 + $0x300] sm:$0xff]
    %v961 = vld [vmem:[%s193 + $0x308] sm:$0xff]
    %v962 = vld [vmem:[%s193 + $0x318] sm:$0xff]
    %v963 = vld [vmem:[%s193 + $0x320] sm:$0xff]
    %v964 = vpack.c.bf16 %v901, %v900
    %v965 = vpack.c.bf16 %v903, %v902
    %v966 = vpack.c.bf16 %v905, %v904
    %v967 = vpack.c.bf16 %v907, %v906
    %v968 = vpack.c.bf16 %v909, %v908
    %v969 = vpack.c.bf16 %v911, %v910
    %v970 = vpack.c.bf16 %v913, %v912
    %v971 = vpack.c.bf16 %v915, %v914
    %v972 = vpack.c.bf16 %v917, %v916
    %v973 = vpack.c.bf16 %v919, %v918
    %v974 = vpack.c.bf16 %v921, %v920
    %v975 = vpack.c.bf16 %v923, %v922
    %v976 = vpack.c.bf16 %v925, %v924
    %v977 = vpack.c.bf16 %v927, %v926
    %v978 = vpack.c.bf16 %v929, %v928
    %v979 = vpack.c.bf16 %v931, %v930
    %v980 = vpack.c.bf16 %v933, %v932
    %v981 = vpack.c.bf16 %v935, %v934
    %v982 = vpack.c.bf16 %v937, %v936
    %v983 = vpack.c.bf16 %v939, %v938
    %v984 = vpack.c.bf16 %v941, %v940
    %v985 = vpack.c.bf16 %v943, %v942
    %v986 = vpack.c.bf16 %v945, %v944
    %v987 = vpack.c.bf16 %v947, %v946
    %v988 = vpack.c.bf16 %v949, %v948
    %v989 = vpack.c.bf16 %v951, %v950
    %v990 = vpack.c.bf16 %v953, %v952
    %v991 = vpack.c.bf16 %v955, %v954
    %v992 = vpack.c.bf16 %v957, %v956
    %v993 = vpack.c.bf16 %v959, %v958
    %v994 = vpack.c.bf16 %v961, %v960
    %v995 = vpack.c.bf16 %v963, %v962
    %1028 = vrot.lane.b32.xlu0 %v964, 12
    %v1029 = vpop.permute.xlu0 %1028
    %1030 = vrot.lane.b32.xlu0 %v965, 12
    %v1031 = vpop.permute.xlu0 %1030
    %1032 = vrot.lane.b32.xlu0 %v966, 12
    %v1033 = vpop.permute.xlu0 %1032
    %1034 = vrot.lane.b32.xlu0 %v967, 12
    %v1035 = vpop.permute.xlu0 %1034
    %1036 = vrot.lane.b32.xlu0 %v968, 12
    %v1037 = vpop.permute.xlu0 %1036
    %1038 = vrot.lane.b32.xlu0 %v969, 12
    %v1039 = vpop.permute.xlu0 %1038
    %1040 = vrot.lane.b32.xlu0 %v970, 12
    %v1041 = vpop.permute.xlu0 %1040
    %1042 = vrot.lane.b32.xlu0 %v971, 12
    %v1043 = vpop.permute.xlu0 %1042
    %1044 = vrot.lane.b32.xlu0 %v972, 12
    %v1045 = vpop.permute.xlu0 %1044
    %1046 = vrot.lane.b32.xlu0 %v973, 12
    %v1047 = vpop.permute.xlu0 %1046
    %1048 = vrot.lane.b32.xlu0 %v974, 12
    %v1049 = vpop.permute.xlu0 %1048
    %1050 = vrot.lane.b32.xlu0 %v975, 12
    %v1051 = vpop.permute.xlu0 %1050
    %1052 = vrot.lane.b32.xlu0 %v976, 12
    %v1053 = vpop.permute.xlu0 %1052
    %1054 = vrot.lane.b32.xlu0 %v977, 12
    %v1055 = vpop.permute.xlu0 %1054
    %1056 = vrot.lane.b32.xlu0 %v978, 12
    %v1057 = vpop.permute.xlu0 %1056
    %1058 = vrot.lane.b32.xlu0 %v979, 12
    %v1059 = vpop.permute.xlu0 %1058
    %1060 = vrot.lane.b32.xlu0 %v980, 12
    %v1061 = vpop.permute.xlu0 %1060
    %1062 = vrot.lane.b32.xlu0 %v981, 12
    %v1063 = vpop.permute.xlu0 %1062
    %1064 = vrot.lane.b32.xlu0 %v982, 12
    %v1065 = vpop.permute.xlu0 %1064
    %1066 = vrot.lane.b32.xlu0 %v983, 12
    %v1067 = vpop.permute.xlu0 %1066
    %1068 = vrot.lane.b32.xlu0 %v984, 12
    %v1069 = vpop.permute.xlu0 %1068
    %1070 = vrot.lane.b32.xlu0 %v985, 12
    %v1071 = vpop.permute.xlu0 %1070
    %1072 = vrot.lane.b32.xlu0 %v986, 12
    %v1073 = vpop.permute.xlu0 %1072
    %1074 = vrot.lane.b32.xlu0 %v987, 12
    %v1075 = vpop.permute.xlu0 %1074
    %1076 = vrot.lane.b32.xlu0 %v988, 12
    %v1077 = vpop.permute.xlu0 %1076
    %1078 = vrot.lane.b32.xlu0 %v989, 12
    %v1079 = vpop.permute.xlu0 %1078
    %1080 = vrot.lane.b32.xlu0 %v990, 12
    %v1081 = vpop.permute.xlu0 %1080
    %1082 = vrot.lane.b32.xlu0 %v991, 12
    %v1083 = vpop.permute.xlu0 %1082
    %1084 = vrot.lane.b32.xlu0 %v992, 12
    %v1085 = vpop.permute.xlu0 %1084
    %1086 = vrot.lane.b32.xlu0 %v993, 12
    %v1087 = vpop.permute.xlu0 %1086
    %1088 = vrot.lane.b32.xlu0 %v994, 12
    %v1089 = vpop.permute.xlu0 %1088
    %1090 = vrot.lane.b32.xlu0 %v995, 12
    %v1091 = vpop.permute.xlu0 %1090
    %vm1124 = vcmask 130144
    %1125 = vst.msk [vmem:[#allocation3] sm:$0xff] %vm1124, %v1029
    %1126 = vst.msk [vmem:[#allocation3 + $0x8] sm:$0xff] %vm1124, %v1031
    %1127 = vst.msk [vmem:[#allocation3 + $0x10] sm:$0xff] %vm1124, %v1033
    %1128 = vst.msk [vmem:[#allocation3 + $0x18] sm:$0xff] %vm1124, %v1035
    %1129 = vst.msk [vmem:[#allocation3 + $0x20] sm:$0xff] %vm1124, %v1037
    %1130 = vst.msk [vmem:[#allocation3 + $0x28] sm:$0xff] %vm1124, %v1039
    %1131 = vst.msk [vmem:[#allocation3 + $0x30] sm:$0xff] %vm1124, %v1041
    %1132 = vst.msk [vmem:[#allocation3 + $0x38] sm:$0xff] %vm1124, %v1043
    %1133 = vst.msk [vmem:[#allocation3 + $0x40] sm:$0xff] %vm1124, %v1045
    %1134 = vst.msk [vmem:[#allocation3 + $0x48] sm:$0xff] %vm1124, %v1047
    %1135 = vst.msk [vmem:[#allocation3 + $0x50] sm:$0xff] %vm1124, %v1049
    %1136 = vst.msk [vmem:[#allocation3 + $0x58] sm:$0xff] %vm1124, %v1051
    %1137 = vst.msk [vmem:[#allocation3 + $0x60] sm:$0xff] %vm1124, %v1053
    %1138 = vst.msk [vmem:[#allocation3 + $0x68] sm:$0xff] %vm1124, %v1055
    %1139 = vst.msk [vmem:[#allocation3 + $0x70] sm:$0xff] %vm1124, %v1057
    %1140 = vst.msk [vmem:[#allocation3 + $0x78] sm:$0xff] %vm1124, %v1059
    %1141 = vst.msk [vmem:[#allocation3 + $0x80] sm:$0xff] %vm1124, %v1061
    %1142 = vst.msk [vmem:[#allocation3 + $0x88] sm:$0xff] %vm1124, %v1063
    %1143 = vst.msk [vmem:[#allocation3 + $0x90] sm:$0xff] %vm1124, %v1065
    %1144 = vst.msk [vmem:[#allocation3 + $0x98] sm:$0xff] %vm1124, %v1067
    %1145 = vst.msk [vmem:[#allocation3 + $0xa0] sm:$0xff] %vm1124, %v1069
    %1146 = vst.msk [vmem:[#allocation3 + $0xa8] sm:$0xff] %vm1124, %v1071
    %1147 = vst.msk [vmem:[#allocation3 + $0xb0] sm:$0xff] %vm1124, %v1073
    %1148 = vst.msk [vmem:[#allocation3 + $0xb8] sm:$0xff] %vm1124, %v1075
    %1149 = vst.msk [vmem:[#allocation3 + $0xc0] sm:$0xff] %vm1124, %v1077
    %1150 = vst.msk [vmem:[#allocation3 + $0xc8] sm:$0xff] %vm1124, %v1079
    %1151 = vst.msk [vmem:[#allocation3 + $0xd0] sm:$0xff] %vm1124, %v1081
    %1152 = vst.msk [vmem:[#allocation3 + $0xd8] sm:$0xff] %vm1124, %v1083
    %1153 = vst.msk [vmem:[#allocation3 + $0xe0] sm:$0xff] %vm1124, %v1085
    %1154 = vst.msk [vmem:[#allocation3 + $0xe8] sm:$0xff] %vm1124, %v1087
    %1155 = vst.msk [vmem:[#allocation3 + $0xf0] sm:$0xff] %vm1124, %v1089
    %1156 = vst.msk [vmem:[#allocation3 + $0xf8] sm:$0xff] %vm1124, %v1091
    %v1157 = vld [vmem:[%s193 + $0x1] sm:$0xff]
    %v1158 = vld [vmem:[%s193 + $0x9] sm:$0xff]
    %v1159 = vld [vmem:[%s193 + $0x19] sm:$0xff]
    %v1160 = vld [vmem:[%s193 + $0x21] sm:$0xff]
    %v1161 = vld [vmem:[%s193 + $0x31] sm:$0xff]
    %v1162 = vld [vmem:[%s193 + $0x39] sm:$0xff]
    %v1163 = vld [vmem:[%s193 + $0x49] sm:$0xff]
    %v1164 = vld [vmem:[%s193 + $0x51] sm:$0xff]
    %v1165 = vld [vmem:[%s193 + $0x61] sm:$0xff]
    %v1166 = vld [vmem:[%s193 + $0x69] sm:$0xff]
    %v1167 = vld [vmem:[%s193 + $0x79] sm:$0xff]
    %v1168 = vld [vmem:[%s193 + $0x81] sm:$0xff]
    %v1169 = vld [vmem:[%s193 + $0x91] sm:$0xff]
    %v1170 = vld [vmem:[%s193 + $0x99] sm:$0xff]
    %v1171 = vld [vmem:[%s193 + $0xa9] sm:$0xff]
    %v1172 = vld [vmem:[%s193 + $0xb1] sm:$0xff]
    %v1173 = vld [vmem:[%s193 + $0xc1] sm:$0xff]
    %v1174 = vld [vmem:[%s193 + $0xc9] sm:$0xff]
    %v1175 = vld [vmem:[%s193 + $0xd9] sm:$0xff]
    %v1176 = vld [vmem:[%s193 + $0xe1] sm:$0xff]
    %v1177 = vld [vmem:[%s193 + $0xf1] sm:$0xff]
    %v1178 = vld [vmem:[%s193 + $0xf9] sm:$0xff]
    %v1179 = vld [vmem:[%s193 + $0x109] sm:$0xff]
    %v1180 = vld [vmem:[%s193 + $0x111] sm:$0xff]
    %v1181 = vld [vmem:[%s193 + $0x121] sm:$0xff]
    %v1182 = vld [vmem:[%s193 + $0x129] sm:$0xff]
    %v1183 = vld [vmem:[%s193 + $0x139] sm:$0xff]
    %v1184 = vld [vmem:[%s193 + $0x141] sm:$0xff]
    %v1185 = vld [vmem:[%s193 + $0x151] sm:$0xff]
    %v1186 = vld [vmem:[%s193 + $0x159] sm:$0xff]
    %v1187 = vld [vmem:[%s193 + $0x169] sm:$0xff]
    %v1188 = vld [vmem:[%s193 + $0x171] sm:$0xff]
    %v1189 = vld [vmem:[%s193 + $0x1b1] sm:$0xff]
    %v1190 = vld [vmem:[%s193 + $0x1b9] sm:$0xff]
    %v1191 = vld [vmem:[%s193 + $0x1c9] sm:$0xff]
    %v1192 = vld [vmem:[%s193 + $0x1d1] sm:$0xff]
    %v1193 = vld [vmem:[%s193 + $0x1e1] sm:$0xff]
    %v1194 = vld [vmem:[%s193 + $0x1e9] sm:$0xff]
    %v1195 = vld [vmem:[%s193 + $0x1f9] sm:$0xff]
    %v1196 = vld [vmem:[%s193 + $0x201] sm:$0xff]
    %v1197 = vld [vmem:[%s193 + $0x211] sm:$0xff]
    %v1198 = vld [vmem:[%s193 + $0x219] sm:$0xff]
    %v1199 = vld [vmem:[%s193 + $0x229] sm:$0xff]
    %v1200 = vld [vmem:[%s193 + $0x231] sm:$0xff]
    %v1201 = vld [vmem:[%s193 + $0x241] sm:$0xff]
    %v1202 = vld [vmem:[%s193 + $0x249] sm:$0xff]
    %v1203 = vld [vmem:[%s193 + $0x259] sm:$0xff]
    %v1204 = vld [vmem:[%s193 + $0x261] sm:$0xff]
    %v1205 = vld [vmem:[%s193 + $0x271] sm:$0xff]
    %v1206 = vld [vmem:[%s193 + $0x279] sm:$0xff]
    %v1207 = vld [vmem:[%s193 + $0x289] sm:$0xff]
    %v1208 = vld [vmem:[%s193 + $0x291] sm:$0xff]
    %v1209 = vld [vmem:[%s193 + $0x2a1] sm:$0xff]
    %v1210 = vld [vmem:[%s193 + $0x2a9] sm:$0xff]
    %v1211 = vld [vmem:[%s193 + $0x2b9] sm:$0xff]
    %v1212 = vld [vmem:[%s193 + $0x2c1] sm:$0xff]
    %v1213 = vld [vmem:[%s193 + $0x2d1] sm:$0xff]
    %v1214 = vld [vmem:[%s193 + $0x2d9] sm:$0xff]
    %v1215 = vld [vmem:[%s193 + $0x2e9] sm:$0xff]
    %v1216 = vld [vmem:[%s193 + $0x2f1] sm:$0xff]
    %v1217 = vld [vmem:[%s193 + $0x301] sm:$0xff]
    %v1218 = vld [vmem:[%s193 + $0x309] sm:$0xff]
    %v1219 = vld [vmem:[%s193 + $0x319] sm:$0xff]
    %v1220 = vld [vmem:[%s193 + $0x321] sm:$0xff]
    %v1221 = vpack.c.bf16 %v1158, %v1157
    %v1222 = vpack.c.bf16 %v1160, %v1159
    %v1223 = vpack.c.bf16 %v1162, %v1161
    %v1224 = vpack.c.bf16 %v1164, %v1163
    %v1225 = vpack.c.bf16 %v1166, %v1165
    %v1226 = vpack.c.bf16 %v1168, %v1167
    %v1227 = vpack.c.bf16 %v1170, %v1169
    %v1228 = vpack.c.bf16 %v1172, %v1171
    %v1229 = vpack.c.bf16 %v1174, %v1173
    %v1230 = vpack.c.bf16 %v1176, %v1175
    %v1231 = vpack.c.bf16 %v1178, %v1177
    %v1232 = vpack.c.bf16 %v1180, %v1179
    %v1233 = vpack.c.bf16 %v1182, %v1181
    %v1234 = vpack.c.bf16 %v1184, %v1183
    %v1235 = vpack.c.bf16 %v1186, %v1185
    %v1236 = vpack.c.bf16 %v1188, %v1187
    %v1237 = vpack.c.bf16 %v1190, %v1189
    %v1238 = vpack.c.bf16 %v1192, %v1191
    %v1239 = vpack.c.bf16 %v1194, %v1193
    %v1240 = vpack.c.bf16 %v1196, %v1195
    %v1241 = vpack.c.bf16 %v1198, %v1197
    %v1242 = vpack.c.bf16 %v1200, %v1199
    %v1243 = vpack.c.bf16 %v1202, %v1201
    %v1244 = vpack.c.bf16 %v1204, %v1203
    %v1245 = vpack.c.bf16 %v1206, %v1205
    %v1246 = vpack.c.bf16 %v1208, %v1207
    %v1247 = vpack.c.bf16 %v1210, %v1209
    %v1248 = vpack.c.bf16 %v1212, %v1211
    %v1249 = vpack.c.bf16 %v1214, %v1213
    %v1250 = vpack.c.bf16 %v1216, %v1215
    %v1251 = vpack.c.bf16 %v1218, %v1217
    %v1252 = vpack.c.bf16 %v1220, %v1219
    %1285 = vrot.lane.b32.xlu0 %v1221, 16
    %v1286 = vpop.permute.xlu0 %1285
    %1287 = vrot.lane.b32.xlu0 %v1222, 16
    %v1288 = vpop.permute.xlu0 %1287
    %1289 = vrot.lane.b32.xlu0 %v1223, 16
    %v1290 = vpop.permute.xlu0 %1289
    %1291 = vrot.lane.b32.xlu0 %v1224, 16
    %v1292 = vpop.permute.xlu0 %1291
    %1293 = vrot.lane.b32.xlu0 %v1225, 16
    %v1294 = vpop.permute.xlu0 %1293
    %1295 = vrot.lane.b32.xlu0 %v1226, 16
    %v1296 = vpop.permute.xlu0 %1295
    %1297 = vrot.lane.b32.xlu0 %v1227, 16
    %v1298 = vpop.permute.xlu0 %1297
    %1299 = vrot.lane.b32.xlu0 %v1228, 16
    %v1300 = vpop.permute.xlu0 %1299
    %1301 = vrot.lane.b32.xlu0 %v1229, 16
    %v1302 = vpop.permute.xlu0 %1301
    %1303 = vrot.lane.b32.xlu0 %v1230, 16
    %v1304 = vpop.permute.xlu0 %1303
    %1305 = vrot.lane.b32.xlu0 %v1231, 16
    %v1306 = vpop.permute.xlu0 %1305
    %1307 = vrot.lane.b32.xlu0 %v1232, 16
    %v1308 = vpop.permute.xlu0 %1307
    %1309 = vrot.lane.b32.xlu0 %v1233, 16
    %v1310 = vpop.permute.xlu0 %1309
    %1311 = vrot.lane.b32.xlu0 %v1234, 16
    %v1312 = vpop.permute.xlu0 %1311
    %1313 = vrot.lane.b32.xlu0 %v1235, 16
    %v1314 = vpop.permute.xlu0 %1313
    %1315 = vrot.lane.b32.xlu0 %v1236, 16
    %v1316 = vpop.permute.xlu0 %1315
    %1317 = vrot.lane.b32.xlu0 %v1237, 16
    %v1318 = vpop.permute.xlu0 %1317
    %1319 = vrot.lane.b32.xlu0 %v1238, 16
    %v1320 = vpop.permute.xlu0 %1319
    %1321 = vrot.lane.b32.xlu0 %v1239, 16
    %v1322 = vpop.permute.xlu0 %1321
    %1323 = vrot.lane.b32.xlu0 %v1240, 16
    %v1324 = vpop.permute.xlu0 %1323
    %1325 = vrot.lane.b32.xlu0 %v1241, 16
    %v1326 = vpop.permute.xlu0 %1325
    %1327 = vrot.lane.b32.xlu0 %v1242, 16
    %v1328 = vpop.permute.xlu0 %1327
    %1329 = vrot.lane.b32.xlu0 %v1243, 16
    %v1330 = vpop.permute.xlu0 %1329
    %1331 = vrot.lane.b32.xlu0 %v1244, 16
    %v1332 = vpop.permute.xlu0 %1331
    %1333 = vrot.lane.b32.xlu0 %v1245, 16
    %v1334 = vpop.permute.xlu0 %1333
    %1335 = vrot.lane.b32.xlu0 %v1246, 16
    %v1336 = vpop.permute.xlu0 %1335
    %1337 = vrot.lane.b32.xlu0 %v1247, 16
    %v1338 = vpop.permute.xlu0 %1337
    %1339 = vrot.lane.b32.xlu0 %v1248, 16
    %v1340 = vpop.permute.xlu0 %1339
    %1341 = vrot.lane.b32.xlu0 %v1249, 16
    %v1342 = vpop.permute.xlu0 %1341
    %1343 = vrot.lane.b32.xlu0 %v1250, 16
    %v1344 = vpop.permute.xlu0 %1343
    %1345 = vrot.lane.b32.xlu0 %v1251, 16
    %v1346 = vpop.permute.xlu0 %1345
    %1347 = vrot.lane.b32.xlu0 %v1252, 16
    %v1348 = vpop.permute.xlu0 %1347
    %vm1381 = vcmask 162944
    %1382 = vst.msk [vmem:[#allocation3] sm:$0xff] %vm1381, %v1286
    %1383 = vst.msk [vmem:[#allocation3 + $0x8] sm:$0xff] %vm1381, %v1288
    %1384 = vst.msk [vmem:[#allocation3 + $0x10] sm:$0xff] %vm1381, %v1290
    %1385 = vst.msk [vmem:[#allocation3 + $0x18] sm:$0xff] %vm1381, %v1292
    %1386 = vst.msk [vmem:[#allocation3 + $0x20] sm:$0xff] %vm1381, %v1294
    %1387 = vst.msk [vmem:[#allocation3 + $0x28] sm:$0xff] %vm1381, %v1296
    %1388 = vst.msk [vmem:[#allocation3 + $0x30] sm:$0xff] %vm1381, %v1298
    %1389 = vst.msk [vmem:[#allocation3 + $0x38] sm:$0xff] %vm1381, %v1300
    %1390 = vst.msk [vmem:[#allocation3 + $0x40] sm:$0xff] %vm1381, %v1302
    %1391 = vst.msk [vmem:[#allocation3 + $0x48] sm:$0xff] %vm1381, %v1304
    %1392 = vst.msk [vmem:[#allocation3 + $0x50] sm:$0xff] %vm1381, %v1306
    %1393 = vst.msk [vmem:[#allocation3 + $0x58] sm:$0xff] %vm1381, %v1308
    %1394 = vst.msk [vmem:[#allocation3 + $0x60] sm:$0xff] %vm1381, %v1310
    %1395 = vst.msk [vmem:[#allocation3 + $0x68] sm:$0xff] %vm1381, %v1312
    %1396 = vst.msk [vmem:[#allocation3 + $0x70] sm:$0xff] %vm1381, %v1314
    %1397 = vst.msk [vmem:[#allocation3 + $0x78] sm:$0xff] %vm1381, %v1316
    %1398 = vst.msk [vmem:[#allocation3 + $0x80] sm:$0xff] %vm1381, %v1318
    %1399 = vst.msk [vmem:[#allocation3 + $0x88] sm:$0xff] %vm1381, %v1320
    %1400 = vst.msk [vmem:[#allocation3 + $0x90] sm:$0xff] %vm1381, %v1322
    %1401 = vst.msk [vmem:[#allocation3 + $0x98] sm:$0xff] %vm1381, %v1324
    %1402 = vst.msk [vmem:[#allocation3 + $0xa0] sm:$0xff] %vm1381, %v1326
    %1403 = vst.msk [vmem:[#allocation3 + $0xa8] sm:$0xff] %vm1381, %v1328
    %1404 = vst.msk [vmem:[#allocation3 + $0xb0] sm:$0xff] %vm1381, %v1330
    %1405 = vst.msk [vmem:[#allocation3 + $0xb8] sm:$0xff] %vm1381, %v1332
    %1406 = vst.msk [vmem:[#allocation3 + $0xc0] sm:$0xff] %vm1381, %v1334
    %1407 = vst.msk [vmem:[#allocation3 + $0xc8] sm:$0xff] %vm1381, %v1336
    %1408 = vst.msk [vmem:[#allocation3 + $0xd0] sm:$0xff] %vm1381, %v1338
    %1409 = vst.msk [vmem:[#allocation3 + $0xd8] sm:$0xff] %vm1381, %v1340
    %1410 = vst.msk [vmem:[#allocation3 + $0xe0] sm:$0xff] %vm1381, %v1342
    %1411 = vst.msk [vmem:[#allocation3 + $0xe8] sm:$0xff] %vm1381, %v1344
    %1412 = vst.msk [vmem:[#allocation3 + $0xf0] sm:$0xff] %vm1381, %v1346
    %1413 = vst.msk [vmem:[#allocation3 + $0xf8] sm:$0xff] %vm1381, %v1348
    %v1414 = vld [vmem:[%s193 + $0x2] sm:$0xff]
    %v1415 = vld [vmem:[%s193 + $0xa] sm:$0xff]
    %v1416 = vld [vmem:[%s193 + $0x1a] sm:$0xff]
    %v1417 = vld [vmem:[%s193 + $0x22] sm:$0xff]
    %v1418 = vld [vmem:[%s193 + $0x32] sm:$0xff]
    %v1419 = vld [vmem:[%s193 + $0x3a] sm:$0xff]
    %v1420 = vld [vmem:[%s193 + $0x4a] sm:$0xff]
    %v1421 = vld [vmem:[%s193 + $0x52] sm:$0xff]
    %v1422 = vld [vmem:[%s193 + $0x62] sm:$0xff]
    %v1423 = vld [vmem:[%s193 + $0x6a] sm:$0xff]
    %v1424 = vld [vmem:[%s193 + $0x7a] sm:$0xff]
    %v1425 = vld [vmem:[%s193 + $0x82] sm:$0xff]
    %v1426 = vld [vmem:[%s193 + $0x92] sm:$0xff]
    %v1427 = vld [vmem:[%s193 + $0x9a] sm:$0xff]
    %v1428 = vld [vmem:[%s193 + $0xaa] sm:$0xff]
    %v1429 = vld [vmem:[%s193 + $0xb2] sm:$0xff]
    %v1430 = vld [vmem:[%s193 + $0xc2] sm:$0xff]
    %v1431 = vld [vmem:[%s193 + $0xca] sm:$0xff]
    %v1432 = vld [vmem:[%s193 + $0xda] sm:$0xff]
    %v1433 = vld [vmem:[%s193 + $0xe2] sm:$0xff]
    %v1434 = vld [vmem:[%s193 + $0xf2] sm:$0xff]
    %v1435 = vld [vmem:[%s193 + $0xfa] sm:$0xff]
    %v1436 = vld [vmem:[%s193 + $0x10a] sm:$0xff]
    %v1437 = vld [vmem:[%s193 + $0x112] sm:$0xff]
    %v1438 = vld [vmem:[%s193 + $0x122] sm:$0xff]
    %v1439 = vld [vmem:[%s193 + $0x12a] sm:$0xff]
    %v1440 = vld [vmem:[%s193 + $0x13a] sm:$0xff]
    %v1441 = vld [vmem:[%s193 + $0x142] sm:$0xff]
    %v1442 = vld [vmem:[%s193 + $0x152] sm:$0xff]
    %v1443 = vld [vmem:[%s193 + $0x15a] sm:$0xff]
    %v1444 = vld [vmem:[%s193 + $0x16a] sm:$0xff]
    %v1445 = vld [vmem:[%s193 + $0x172] sm:$0xff]
    %v1446 = vld [vmem:[%s193 + $0x1b2] sm:$0xff]
    %v1447 = vld [vmem:[%s193 + $0x1ba] sm:$0xff]
    %v1448 = vld [vmem:[%s193 + $0x1ca] sm:$0xff]
    %v1449 = vld [vmem:[%s193 + $0x1d2] sm:$0xff]
    %v1450 = vld [vmem:[%s193 + $0x1e2] sm:$0xff]
    %v1451 = vld [vmem:[%s193 + $0x1ea] sm:$0xff]
    %v1452 = vld [vmem:[%s193 + $0x1fa] sm:$0xff]
    %v1453 = vld [vmem:[%s193 + $0x202] sm:$0xff]
    %v1454 = vld [vmem:[%s193 + $0x212] sm:$0xff]
    %v1455 = vld [vmem:[%s193 + $0x21a] sm:$0xff]
    %v1456 = vld [vmem:[%s193 + $0x22a] sm:$0xff]
    %v1457 = vld [vmem:[%s193 + $0x232] sm:$0xff]
    %v1458 = vld [vmem:[%s193 + $0x242] sm:$0xff]
    %v1459 = vld [vmem:[%s193 + $0x24a] sm:$0xff]
    %v1460 = vld [vmem:[%s193 + $0x25a] sm:$0xff]
    %v1461 = vld [vmem:[%s193 + $0x262] sm:$0xff]
    %v1462 = vld [vmem:[%s193 + $0x272] sm:$0xff]
    %v1463 = vld [vmem:[%s193 + $0x27a] sm:$0xff]
    %v1464 = vld [vmem:[%s193 + $0x28a] sm:$0xff]
    %v1465 = vld [vmem:[%s193 + $0x292] sm:$0xff]
    %v1466 = vld [vmem:[%s193 + $0x2a2] sm:$0xff]
    %v1467 = vld [vmem:[%s193 + $0x2aa] sm:$0xff]
    %v1468 = vld [vmem:[%s193 + $0x2ba] sm:$0xff]
    %v1469 = vld [vmem:[%s193 + $0x2c2] sm:$0xff]
    %v1470 = vld [vmem:[%s193 + $0x2d2] sm:$0xff]
    %v1471 = vld [vmem:[%s193 + $0x2da] sm:$0xff]
    %v1472 = vld [vmem:[%s193 + $0x2ea] sm:$0xff]
    %v1473 = vld [vmem:[%s193 + $0x2f2] sm:$0xff]
    %v1474 = vld [vmem:[%s193 + $0x302] sm:$0xff]
    %v1475 = vld [vmem:[%s193 + $0x30a] sm:$0xff]
    %v1476 = vld [vmem:[%s193 + $0x31a] sm:$0xff]
    %v1477 = vld [vmem:[%s193 + $0x322] sm:$0xff]
    %v1478 = vpack.c.bf16 %v1415, %v1414
    %v1479 = vpack.c.bf16 %v1417, %v1416
    %v1480 = vpack.c.bf16 %v1419, %v1418
    %v1481 = vpack.c.bf16 %v1421, %v1420
    %v1482 = vpack.c.bf16 %v1423, %v1422
    %v1483 = vpack.c.bf16 %v1425, %v1424
    %v1484 = vpack.c.bf16 %v1427, %v1426
    %v1485 = vpack.c.bf16 %v1429, %v1428
    %v1486 = vpack.c.bf16 %v1431, %v1430
    %v1487 = vpack.c.bf16 %v1433, %v1432
    %v1488 = vpack.c.bf16 %v1435, %v1434
    %v1489 = vpack.c.bf16 %v1437, %v1436
    %v1490 = vpack.c.bf16 %v1439, %v1438
    %v1491 = vpack.c.bf16 %v1441, %v1440
    %v1492 = vpack.c.bf16 %v1443, %v1442
    %v1493 = vpack.c.bf16 %v1445, %v1444
    %v1494 = vpack.c.bf16 %v1447, %v1446
    %v1495 = vpack.c.bf16 %v1449, %v1448
    %v1496 = vpack.c.bf16 %v1451, %v1450
    %v1497 = vpack.c.bf16 %v1453, %v1452
    %v1498 = vpack.c.bf16 %v1455, %v1454
    %v1499 = vpack.c.bf16 %v1457, %v1456
    %v1500 = vpack.c.bf16 %v1459, %v1458
    %v1501 = vpack.c.bf16 %v1461, %v1460
    %v1502 = vpack.c.bf16 %v1463, %v1462
    %v1503 = vpack.c.bf16 %v1465, %v1464
    %v1504 = vpack.c.bf16 %v1467, %v1466
    %v1505 = vpack.c.bf16 %v1469, %v1468
    %v1506 = vpack.c.bf16 %v1471, %v1470
    %v1507 = vpack.c.bf16 %v1473, %v1472
    %v1508 = vpack.c.bf16 %v1475, %v1474
    %v1509 = vpack.c.bf16 %v1477, %v1476
    %1542 = vrot.lane.b32.xlu0 %v1478, 20
    %v1543 = vpop.permute.xlu0 %1542
    %1544 = vrot.lane.b32.xlu0 %v1479, 20
    %v1545 = vpop.permute.xlu0 %1544
    %1546 = vrot.lane.b32.xlu0 %v1480, 20
    %v1547 = vpop.permute.xlu0 %1546
    %1548 = vrot.lane.b32.xlu0 %v1481, 20
    %v1549 = vpop.permute.xlu0 %1548
    %1550 = vrot.lane.b32.xlu0 %v1482, 20
    %v1551 = vpop.permute.xlu0 %1550
    %1552 = vrot.lane.b32.xlu0 %v1483, 20
    %v1553 = vpop.permute.xlu0 %1552
    %1554 = vrot.lane.b32.xlu0 %v1484, 20
    %v1555 = vpop.permute.xlu0 %1554
    %1556 = vrot.lane.b32.xlu0 %v1485, 20
    %v1557 = vpop.permute.xlu0 %1556
    %1558 = vrot.lane.b32.xlu0 %v1486, 20
    %v1559 = vpop.permute.xlu0 %1558
    %1560 = vrot.lane.b32.xlu0 %v1487, 20
    %v1561 = vpop.permute.xlu0 %1560
    %1562 = vrot.lane.b32.xlu0 %v1488, 20
    %v1563 = vpop.permute.xlu0 %1562
    %1564 = vrot.lane.b32.xlu0 %v1489, 20
    %v1565 = vpop.permute.xlu0 %1564
    %1566 = vrot.lane.b32.xlu0 %v1490, 20
    %v1567 = vpop.permute.xlu0 %1566
    %1568 = vrot.lane.b32.xlu0 %v1491, 20
    %v1569 = vpop.permute.xlu0 %1568
    %1570 = vrot.lane.b32.xlu0 %v1492, 20
    %v1571 = vpop.permute.xlu0 %1570
    %1572 = vrot.lane.b32.xlu0 %v1493, 20
    %v1573 = vpop.permute.xlu0 %1572
    %1574 = vrot.lane.b32.xlu0 %v1494, 20
    %v1575 = vpop.permute.xlu0 %1574
    %1576 = vrot.lane.b32.xlu0 %v1495, 20
    %v1577 = vpop.permute.xlu0 %1576
    %1578 = vrot.lane.b32.xlu0 %v1496, 20
    %v1579 = vpop.permute.xlu0 %1578
    %1580 = vrot.lane.b32.xlu0 %v1497, 20
    %v1581 = vpop.permute.xlu0 %1580
    %1582 = vrot.lane.b32.xlu0 %v1498, 20
    %v1583 = vpop.permute.xlu0 %1582
    %1584 = vrot.lane.b32.xlu0 %v1499, 20
    %v1585 = vpop.permute.xlu0 %1584
    %1586 = vrot.lane.b32.xlu0 %v1500, 20
    %v1587 = vpop.permute.xlu0 %1586
    %1588 = vrot.lane.b32.xlu0 %v1501, 20
    %v1589 = vpop.permute.xlu0 %1588
    %1590 = vrot.lane.b32.xlu0 %v1502, 20
    %v1591 = vpop.permute.xlu0 %1590
    %1592 = vrot.lane.b32.xlu0 %v1503, 20
    %v1593 = vpop.permute.xlu0 %1592
    %1594 = vrot.lane.b32.xlu0 %v1504, 20
    %v1595 = vpop.permute.xlu0 %1594
    %1596 = vrot.lane.b32.xlu0 %v1505, 20
    %v1597 = vpop.permute.xlu0 %1596
    %1598 = vrot.lane.b32.xlu0 %v1506, 20
    %v1599 = vpop.permute.xlu0 %1598
    %1600 = vrot.lane.b32.xlu0 %v1507, 20
    %v1601 = vpop.permute.xlu0 %1600
    %1602 = vrot.lane.b32.xlu0 %v1508, 20
    %v1603 = vpop.permute.xlu0 %1602
    %1604 = vrot.lane.b32.xlu0 %v1509, 20
    %v1605 = vpop.permute.xlu0 %1604
    %vm1638 = vcmask 195744
    %1639 = vst.msk [vmem:[#allocation3] sm:$0xff] %vm1638, %v1543
    %1640 = vst.msk [vmem:[#allocation3 + $0x8] sm:$0xff] %vm1638, %v1545
    %1641 = vst.msk [vmem:[#allocation3 + $0x10] sm:$0xff] %vm1638, %v1547
    %1642 = vst.msk [vmem:[#allocation3 + $0x18] sm:$0xff] %vm1638, %v1549
    %1643 = vst.msk [vmem:[#allocation3 + $0x20] sm:$0xff] %vm1638, %v1551
    %1644 = vst.msk [vmem:[#allocation3 + $0x28] sm:$0xff] %vm1638, %v1553
    %1645 = vst.msk [vmem:[#allocation3 + $0x30] sm:$0xff] %vm1638, %v1555
    %1646 = vst.msk [vmem:[#allocation3 + $0x38] sm:$0xff] %vm1638, %v1557
    %1647 = vst.msk [vmem:[#allocation3 + $0x40] sm:$0xff] %vm1638, %v1559
    %1648 = vst.msk [vmem:[#allocation3 + $0x48] sm:$0xff] %vm1638, %v1561
    %1649 = vst.msk [vmem:[#allocation3 + $0x50] sm:$0xff] %vm1638, %v1563
    %1650 = vst.msk [vmem:[#allocation3 + $0x58] sm:$0xff] %vm1638, %v1565
    %1651 = vst.msk [vmem:[#allocation3 + $0x60] sm:$0xff] %vm1638, %v1567
    %1652 = vst.msk [vmem:[#allocation3 + $0x68] sm:$0xff] %vm1638, %v1569
    %1653 = vst.msk [vmem:[#allocation3 + $0x70] sm:$0xff] %vm1638, %v1571
    %1654 = vst.msk [vmem:[#allocation3 + $0x78] sm:$0xff] %vm1638, %v1573
    %1655 = vst.msk [vmem:[#allocation3 + $0x80] sm:$0xff] %vm1638, %v1575
    %1656 = vst.msk [vmem:[#allocation3 + $0x88] sm:$0xff] %vm1638, %v1577
    %1657 = vst.msk [vmem:[#allocation3 + $0x90] sm:$0xff] %vm1638, %v1579
    %1658 = vst.msk [vmem:[#allocation3 + $0x98] sm:$0xff] %vm1638, %v1581
    %1659 = vst.msk [vmem:[#allocation3 + $0xa0] sm:$0xff] %vm1638, %v1583
    %1660 = vst.msk [vmem:[#allocation3 + $0xa8] sm:$0xff] %vm1638, %v1585
    %1661 = vst.msk [vmem:[#allocation3 + $0xb0] sm:$0xff] %vm1638, %v1587
    %1662 = vst.msk [vmem:[#allocation3 + $0xb8] sm:$0xff] %vm1638, %v1589
    %1663 = vst.msk [vmem:[#allocation3 + $0xc0] sm:$0xff] %vm1638, %v1591
    %1664 = vst.msk [vmem:[#allocation3 + $0xc8] sm:$0xff] %vm1638, %v1593
    %1665 = vst.msk [vmem:[#allocation3 + $0xd0] sm:$0xff] %vm1638, %v1595
    %1666 = vst.msk [vmem:[#allocation3 + $0xd8] sm:$0xff] %vm1638, %v1597
    %1667 = vst.msk [vmem:[#allocation3 + $0xe0] sm:$0xff] %vm1638, %v1599
    %1668 = vst.msk [vmem:[#allocation3 + $0xe8] sm:$0xff] %vm1638, %v1601
    %1669 = vst.msk [vmem:[#allocation3 + $0xf0] sm:$0xff] %vm1638, %v1603
    %1670 = vst.msk [vmem:[#allocation3 + $0xf8] sm:$0xff] %vm1638, %v1605
    %s1671 = scalar_lea.vmem [#allocation2], 48
    %v1672 = vld [vmem:[%s1671] sm:$0xff]
    %v1673 = vld [vmem:[%s1671 + $0x8] sm:$0xff]
    %v1674 = vld [vmem:[%s1671 + $0x18] sm:$0xff]
    %v1675 = vld [vmem:[%s1671 + $0x20] sm:$0xff]
    %v1676 = vld [vmem:[%s1671 + $0x30] sm:$0xff]
    %v1677 = vld [vmem:[%s1671 + $0x38] sm:$0xff]
    %v1678 = vld [vmem:[%s1671 + $0x48] sm:$0xff]
    %v1679 = vld [vmem:[%s1671 + $0x50] sm:$0xff]
    %v1680 = vld [vmem:[%s1671 + $0x60] sm:$0xff]
    %v1681 = vld [vmem:[%s1671 + $0x68] sm:$0xff]
    %v1682 = vld [vmem:[%s1671 + $0x78] sm:$0xff]
    %v1683 = vld [vmem:[%s1671 + $0x80] sm:$0xff]
    %v1684 = vld [vmem:[%s1671 + $0x90] sm:$0xff]
    %v1685 = vld [vmem:[%s1671 + $0x98] sm:$0xff]
    %v1686 = vld [vmem:[%s1671 + $0xa8] sm:$0xff]
    %v1687 = vld [vmem:[%s1671 + $0xb0] sm:$0xff]
    %v1688 = vld [vmem:[%s1671 + $0xc0] sm:$0xff]
    %v1689 = vld [vmem:[%s1671 + $0xc8] sm:$0xff]
    %v1690 = vld [vmem:[%s1671 + $0xd8] sm:$0xff]
    %v1691 = vld [vmem:[%s1671 + $0xe0] sm:$0xff]
    %v1692 = vld [vmem:[%s1671 + $0xf0] sm:$0xff]
    %v1693 = vld [vmem:[%s1671 + $0xf8] sm:$0xff]
    %v1694 = vld [vmem:[%s1671 + $0x108] sm:$0xff]
    %v1695 = vld [vmem:[%s1671 + $0x110] sm:$0xff]
    %v1696 = vld [vmem:[%s1671 + $0x120] sm:$0xff]
    %v1697 = vld [vmem:[%s1671 + $0x128] sm:$0xff]
    %v1698 = vld [vmem:[%s1671 + $0x138] sm:$0xff]
    %v1699 = vld [vmem:[%s1671 + $0x140] sm:$0xff]
    %v1700 = vld [vmem:[%s1671 + $0x150] sm:$0xff]
    %v1701 = vld [vmem:[%s1671 + $0x158] sm:$0xff]
    %v1702 = vld [vmem:[%s1671 + $0x168] sm:$0xff]
    %v1703 = vld [vmem:[%s1671 + $0x170] sm:$0xff]
    %v1704 = vld [vmem:[%s1671 + $0x1b0] sm:$0xff]
    %v1705 = vld [vmem:[%s1671 + $0x1b8] sm:$0xff]
    %v1706 = vld [vmem:[%s1671 + $0x1c8] sm:$0xff]
    %v1707 = vld [vmem:[%s1671 + $0x1d0] sm:$0xff]
    %v1708 = vld [vmem:[%s1671 + $0x1e0] sm:$0xff]
    %v1709 = vld [vmem:[%s1671 + $0x1e8] sm:$0xff]
    %v1710 = vld [vmem:[%s1671 + $0x1f8] sm:$0xff]
    %v1711 = vld [vmem:[%s1671 + $0x200] sm:$0xff]
    %v1712 = vld [vmem:[%s1671 + $0x210] sm:$0xff]
    %v1713 = vld [vmem:[%s1671 + $0x218] sm:$0xff]
    %v1714 = vld [vmem:[%s1671 + $0x228] sm:$0xff]
    %v1715 = vld [vmem:[%s1671 + $0x230] sm:$0xff]
    %v1716 = vld [vmem:[%s1671 + $0x240] sm:$0xff]
    %v1717 = vld [vmem:[%s1671 + $0x248] sm:$0xff]
    %v1718 = vld [vmem:[%s1671 + $0x258] sm:$0xff]
    %v1719 = vld [vmem:[%s1671 + $0x260] sm:$0xff]
    %v1720 = vld [vmem:[%s1671 + $0x270] sm:$0xff]
    %v1721 = vld [vmem:[%s1671 + $0x278] sm:$0xff]
    %v1722 = vld [vmem:[%s1671 + $0x288] sm:$0xff]
    %v1723 = vld [vmem:[%s1671 + $0x290] sm:$0xff]
    %v1724 = vld [vmem:[%s1671 + $0x2a0] sm:$0xff]
    %v1725 = vld [vmem:[%s1671 + $0x2a8] sm:$0xff]
    %v1726 = vld [vmem:[%s1671 + $0x2b8] sm:$0xff]
    %v1727 = vld [vmem:[%s1671 + $0x2c0] sm:$0xff]
    %v1728 = vld [vmem:[%s1671 + $0x2d0] sm:$0xff]
    %v1729 = vld [vmem:[%s1671 + $0x2d8] sm:$0xff]
    %v1730 = vld [vmem:[%s1671 + $0x2e8] sm:$0xff]
    %v1731 = vld [vmem:[%s1671 + $0x2f0] sm:$0xff]
    %v1732 = vld [vmem:[%s1671 + $0x300] sm:$0xff]
    %v1733 = vld [vmem:[%s1671 + $0x308] sm:$0xff]
    %v1734 = vld [vmem:[%s1671 + $0x318] sm:$0xff]
    %v1735 = vld [vmem:[%s1671 + $0x320] sm:$0xff]
    %v1736 = vpack.c.bf16 %v1673, %v1672
    %v1737 = vpack.c.bf16 %v1675, %v1674
    %v1738 = vpack.c.bf16 %v1677, %v1676
    %v1739 = vpack.c.bf16 %v1679, %v1678
    %v1740 = vpack.c.bf16 %v1681, %v1680
    %v1741 = vpack.c.bf16 %v1683, %v1682
    %v1742 = vpack.c.bf16 %v1685, %v1684
    %v1743 = vpack.c.bf16 %v1687, %v1686
    %v1744 = vpack.c.bf16 %v1689, %v1688
    %v1745 = vpack.c.bf16 %v1691, %v1690
    %v1746 = vpack.c.bf16 %v1693, %v1692
    %v1747 = vpack.c.bf16 %v1695, %v1694
    %v1748 = vpack.c.bf16 %v1697, %v1696
    %v1749 = vpack.c.bf16 %v1699, %v1698
    %v1750 = vpack.c.bf16 %v1701, %v1700
    %v1751 = vpack.c.bf16 %v1703, %v1702
    %v1752 = vpack.c.bf16 %v1705, %v1704
    %v1753 = vpack.c.bf16 %v1707, %v1706
    %v1754 = vpack.c.bf16 %v1709, %v1708
    %v1755 = vpack.c.bf16 %v1711, %v1710
    %v1756 = vpack.c.bf16 %v1713, %v1712
    %v1757 = vpack.c.bf16 %v1715, %v1714
    %v1758 = vpack.c.bf16 %v1717, %v1716
    %v1759 = vpack.c.bf16 %v1719, %v1718
    %v1760 = vpack.c.bf16 %v1721, %v1720
    %v1761 = vpack.c.bf16 %v1723, %v1722
    %v1762 = vpack.c.bf16 %v1725, %v1724
    %v1763 = vpack.c.bf16 %v1727, %v1726
    %v1764 = vpack.c.bf16 %v1729, %v1728
    %v1765 = vpack.c.bf16 %v1731, %v1730
    %v1766 = vpack.c.bf16 %v1733, %v1732
    %v1767 = vpack.c.bf16 %v1735, %v1734
    %1800 = vrot.lane.b32.xlu0 %v1736, 24
    %v1801 = vpop.permute.xlu0 %1800
    %1802 = vrot.lane.b32.xlu0 %v1737, 24
    %v1803 = vpop.permute.xlu0 %1802
    %1804 = vrot.lane.b32.xlu0 %v1738, 24
    %v1805 = vpop.permute.xlu0 %1804
    %1806 = vrot.lane.b32.xlu0 %v1739, 24
    %v1807 = vpop.permute.xlu0 %1806
    %1808 = vrot.lane.b32.xlu0 %v1740, 24
    %v1809 = vpop.permute.xlu0 %1808
    %1810 = vrot.lane.b32.xlu0 %v1741, 24
    %v1811 = vpop.permute.xlu0 %1810
    %1812 = vrot.lane.b32.xlu0 %v1742, 24
    %v1813 = vpop.permute.xlu0 %1812
    %1814 = vrot.lane.b32.xlu0 %v1743, 24
    %v1815 = vpop.permute.xlu0 %1814
    %1816 = vrot.lane.b32.xlu0 %v1744, 24
    %v1817 = vpop.permute.xlu0 %1816
    %1818 = vrot.lane.b32.xlu0 %v1745, 24
    %v1819 = vpop.permute.xlu0 %1818
    %1820 = vrot.lane.b32.xlu0 %v1746, 24
    %v1821 = vpop.permute.xlu0 %1820
    %1822 = vrot.lane.b32.xlu0 %v1747, 24
    %v1823 = vpop.permute.xlu0 %1822
    %1824 = vrot.lane.b32.xlu0 %v1748, 24
    %v1825 = vpop.permute.xlu0 %1824
    %1826 = vrot.lane.b32.xlu0 %v1749, 24
    %v1827 = vpop.permute.xlu0 %1826
    %1828 = vrot.lane.b32.xlu0 %v1750, 24
    %v1829 = vpop.permute.xlu0 %1828
    %1830 = vrot.lane.b32.xlu0 %v1751, 24
    %v1831 = vpop.permute.xlu0 %1830
    %1832 = vrot.lane.b32.xlu0 %v1752, 24
    %v1833 = vpop.permute.xlu0 %1832
    %1834 = vrot.lane.b32.xlu0 %v1753, 24
    %v1835 = vpop.permute.xlu0 %1834
    %1836 = vrot.lane.b32.xlu0 %v1754, 24
    %v1837 = vpop.permute.xlu0 %1836
    %1838 = vrot.lane.b32.xlu0 %v1755, 24
    %v1839 = vpop.permute.xlu0 %1838
    %1840 = vrot.lane.b32.xlu0 %v1756, 24
    %v1841 = vpop.permute.xlu0 %1840
    %1842 = vrot.lane.b32.xlu0 %v1757, 24
    %v1843 = vpop.permute.xlu0 %1842
    %1844 = vrot.lane.b32.xlu0 %v1758, 24
    %v1845 = vpop.permute.xlu0 %1844
    %1846 = vrot.lane.b32.xlu0 %v1759, 24
    %v1847 = vpop.permute.xlu0 %1846
    %1848 = vrot.lane.b32.xlu0 %v1760, 24
    %v1849 = vpop.permute.xlu0 %1848
    %1850 = vrot.lane.b32.xlu0 %v1761, 24
    %v1851 = vpop.permute.xlu0 %1850
    %1852 = vrot.lane.b32.xlu0 %v1762, 24
    %v1853 = vpop.permute.xlu0 %1852
    %1854 = vrot.lane.b32.xlu0 %v1763, 24
    %v1855 = vpop.permute.xlu0 %1854
    %1856 = vrot.lane.b32.xlu0 %v1764, 24
    %v1857 = vpop.permute.xlu0 %1856
    %1858 = vrot.lane.b32.xlu0 %v1765, 24
    %v1859 = vpop.permute.xlu0 %1858
    %1860 = vrot.lane.b32.xlu0 %v1766, 24
    %v1861 = vpop.permute.xlu0 %1860
    %1862 = vrot.lane.b32.xlu0 %v1767, 24
    %v1863 = vpop.permute.xlu0 %1862
    %vm1896 = vcmask 228544
    %1897 = vst.msk [vmem:[#allocation3] sm:$0xff] %vm1896, %v1801
    %1898 = vst.msk [vmem:[#allocation3 + $0x8] sm:$0xff] %vm1896, %v1803
    %1899 = vst.msk [vmem:[#allocation3 + $0x10] sm:$0xff] %vm1896, %v1805
    %1900 = vst.msk [vmem:[#allocation3 + $0x18] sm:$0xff] %vm1896, %v1807
    %1901 = vst.msk [vmem:[#allocation3 + $0x20] sm:$0xff] %vm1896, %v1809
    %1902 = vst.msk [vmem:[#allocation3 + $0x28] sm:$0xff] %vm1896, %v1811
    %1903 = vst.msk [vmem:[#allocation3 + $0x30] sm:$0xff] %vm1896, %v1813
    %1904 = vst.msk [vmem:[#allocation3 + $0x38] sm:$0xff] %vm1896, %v1815
    %1905 = vst.msk [vmem:[#allocation3 + $0x40] sm:$0xff] %vm1896, %v1817
    %1906 = vst.msk [vmem:[#allocation3 + $0x48] sm:$0xff] %vm1896, %v1819
    %1907 = vst.msk [vmem:[#allocation3 + $0x50] sm:$0xff] %vm1896, %v1821
    %1908 = vst.msk [vmem:[#allocation3 + $0x58] sm:$0xff] %vm1896, %v1823
    %1909 = vst.msk [vmem:[#allocation3 + $0x60] sm:$0xff] %vm1896, %v1825
    %1910 = vst.msk [vmem:[#allocation3 + $0x68] sm:$0xff] %vm1896, %v1827
    %1911 = vst.msk [vmem:[#allocation3 + $0x70] sm:$0xff] %vm1896, %v1829
    %1912 = vst.msk [vmem:[#allocation3 + $0x78] sm:$0xff] %vm1896, %v1831
    %1913 = vst.msk [vmem:[#allocation3 + $0x80] sm:$0xff] %vm1896, %v1833
    %1914 = vst.msk [vmem:[#allocation3 + $0x88] sm:$0xff] %vm1896, %v1835
    %1915 = vst.msk [vmem:[#allocation3 + $0x90] sm:$0xff] %vm1896, %v1837
    %1916 = vst.msk [vmem:[#allocation3 + $0x98] sm:$0xff] %vm1896, %v1839
    %1917 = vst.msk [vmem:[#allocation3 + $0xa0] sm:$0xff] %vm1896, %v1841
    %1918 = vst.msk [vmem:[#allocation3 + $0xa8] sm:$0xff] %vm1896, %v1843
    %1919 = vst.msk [vmem:[#allocation3 + $0xb0] sm:$0xff] %vm1896, %v1845
    %1920 = vst.msk [vmem:[#allocation3 + $0xb8] sm:$0xff] %vm1896, %v1847
    %1921 = vst.msk [vmem:[#allocation3 + $0xc0] sm:$0xff] %vm1896, %v1849
    %1922 = vst.msk [vmem:[#allocation3 + $0xc8] sm:$0xff] %vm1896, %v1851
    %1923 = vst.msk [vmem:[#allocation3 + $0xd0] sm:$0xff] %vm1896, %v1853
    %1924 = vst.msk [vmem:[#allocation3 + $0xd8] sm:$0xff] %vm1896, %v1855
    %1925 = vst.msk [vmem:[#allocation3 + $0xe0] sm:$0xff] %vm1896, %v1857
    %1926 = vst.msk [vmem:[#allocation3 + $0xe8] sm:$0xff] %vm1896, %v1859
    %1927 = vst.msk [vmem:[#allocation3 + $0xf0] sm:$0xff] %vm1896, %v1861
    %1928 = vst.msk [vmem:[#allocation3 + $0xf8] sm:$0xff] %vm1896, %v1863
    %v1929 = vld [vmem:[%s1671 + $0x1] sm:$0xff]
    %v1930 = vld [vmem:[%s1671 + $0x9] sm:$0xff]
    %v1931 = vld [vmem:[%s1671 + $0x19] sm:$0xff]
    %v1932 = vld [vmem:[%s1671 + $0x21] sm:$0xff]
    %v1933 = vld [vmem:[%s1671 + $0x31] sm:$0xff]
    %v1934 = vld [vmem:[%s1671 + $0x39] sm:$0xff]
    %v1935 = vld [vmem:[%s1671 + $0x49] sm:$0xff]
    %v1936 = vld [vmem:[%s1671 + $0x51] sm:$0xff]
    %v1937 = vld [vmem:[%s1671 + $0x61] sm:$0xff]
    %v1938 = vld [vmem:[%s1671 + $0x69] sm:$0xff]
    %v1939 = vld [vmem:[%s1671 + $0x79] sm:$0xff]
    %v1940 = vld [vmem:[%s1671 + $0x81] sm:$0xff]
    %v1941 = vld [vmem:[%s1671 + $0x91] sm:$0xff]
    %v1942 = vld [vmem:[%s1671 + $0x99] sm:$0xff]
    %v1943 = vld [vmem:[%s1671 + $0xa9] sm:$0xff]
    %v1944 = vld [vmem:[%s1671 + $0xb1] sm:$0xff]
    %v1945 = vld [vmem:[%s1671 + $0xc1] sm:$0xff]
    %v1946 = vld [vmem:[%s1671 + $0xc9] sm:$0xff]
    %v1947 = vld [vmem:[%s1671 + $0xd9] sm:$0xff]
    %v1948 = vld [vmem:[%s1671 + $0xe1] sm:$0xff]
    %v1949 = vld [vmem:[%s1671 + $0xf1] sm:$0xff]
    %v1950 = vld [vmem:[%s1671 + $0xf9] sm:$0xff]
    %v1951 = vld [vmem:[%s1671 + $0x109] sm:$0xff]
    %v1952 = vld [vmem:[%s1671 + $0x111] sm:$0xff]
    %v1953 = vld [vmem:[%s1671 + $0x121] sm:$0xff]
    %v1954 = vld [vmem:[%s1671 + $0x129] sm:$0xff]
    %v1955 = vld [vmem:[%s1671 + $0x139] sm:$0xff]
    %v1956 = vld [vmem:[%s1671 + $0x141] sm:$0xff]
    %v1957 = vld [vmem:[%s1671 + $0x151] sm:$0xff]
    %v1958 = vld [vmem:[%s1671 + $0x159] sm:$0xff]
    %v1959 = vld [vmem:[%s1671 + $0x169] sm:$0xff]
    %v1960 = vld [vmem:[%s1671 + $0x171] sm:$0xff]
    %v1961 = vld [vmem:[%s1671 + $0x1b1] sm:$0xff]
    %v1962 = vld [vmem:[%s1671 + $0x1b9] sm:$0xff]
    %v1963 = vld [vmem:[%s1671 + $0x1c9] sm:$0xff]
    %v1964 = vld [vmem:[%s1671 + $0x1d1] sm:$0xff]
    %v1965 = vld [vmem:[%s1671 + $0x1e1] sm:$0xff]
    %v1966 = vld [vmem:[%s1671 + $0x1e9] sm:$0xff]
    %v1967 = vld [vmem:[%s1671 + $0x1f9] sm:$0xff]
    %v1968 = vld [vmem:[%s1671 + $0x201] sm:$0xff]
    %v1969 = vld [vmem:[%s1671 + $0x211] sm:$0xff]
    %v1970 = vld [vmem:[%s1671 + $0x219] sm:$0xff]
    %v1971 = vld [vmem:[%s1671 + $0x229] sm:$0xff]
    %v1972 = vld [vmem:[%s1671 + $0x231] sm:$0xff]
    %v1973 = vld [vmem:[%s1671 + $0x241] sm:$0xff]
    %v1974 = vld [vmem:[%s1671 + $0x249] sm:$0xff]
    %v1975 = vld [vmem:[%s1671 + $0x259] sm:$0xff]
    %v1976 = vld [vmem:[%s1671 + $0x261] sm:$0xff]
    %v1977 = vld [vmem:[%s1671 + $0x271] sm:$0xff]
    %v1978 = vld [vmem:[%s1671 + $0x279] sm:$0xff]
    %v1979 = vld [vmem:[%s1671 + $0x289] sm:$0xff]
    %v1980 = vld [vmem:[%s1671 + $0x291] sm:$0xff]
    %v1981 = vld [vmem:[%s1671 + $0x2a1] sm:$0xff]
    %v1982 = vld [vmem:[%s1671 + $0x2a9] sm:$0xff]
    %v1983 = vld [vmem:[%s1671 + $0x2b9] sm:$0xff]
    %v1984 = vld [vmem:[%s1671 + $0x2c1] sm:$0xff]
    %v1985 = vld [vmem:[%s1671 + $0x2d1] sm:$0xff]
    %v1986 = vld [vmem:[%s1671 + $0x2d9] sm:$0xff]
    %v1987 = vld [vmem:[%s1671 + $0x2e9] sm:$0xff]
    %v1988 = vld [vmem:[%s1671 + $0x2f1] sm:$0xff]
    %v1989 = vld [vmem:[%s1671 + $0x301] sm:$0xff]
    %v1990 = vld [vmem:[%s1671 + $0x309] sm:$0xff]
    %v1991 = vld [vmem:[%s1671 + $0x319] sm:$0xff]
    %v1992 = vld [vmem:[%s1671 + $0x321] sm:$0xff]
    %v1993 = vpack.c.bf16 %v1930, %v1929
    %v1994 = vpack.c.bf16 %v1932, %v1931
    %v1995 = vpack.c.bf16 %v1934, %v1933
    %v1996 = vpack.c.bf16 %v1936, %v1935
    %v1997 = vpack.c.bf16 %v1938, %v1937
    %v1998 = vpack.c.bf16 %v1940, %v1939
    %v1999 = vpack.c.bf16 %v1942, %v1941
    %v2000 = vpack.c.bf16 %v1944, %v1943
    %v2001 = vpack.c.bf16 %v1946, %v1945
    %v2002 = vpack.c.bf16 %v1948, %v1947
    %v2003 = vpack.c.bf16 %v1950, %v1949
    %v2004 = vpack.c.bf16 %v1952, %v1951
    %v2005 = vpack.c.bf16 %v1954, %v1953
    %v2006 = vpack.c.bf16 %v1956, %v1955
    %v2007 = vpack.c.bf16 %v1958, %v1957
    %v2008 = vpack.c.bf16 %v1960, %v1959
    %v2009 = vpack.c.bf16 %v1962, %v1961
    %v2010 = vpack.c.bf16 %v1964, %v1963
    %v2011 = vpack.c.bf16 %v1966, %v1965
    %v2012 = vpack.c.bf16 %v1968, %v1967
    %v2013 = vpack.c.bf16 %v1970, %v1969
    %v2014 = vpack.c.bf16 %v1972, %v1971
    %v2015 = vpack.c.bf16 %v1974, %v1973
    %v2016 = vpack.c.bf16 %v1976, %v1975
    %v2017 = vpack.c.bf16 %v1978, %v1977
    %v2018 = vpack.c.bf16 %v1980, %v1979
    %v2019 = vpack.c.bf16 %v1982, %v1981
    %v2020 = vpack.c.bf16 %v1984, %v1983
    %v2021 = vpack.c.bf16 %v1986, %v1985
    %v2022 = vpack.c.bf16 %v1988, %v1987
    %v2023 = vpack.c.bf16 %v1990, %v1989
    %v2024 = vpack.c.bf16 %v1992, %v1991
    %2057 = vrot.lane.b32.xlu0 %v1993, 28
    %v2058 = vpop.permute.xlu0 %2057
    %2059 = vrot.lane.b32.xlu0 %v1994, 28
    %v2060 = vpop.permute.xlu0 %2059
    %2061 = vrot.lane.b32.xlu0 %v1995, 28
    %v2062 = vpop.permute.xlu0 %2061
    %2063 = vrot.lane.b32.xlu0 %v1996, 28
    %v2064 = vpop.permute.xlu0 %2063
    %2065 = vrot.lane.b32.xlu0 %v1997, 28
    %v2066 = vpop.permute.xlu0 %2065
    %2067 = vrot.lane.b32.xlu0 %v1998, 28
    %v2068 = vpop.permute.xlu0 %2067
    %2069 = vrot.lane.b32.xlu0 %v1999, 28
    %v2070 = vpop.permute.xlu0 %2069
    %2071 = vrot.lane.b32.xlu0 %v2000, 28
    %v2072 = vpop.permute.xlu0 %2071
    %2073 = vrot.lane.b32.xlu0 %v2001, 28
    %v2074 = vpop.permute.xlu0 %2073
    %2075 = vrot.lane.b32.xlu0 %v2002, 28
    %v2076 = vpop.permute.xlu0 %2075
    %2077 = vrot.lane.b32.xlu0 %v2003, 28
    %v2078 = vpop.permute.xlu0 %2077
    %2079 = vrot.lane.b32.xlu0 %v2004, 28
    %v2080 = vpop.permute.xlu0 %2079
    %2081 = vrot.lane.b32.xlu0 %v2005, 28
    %v2082 = vpop.permute.xlu0 %2081
    %2083 = vrot.lane.b32.xlu0 %v2006, 28
    %v2084 = vpop.permute.xlu0 %2083
    %2085 = vrot.lane.b32.xlu0 %v2007, 28
    %v2086 = vpop.permute.xlu0 %2085
    %2087 = vrot.lane.b32.xlu0 %v2008, 28
    %v2088 = vpop.permute.xlu0 %2087
    %2089 = vrot.lane.b32.xlu0 %v2009, 28
    %v2090 = vpop.permute.xlu0 %2089
    %2091 = vrot.lane.b32.xlu0 %v2010, 28
    %v2092 = vpop.permute.xlu0 %2091
    %2093 = vrot.lane.b32.xlu0 %v2011, 28
    %v2094 = vpop.permute.xlu0 %2093
    %2095 = vrot.lane.b32.xlu0 %v2012, 28
    %v2096 = vpop.permute.xlu0 %2095
    %2097 = vrot.lane.b32.xlu0 %v2013, 28
    %v2098 = vpop.permute.xlu0 %2097
    %2099 = vrot.lane.b32.xlu0 %v2014, 28
    %v2100 = vpop.permute.xlu0 %2099
    %2101 = vrot.lane.b32.xlu0 %v2015, 28
    %v2102 = vpop.permute.xlu0 %2101
    %2103 = vrot.lane.b32.xlu0 %v2016, 28
    %v2104 = vpop.permute.xlu0 %2103
    %2105 = vrot.lane.b32.xlu0 %v2017, 28
    %v2106 = vpop.permute.xlu0 %2105
    %2107 = vrot.lane.b32.xlu0 %v2018, 28
    %v2108 = vpop.permute.xlu0 %2107
    %2109 = vrot.lane.b32.xlu0 %v2019, 28
    %v2110 = vpop.permute.xlu0 %2109
    %2111 = vrot.lane.b32.xlu0 %v2020, 28
    %v2112 = vpop.permute.xlu0 %2111
    %2113 = vrot.lane.b32.xlu0 %v2021, 28
    %v2114 = vpop.permute.xlu0 %2113
    %2115 = vrot.lane.b32.xlu0 %v2022, 28
    %v2116 = vpop.permute.xlu0 %2115
    %2117 = vrot.lane.b32.xlu0 %v2023, 28
    %v2118 = vpop.permute.xlu0 %2117
    %2119 = vrot.lane.b32.xlu0 %v2024, 28
    %v2120 = vpop.permute.xlu0 %2119
    %vm2153 = vcmask 261344
    %2154 = vst.msk [vmem:[#allocation3] sm:$0xff] %vm2153, %v2058
    %2155 = vst.msk [vmem:[#allocation3 + $0x8] sm:$0xff] %vm2153, %v2060
    %2156 = vst.msk [vmem:[#allocation3 + $0x10] sm:$0xff] %vm2153, %v2062
    %2157 = vst.msk [vmem:[#allocation3 + $0x18] sm:$0xff] %vm2153, %v2064
    %2158 = vst.msk [vmem:[#allocation3 + $0x20] sm:$0xff] %vm2153, %v2066
    %2159 = vst.msk [vmem:[#allocation3 + $0x28] sm:$0xff] %vm2153, %v2068
    %2160 = vst.msk [vmem:[#allocation3 + $0x30] sm:$0xff] %vm2153, %v2070
    %2161 = vst.msk [vmem:[#allocation3 + $0x38] sm:$0xff] %vm2153, %v2072
    %2162 = vst.msk [vmem:[#allocation3 + $0x40] sm:$0xff] %vm2153, %v2074
    %2163 = vst.msk [vmem:[#allocation3 + $0x48] sm:$0xff] %vm2153, %v2076
    %2164 = vst.msk [vmem:[#allocation3 + $0x50] sm:$0xff] %vm2153, %v2078
    %2165 = vst.msk [vmem:[#allocation3 + $0x58] sm:$0xff] %vm2153, %v2080
    %2166 = vst.msk [vmem:[#allocation3 + $0x60] sm:$0xff] %vm2153, %v2082
    %2167 = vst.msk [vmem:[#allocation3 + $0x68] sm:$0xff] %vm2153, %v2084
    %2168 = vst.msk [vmem:[#allocation3 + $0x70] sm:$0xff] %vm2153, %v2086
    %2169 = vst.msk [vmem:[#allocation3 + $0x78] sm:$0xff] %vm2153, %v2088
    %2170 = vst.msk [vmem:[#allocation3 + $0x80] sm:$0xff] %vm2153, %v2090
    %2171 = vst.msk [vmem:[#allocation3 + $0x88] sm:$0xff] %vm2153, %v2092
    %2172 = vst.msk [vmem:[#allocation3 + $0x90] sm:$0xff] %vm2153, %v2094
    %2173 = vst.msk [vmem:[#allocation3 + $0x98] sm:$0xff] %vm2153, %v2096
    %2174 = vst.msk [vmem:[#allocation3 + $0xa0] sm:$0xff] %vm2153, %v2098
    %2175 = vst.msk [vmem:[#allocation3 + $0xa8] sm:$0xff] %vm2153, %v2100
    %2176 = vst.msk [vmem:[#allocation3 + $0xb0] sm:$0xff] %vm2153, %v2102
    %2177 = vst.msk [vmem:[#allocation3 + $0xb8] sm:$0xff] %vm2153, %v2104
    %2178 = vst.msk [vmem:[#allocation3 + $0xc0] sm:$0xff] %vm2153, %v2106
    %2179 = vst.msk [vmem:[#allocation3 + $0xc8] sm:$0xff] %vm2153, %v2108
    %2180 = vst.msk [vmem:[#allocation3 + $0xd0] sm:$0xff] %vm2153, %v2110
    %2181 = vst.msk [vmem:[#allocation3 + $0xd8] sm:$0xff] %vm2153, %v2112
    %2182 = vst.msk [vmem:[#allocation3 + $0xe0] sm:$0xff] %vm2153, %v2114
    %2183 = vst.msk [vmem:[#allocation3 + $0xe8] sm:$0xff] %vm2153, %v2116
    %2184 = vst.msk [vmem:[#allocation3 + $0xf0] sm:$0xff] %vm2153, %v2118
    %2185 = vst.msk [vmem:[#allocation3 + $0xf8] sm:$0xff] %vm2153, %v2120
    %v2186 = vld [vmem:[%s1671 + $0x2] sm:$0xff]
    %v2187 = vld [vmem:[%s1671 + $0xa] sm:$0xff]
    %v2188 = vld [vmem:[%s1671 + $0x1a] sm:$0xff]
    %v2189 = vld [vmem:[%s1671 + $0x22] sm:$0xff]
    %v2190 = vld [vmem:[%s1671 + $0x32] sm:$0xff]
    %v2191 = vld [vmem:[%s1671 + $0x3a] sm:$0xff]
    %v2192 = vld [vmem:[%s1671 + $0x4a] sm:$0xff]
    %v2193 = vld [vmem:[%s1671 + $0x52] sm:$0xff]
    %v2194 = vld [vmem:[%s1671 + $0x62] sm:$0xff]
    %v2195 = vld [vmem:[%s1671 + $0x6a] sm:$0xff]
    %v2196 = vld [vmem:[%s1671 + $0x7a] sm:$0xff]
    %v2197 = vld [vmem:[%s1671 + $0x82] sm:$0xff]
    %v2198 = vld [vmem:[%s1671 + $0x92] sm:$0xff]
    %v2199 = vld [vmem:[%s1671 + $0x9a] sm:$0xff]
    %v2200 = vld [vmem:[%s1671 + $0xaa] sm:$0xff]
    %v2201 = vld [vmem:[%s1671 + $0xb2] sm:$0xff]
    %v2202 = vld [vmem:[%s1671 + $0xc2] sm:$0xff]
    %v2203 = vld [vmem:[%s1671 + $0xca] sm:$0xff]
    %v2204 = vld [vmem:[%s1671 + $0xda] sm:$0xff]
    %v2205 = vld [vmem:[%s1671 + $0xe2] sm:$0xff]
    %v2206 = vld [vmem:[%s1671 + $0xf2] sm:$0xff]
    %v2207 = vld [vmem:[%s1671 + $0xfa] sm:$0xff]
    %v2208 = vld [vmem:[%s1671 + $0x10a] sm:$0xff]
    %v2209 = vld [vmem:[%s1671 + $0x112] sm:$0xff]
    %v2210 = vld [vmem:[%s1671 + $0x122] sm:$0xff]
    %v2211 = vld [vmem:[%s1671 + $0x12a] sm:$0xff]
    %v2212 = vld [vmem:[%s1671 + $0x13a] sm:$0xff]
    %v2213 = vld [vmem:[%s1671 + $0x142] sm:$0xff]
    %v2214 = vld [vmem:[%s1671 + $0x152] sm:$0xff]
    %v2215 = vld [vmem:[%s1671 + $0x15a] sm:$0xff]
    %v2216 = vld [vmem:[%s1671 + $0x16a] sm:$0xff]
    %v2217 = vld [vmem:[%s1671 + $0x172] sm:$0xff]
    %v2218 = vld [vmem:[%s1671 + $0x1b2] sm:$0xff]
    %v2219 = vld [vmem:[%s1671 + $0x1ba] sm:$0xff]
    %v2220 = vld [vmem:[%s1671 + $0x1ca] sm:$0xff]
    %v2221 = vld [vmem:[%s1671 + $0x1d2] sm:$0xff]
    %v2222 = vld [vmem:[%s1671 + $0x1e2] sm:$0xff]
    %v2223 = vld [vmem:[%s1671 + $0x1ea] sm:$0xff]
    %v2224 = vld [vmem:[%s1671 + $0x1fa] sm:$0xff]
    %v2225 = vld [vmem:[%s1671 + $0x202] sm:$0xff]
    %v2226 = vld [vmem:[%s1671 + $0x212] sm:$0xff]
    %v2227 = vld [vmem:[%s1671 + $0x21a] sm:$0xff]
    %v2228 = vld [vmem:[%s1671 + $0x22a] sm:$0xff]
    %v2229 = vld [vmem:[%s1671 + $0x232] sm:$0xff]
    %v2230 = vld [vmem:[%s1671 + $0x242] sm:$0xff]
    %v2231 = vld [vmem:[%s1671 + $0x24a] sm:$0xff]
    %v2232 = vld [vmem:[%s1671 + $0x25a] sm:$0xff]
    %v2233 = vld [vmem:[%s1671 + $0x262] sm:$0xff]
    %v2234 = vld [vmem:[%s1671 + $0x272] sm:$0xff]
    %v2235 = vld [vmem:[%s1671 + $0x27a] sm:$0xff]
    %v2236 = vld [vmem:[%s1671 + $0x28a] sm:$0xff]
    %v2237 = vld [vmem:[%s1671 + $0x292] sm:$0xff]
    %v2238 = vld [vmem:[%s1671 + $0x2a2] sm:$0xff]
    %v2239 = vld [vmem:[%s1671 + $0x2aa] sm:$0xff]
    %v2240 = vld [vmem:[%s1671 + $0x2ba] sm:$0xff]
    %v2241 = vld [vmem:[%s1671 + $0x2c2] sm:$0xff]
    %v2242 = vld [vmem:[%s1671 + $0x2d2] sm:$0xff]
    %v2243 = vld [vmem:[%s1671 + $0x2da] sm:$0xff]
    %v2244 = vld [vmem:[%s1671 + $0x2ea] sm:$0xff]
    %v2245 = vld [vmem:[%s1671 + $0x2f2] sm:$0xff]
    %v2246 = vld [vmem:[%s1671 + $0x302] sm:$0xff]
    %v2247 = vld [vmem:[%s1671 + $0x30a] sm:$0xff]
    %v2248 = vld [vmem:[%s1671 + $0x31a] sm:$0xff]
    %v2249 = vld [vmem:[%s1671 + $0x322] sm:$0xff]
    %v2250 = vpack.c.bf16 %v2187, %v2186
    %v2251 = vpack.c.bf16 %v2189, %v2188
    %v2252 = vpack.c.bf16 %v2191, %v2190
    %v2253 = vpack.c.bf16 %v2193, %v2192
    %v2254 = vpack.c.bf16 %v2195, %v2194
    %v2255 = vpack.c.bf16 %v2197, %v2196
    %v2256 = vpack.c.bf16 %v2199, %v2198
    %v2257 = vpack.c.bf16 %v2201, %v2200
    %v2258 = vpack.c.bf16 %v2203, %v2202
    %v2259 = vpack.c.bf16 %v2205, %v2204
    %v2260 = vpack.c.bf16 %v2207, %v2206
    %v2261 = vpack.c.bf16 %v2209, %v2208
    %v2262 = vpack.c.bf16 %v2211, %v2210
    %v2263 = vpack.c.bf16 %v2213, %v2212
    %v2264 = vpack.c.bf16 %v2215, %v2214
    %v2265 = vpack.c.bf16 %v2217, %v2216
    %v2266 = vpack.c.bf16 %v2219, %v2218
    %v2267 = vpack.c.bf16 %v2221, %v2220
    %v2268 = vpack.c.bf16 %v2223, %v2222
    %v2269 = vpack.c.bf16 %v2225, %v2224
    %v2270 = vpack.c.bf16 %v2227, %v2226
    %v2271 = vpack.c.bf16 %v2229, %v2228
    %v2272 = vpack.c.bf16 %v2231, %v2230
    %v2273 = vpack.c.bf16 %v2233, %v2232
    %v2274 = vpack.c.bf16 %v2235, %v2234
    %v2275 = vpack.c.bf16 %v2237, %v2236
    %v2276 = vpack.c.bf16 %v2239, %v2238
    %v2277 = vpack.c.bf16 %v2241, %v2240
    %v2278 = vpack.c.bf16 %v2243, %v2242
    %v2279 = vpack.c.bf16 %v2245, %v2244
    %v2280 = vpack.c.bf16 %v2247, %v2246
    %v2281 = vpack.c.bf16 %v2249, %v2248
    %2314 = vrot.lane.b32.xlu0 %v2250, 32
    %v2315 = vpop.permute.xlu0 %2314
    %2316 = vrot.lane.b32.xlu0 %v2251, 32
    %v2317 = vpop.permute.xlu0 %2316
    %2318 = vrot.lane.b32.xlu0 %v2252, 32
    %v2319 = vpop.permute.xlu0 %2318
    %2320 = vrot.lane.b32.xlu0 %v2253, 32
    %v2321 = vpop.permute.xlu0 %2320
    %2322 = vrot.lane.b32.xlu0 %v2254, 32
    %v2323 = vpop.permute.xlu0 %2322
    %2324 = vrot.lane.b32.xlu0 %v2255, 32
    %v2325 = vpop.permute.xlu0 %2324
    %2326 = vrot.lane.b32.xlu0 %v2256, 32
    %v2327 = vpop.permute.xlu0 %2326
    %2328 = vrot.lane.b32.xlu0 %v2257, 32
    %v2329 = vpop.permute.xlu0 %2328
    %2330 = vrot.lane.b32.xlu0 %v2258, 32
    %v2331 = vpop.permute.xlu0 %2330
    %2332 = vrot.lane.b32.xlu0 %v2259, 32
    %v2333 = vpop.permute.xlu0 %2332
    %2334 = vrot.lane.b32.xlu0 %v2260, 32
    %v2335 = vpop.permute.xlu0 %2334
    %2336 = vrot.lane.b32.xlu0 %v2261, 32
    %v2337 = vpop.permute.xlu0 %2336
    %2338 = vrot.lane.b32.xlu0 %v2262, 32
    %v2339 = vpop.permute.xlu0 %2338
    %2340 = vrot.lane.b32.xlu0 %v2263, 32
    %v2341 = vpop.permute.xlu0 %2340
    %2342 = vrot.lane.b32.xlu0 %v2264, 32
    %v2343 = vpop.permute.xlu0 %2342
    %2344 = vrot.lane.b32.xlu0 %v2265, 32
    %v2345 = vpop.permute.xlu0 %2344
    %2346 = vrot.lane.b32.xlu0 %v2266, 32
    %v2347 = vpop.permute.xlu0 %2346
    %2348 = vrot.lane.b32.xlu0 %v2267, 32
    %v2349 = vpop.permute.xlu0 %2348
    %2350 = vrot.lane.b32.xlu0 %v2268, 32
    %v2351 = vpop.permute.xlu0 %2350
    %2352 = vrot.lane.b32.xlu0 %v2269, 32
    %v2353 = vpop.permute.xlu0 %2352
    %2354 = vrot.lane.b32.xlu0 %v2270, 32
    %v2355 = vpop.permute.xlu0 %2354
    %2356 = vrot.lane.b32.xlu0 %v2271, 32
    %v2357 = vpop.permute.xlu0 %2356
    %2358 = vrot.lane.b32.xlu0 %v2272, 32
    %v2359 = vpop.permute.xlu0 %2358
    %2360 = vrot.lane.b32.xlu0 %v2273, 32
    %v2361 = vpop.permute.xlu0 %2360
    %2362 = vrot.lane.b32.xlu0 %v2274, 32
    %v2363 = vpop.permute.xlu0 %2362
    %2364 = vrot.lane.b32.xlu0 %v2275, 32
    %v2365 = vpop.permute.xlu0 %2364
    %2366 = vrot.lane.b32.xlu0 %v2276, 32
    %v2367 = vpop.permute.xlu0 %2366
    %2368 = vrot.lane.b32.xlu0 %v2277, 32
    %v2369 = vpop.permute.xlu0 %2368
    %2370 = vrot.lane.b32.xlu0 %v2278, 32
    %v2371 = vpop.permute.xlu0 %2370
    %2372 = vrot.lane.b32.xlu0 %v2279, 32
    %v2373 = vpop.permute.xlu0 %2372
    %2374 = vrot.lane.b32.xlu0 %v2280, 32
    %v2375 = vpop.permute.xlu0 %2374
    %2376 = vrot.lane.b32.xlu0 %v2281, 32
    %v2377 = vpop.permute.xlu0 %2376
    %vm2410 = vcmask 294144
    %2411 = vst.msk [vmem:[#allocation3] sm:$0xff] %vm2410, %v2315
    %2412 = vst.msk [vmem:[#allocation3 + $0x8] sm:$0xff] %vm2410, %v2317
    %2413 = vst.msk [vmem:[#allocation3 + $0x10] sm:$0xff] %vm2410, %v2319
    %2414 = vst.msk [vmem:[#allocation3 + $0x18] sm:$0xff] %vm2410, %v2321
    %2415 = vst.msk [vmem:[#allocation3 + $0x20] sm:$0xff] %vm2410, %v2323
    %2416 = vst.msk [vmem:[#allocation3 + $0x28] sm:$0xff] %vm2410, %v2325
    %2417 = vst.msk [vmem:[#allocation3 + $0x30] sm:$0xff] %vm2410, %v2327
    %2418 = vst.msk [vmem:[#allocation3 + $0x38] sm:$0xff] %vm2410, %v2329
    %2419 = vst.msk [vmem:[#allocation3 + $0x40] sm:$0xff] %vm2410, %v2331
    %2420 = vst.msk [vmem:[#allocation3 + $0x48] sm:$0xff] %vm2410, %v2333
    %2421 = vst.msk [vmem:[#allocation3 + $0x50] sm:$0xff] %vm2410, %v2335
    %2422 = vst.msk [vmem:[#allocation3 + $0x58] sm:$0xff] %vm2410, %v2337
    %2423 = vst.msk [vmem:[#allocation3 + $0x60] sm:$0xff] %vm2410, %v2339
    %2424 = vst.msk [vmem:[#allocation3 + $0x68] sm:$0xff] %vm2410, %v2341
    %2425 = vst.msk [vmem:[#allocation3 + $0x70] sm:$0xff] %vm2410, %v2343
    %2426 = vst.msk [vmem:[#allocation3 + $0x78] sm:$0xff] %vm2410, %v2345
    %2427 = vst.msk [vmem:[#allocation3 + $0x80] sm:$0xff] %vm2410, %v2347
    %2428 = vst.msk [vmem:[#allocation3 + $0x88] sm:$0xff] %vm2410, %v2349
    %2429 = vst.msk [vmem:[#allocation3 + $0x90] sm:$0xff] %vm2410, %v2351
    %2430 = vst.msk [vmem:[#allocation3 + $0x98] sm:$0xff] %vm2410, %v2353
    %2431 = vst.msk [vmem:[#allocation3 + $0xa0] sm:$0xff] %vm2410, %v2355
    %2432 = vst.msk [vmem:[#allocation3 + $0xa8] sm:$0xff] %vm2410, %v2357
    %2433 = vst.msk [vmem:[#allocation3 + $0xb0] sm:$0xff] %vm2410, %v2359
    %2434 = vst.msk [vmem:[#allocation3 + $0xb8] sm:$0xff] %vm2410, %v2361
    %2435 = vst.msk [vmem:[#allocation3 + $0xc0] sm:$0xff] %vm2410, %v2363
    %2436 = vst.msk [vmem:[#allocation3 + $0xc8] sm:$0xff] %vm2410, %v2365
    %2437 = vst.msk [vmem:[#allocation3 + $0xd0] sm:$0xff] %vm2410, %v2367
    %2438 = vst.msk [vmem:[#allocation3 + $0xd8] sm:$0xff] %vm2410, %v2369
    %2439 = vst.msk [vmem:[#allocation3 + $0xe0] sm:$0xff] %vm2410, %v2371
    %2440 = vst.msk [vmem:[#allocation3 + $0xe8] sm:$0xff] %vm2410, %v2373
    %2441 = vst.msk [vmem:[#allocation3 + $0xf0] sm:$0xff] %vm2410, %v2375
    %2442 = vst.msk [vmem:[#allocation3 + $0xf8] sm:$0xff] %vm2410, %v2377
    %v2443 = vld [vmem:[#allocation3] sm:$0xff]
    %v2444 = vld [vmem:[#allocation3 + $0x8] sm:$0xff]
    %v2445 = vld [vmem:[#allocation3 + $0x10] sm:$0xff]
    %v2446 = vld [vmem:[#allocation3 + $0x18] sm:$0xff]
    %v2447 = vld [vmem:[#allocation3 + $0x20] sm:$0xff]
    %v2448 = vld [vmem:[#allocation3 + $0x28] sm:$0xff]
    %v2449 = vld [vmem:[#allocation3 + $0x30] sm:$0xff]
    %v2450 = vld [vmem:[#allocation3 + $0x38] sm:$0xff]
    %v2451 = vld [vmem:[#allocation3 + $0x40] sm:$0xff]
    %v2452 = vld [vmem:[#allocation3 + $0x48] sm:$0xff]
    %v2453 = vld [vmem:[#allocation3 + $0x50] sm:$0xff]
    %v2454 = vld [vmem:[#allocation3 + $0x58] sm:$0xff]
    %v2455 = vld [vmem:[#allocation3 + $0x60] sm:$0xff]
    %v2456 = vld [vmem:[#allocation3 + $0x68] sm:$0xff]
    %v2457 = vld [vmem:[#allocation3 + $0x70] sm:$0xff]
    %v2458 = vld [vmem:[#allocation3 + $0x78] sm:$0xff]
    %v2459 = vld [vmem:[#allocation3 + $0x80] sm:$0xff]
    %v2460 = vld [vmem:[#allocation3 + $0x88] sm:$0xff]
    %v2461 = vld [vmem:[#allocation3 + $0x90] sm:$0xff]
    %v2462 = vld [vmem:[#allocation3 + $0x98] sm:$0xff]
    %v2463 = vld [vmem:[#allocation3 + $0xa0] sm:$0xff]
    %v2464 = vld [vmem:[#allocation3 + $0xa8] sm:$0xff]
    %v2465 = vld [vmem:[#allocation3 + $0xb0] sm:$0xff]
    %v2466 = vld [vmem:[#allocation3 + $0xb8] sm:$0xff]
    %v2467 = vld [vmem:[#allocation3 + $0xc0] sm:$0xff]
    %v2468 = vld [vmem:[#allocation3 + $0xc8] sm:$0xff]
    %v2469 = vld [vmem:[#allocation3 + $0xd0] sm:$0xff]
    %v2470 = vld [vmem:[#allocation3 + $0xd8] sm:$0xff]
    %v2471 = vld [vmem:[#allocation3 + $0xe0] sm:$0xff]
    %v2472 = vld [vmem:[#allocation3 + $0xe8] sm:$0xff]
    %v2473 = vld [vmem:[#allocation3 + $0xf0] sm:$0xff]
    %v2474 = vld [vmem:[#allocation3 + $0xf8] sm:$0xff]
    %v2475 = vld [vmem:[%s1] sm:$0xf]
    %v2476 = vld [vmem:[%s1 + $0x4] sm:$0xf]
    %v2477 = vld [vmem:[%s1 + $0x8] sm:$0xf]
    %v2478 = vld [vmem:[%s1 + $0xc] sm:$0xf]
    %v2479 = vld [vmem:[%s1 + $0x10] sm:$0x3]
    %v2485 = vunpack.c.l.b16 %v2475
    %v2486 = vunpack.c.l.b16 %v2476
    %v2487 = vunpack.c.l.b16 %v2477
    %v2488 = vunpack.c.l.b16 %v2478
    %v2489 = vunpack.c.l.b16 %v2479
    %v2490 = vpack.c.b16 %v2486, %v2485
    %v2491 = vpack.c.b16 %v2488, %v2487
    %v2492 = vpack.c.b16 %v2489, %v2489
    %vm2495 = vcmask 293888
    %v2497 = vsel %vm2495, %v2443, 0
    %v2500 = vsel %vm2495, %v2444, 0
    %v2503 = vsel %vm2495, %v2445, 0
    %v2506 = vsel %vm2495, %v2446, 0
    %v2509 = vsel %vm2495, %v2447, 0
    %v2512 = vsel %vm2495, %v2448, 0
    %v2515 = vsel %vm2495, %v2449, 0
    %v2518 = vsel %vm2495, %v2450, 0
    %v2521 = vsel %vm2495, %v2451, 0
    %v2524 = vsel %vm2495, %v2452, 0
    %v2527 = vsel %vm2495, %v2453, 0
    %v2530 = vsel %vm2495, %v2454, 0
    %v2533 = vsel %vm2495, %v2455, 0
    %v2536 = vsel %vm2495, %v2456, 0
    %v2539 = vsel %vm2495, %v2457, 0
    %v2542 = vsel %vm2495, %v2458, 0
    %v2545 = vsel %vm2495, %v2459, 0
    %v2548 = vsel %vm2495, %v2460, 0
    %v2551 = vsel %vm2495, %v2461, 0
    %v2554 = vsel %vm2495, %v2462, 0
    %v2557 = vsel %vm2495, %v2463, 0
    %v2560 = vsel %vm2495, %v2464, 0
    %v2563 = vsel %vm2495, %v2465, 0
    %v2566 = vsel %vm2495, %v2466, 0
    %v2569 = vsel %vm2495, %v2467, 0
    %v2572 = vsel %vm2495, %v2468, 0
    %v2575 = vsel %vm2495, %v2469, 0
    %v2578 = vsel %vm2495, %v2470, 0
    %v2581 = vsel %vm2495, %v2471, 0
    %v2584 = vsel %vm2495, %v2472, 0
    %v2587 = vsel %vm2495, %v2473, 0
    %v2590 = vsel %vm2495, %v2474, 0
    %vm2592 = vcmask 1041408
    %v2594 = vsel %vm2592, %v2492, 0
    %2596 = vmatprep.subr.bf16.mxu0 0
    %2597 = vmatpush1.bf16.msra.mxu0 %v2490
    %2598 = vmatprep.subr.bf16.mxu0 0
    %2599 = vmatpush1.bf16.msra.mxu0 %v2491
    %2600 = vmatprep.subr.bf16.mxu0 0
    %2601 = vmatpush1.bf16.msra.mxu0 %v2594
    %2602 = vmatprep.subr.bf16.mxu0 0
    %2603 = vmatpush1.bf16.msra.mxu0 0
    %2604 = vmatprep.subr.bf16.mxu0 0
    %2605 = vmatpush1.bf16.msra.mxu0 0
    %2606 = vmatprep.subr.bf16.mxu0 0
    %2607 = vmatpush1.bf16.msra.mxu0 0
    %2608 = vmatprep.subr.bf16.mxu0 0
    %2609 = vmatpush1.bf16.msra.mxu0 0
    %2610 = vmatprep.subr.bf16.mxu0 0
    %2611 = vmatpush1.bf16.msra.mxu0 0
    %2612 = vmatprep.subr.bf16.mxu0 0
    %2613 = vmatpush1.bf16.msra.mxu0 0
    %2614 = vmatprep.subr.bf16.mxu0 0
    %2615 = vmatpush1.bf16.msra.mxu0 0
    %2616 = vmatprep.subr.bf16.mxu0 0
    %2617 = vmatpush1.bf16.msra.mxu0 0
    %2618 = vmatprep.subr.bf16.mxu0 0
    %2619 = vmatpush1.bf16.msra.mxu0 0
    %2620 = vmatprep.subr.bf16.mxu0 0
    %2621 = vmatpush1.bf16.msra.mxu0 0
    %2622 = vmatprep.subr.bf16.mxu0 0
    %2623 = vmatpush1.bf16.msra.mxu0 0
    %2624 = vmatprep.subr.bf16.mxu0 0
    %2625 = vmatpush1.bf16.msra.mxu0 0
    %2626 = vmatprep.subr.bf16.mxu0 0
    %2627 = vmatpush1.bf16.msra.mxu0 0
    %2628 = vmatprep.mubr.bf16.mxu0 0
    %2629 = vmatmul.mubr.bf16.gmra.mrb[0].mxu0 %v2497
    %v2630 = vpop.f32.mrb[0].mxu0
    %v2631 = vadd.f32 0.0, %v2630
    %v2632 = vpop.f32.mrb[0].mxu0
    %v2633 = vpop.f32.mrb[0].mxu0
    %v2634 = vadd.f32 0.0, %v2633
    %v2635 = vpop.f32.mrb[0].mxu0
    %2636 = vmatprep.mubr.bf16.mxu0 0
    %2637 = vmatmul.mubr.bf16.gmra.mrb[0].mxu0 %v2500
    %v2638 = vpop.f32.mrb[0].mxu0
    %v2639 = vadd.f32 0.0, %v2638
    %v2640 = vpop.f32.mrb[0].mxu0
    %v2641 = vpop.f32.mrb[0].mxu0
    %v2642 = vadd.f32 0.0, %v2641
    %v2643 = vpop.f32.mrb[0].mxu0
    %2644 = vmatprep.mubr.bf16.mxu0 0
    %2645 = vmatmul.mubr.bf16.gmra.mrb[0].mxu0 %v2503
    %v2646 = vpop.f32.mrb[0].mxu0
    %v2647 = vadd.f32 0.0, %v2646
    %v2648 = vpop.f32.mrb[0].mxu0
    %v2649 = vpop.f32.mrb[0].mxu0
    %v2650 = vadd.f32 0.0, %v2649
    %v2651 = vpop.f32.mrb[0].mxu0
    %2652 = vmatprep.mubr.bf16.mxu0 0
    %2653 = vmatmul.mubr.bf16.gmra.mrb[0].mxu0 %v2506
    %v2654 = vpop.f32.mrb[0].mxu0
    %v2655 = vadd.f32 0.0, %v2654
    %v2656 = vpop.f32.mrb[0].mxu0
    %v2657 = vpop.f32.mrb[0].mxu0
    %v2658 = vadd.f32 0.0, %v2657
    %v2659 = vpop.f32.mrb[0].mxu0
    %2660 = vmatprep.mubr.bf16.mxu0 0
    %2661 = vmatmul.mubr.bf16.gmra.mrb[0].mxu0 %v2509
    %v2662 = vpop.f32.mrb[0].mxu0
    %v2663 = vadd.f32 0.0, %v2662
    %v2664 = vpop.f32.mrb[0].mxu0
    %v2665 = vpop.f32.mrb[0].mxu0
    %v2666 = vadd.f32 0.0, %v2665
    %v2667 = vpop.f32.mrb[0].mxu0
    %2668 = vmatprep.mubr.bf16.mxu0 0
    %2669 = vmatmul.mubr.bf16.gmra.mrb[0].mxu0 %v2512
    %v2670 = vpop.f32.mrb[0].mxu0
    %v2671 = vadd.f32 0.0, %v2670
    %v2672 = vpop.f32.mrb[0].mxu0
    %v2673 = vpop.f32.mrb[0].mxu0
    %v2674 = vadd.f32 0.0, %v2673
    %v2675 = vpop.f32.mrb[0].mxu0
    %2676 = vmatprep.mubr.bf16.mxu0 0
    %2677 = vmatmul.mubr.bf16.gmra.mrb[0].mxu0 %v2515
    %v2678 = vpop.f32.mrb[0].mxu0
    %v2679 = vadd.f32 0.0, %v2678
    %v2680 = vpop.f32.mrb[0].mxu0
    %v2681 = vpop.f32.mrb[0].mxu0
    %v2682 = vadd.f32 0.0, %v2681
    %v2683 = vpop.f32.mrb[0].mxu0
    %2684 = vmatprep.mubr.bf16.mxu0 0
    %2685 = vmatmul.mubr.bf16.gmra.mrb[0].mxu0 %v2518
    %v2686 = vpop.f32.mrb[0].mxu0
    %v2687 = vadd.f32 0.0, %v2686
    %v2688 = vpop.f32.mrb[0].mxu0
    %v2689 = vpop.f32.mrb[0].mxu0
    %v2690 = vadd.f32 0.0, %v2689
    %v2691 = vpop.f32.mrb[0].mxu0
    %2692 = vmatprep.mubr.bf16.mxu0 0
    %2693 = vmatmul.mubr.bf16.gmra.mrb[0].mxu0 %v2521
    %v2694 = vpop.f32.mrb[0].mxu0
    %v2695 = vadd.f32 0.0, %v2694
    %v2696 = vpop.f32.mrb[0].mxu0
    %v2697 = vpop.f32.mrb[0].mxu0
    %v2698 = vadd.f32 0.0, %v2697
    %v2699 = vpop.f32.mrb[0].mxu0
    %2700 = vmatprep.mubr.bf16.mxu0 0
    %2701 = vmatmul.mubr.bf16.gmra.mrb[0].mxu0 %v2524
    %v2702 = vpop.f32.mrb[0].mxu0
    %v2703 = vadd.f32 0.0, %v2702
    %v2704 = vpop.f32.mrb[0].mxu0
    %v2705 = vpop.f32.mrb[0].mxu0
    %v2706 = vadd.f32 0.0, %v2705
    %v2707 = vpop.f32.mrb[0].mxu0
    %2708 = vmatprep.mubr.bf16.mxu0 0
    %2709 = vmatmul.mubr.bf16.gmra.mrb[0].mxu0 %v2527
    %v2710 = vpop.f32.mrb[0].mxu0
    %v2711 = vadd.f32 0.0, %v2710
    %v2712 = vpop.f32.mrb[0].mxu0
    %v2713 = vpop.f32.mrb[0].mxu0
    %v2714 = vadd.f32 0.0, %v2713
    %v2715 = vpop.f32.mrb[0].mxu0
    %2716 = vmatprep.mubr.bf16.mxu0 0
    %2717 = vmatmul.mubr.bf16.gmra.mrb[0].mxu0 %v2530
    %v2718 = vpop.f32.mrb[0].mxu0
    %v2719 = vadd.f32 0.0, %v2718
    %v2720 = vpop.f32.mrb[0].mxu0
    %v2721 = vpop.f32.mrb[0].mxu0
    %v2722 = vadd.f32 0.0, %v2721
    %v2723 = vpop.f32.mrb[0].mxu0
    %2724 = vmatprep.mubr.bf16.mxu0 0
    %2725 = vmatmul.mubr.bf16.gmra.mrb[0].mxu0 %v2533
    %v2726 = vpop.f32.mrb[0].mxu0
    %v2727 = vadd.f32 0.0, %v2726
    %v2728 = vpop.f32.mrb[0].mxu0
    %v2729 = vpop.f32.mrb[0].mxu0
    %v2730 = vadd.f32 0.0, %v2729
    %v2731 = vpop.f32.mrb[0].mxu0
    %2732 = vmatprep.mubr.bf16.mxu0 0
    %2733 = vmatmul.mubr.bf16.gmra.mrb[0].mxu0 %v2536
    %v2734 = vpop.f32.mrb[0].mxu0
    %v2735 = vadd.f32 0.0, %v2734
    %v2736 = vpop.f32.mrb[0].mxu0
    %v2737 = vpop.f32.mrb[0].mxu0
    %v2738 = vadd.f32 0.0, %v2737
    %v2739 = vpop.f32.mrb[0].mxu0
    %2740 = vmatprep.mubr.bf16.mxu0 0
    %2741 = vmatmul.mubr.bf16.gmra.mrb[0].mxu0 %v2539
    %v2742 = vpop.f32.mrb[0].mxu0
    %v2743 = vadd.f32 0.0, %v2742
    %v2744 = vpop.f32.mrb[0].mxu0
    %v2745 = vpop.f32.mrb[0].mxu0
    %v2746 = vadd.f32 0.0, %v2745
    %v2747 = vpop.f32.mrb[0].mxu0
    %2748 = vmatprep.mubr.bf16.mxu0 0
    %2749 = vmatmul.mubr.bf16.gmra.mrb[0].mxu0 %v2542
    %v2750 = vpop.f32.mrb[0].mxu0
    %v2751 = vadd.f32 0.0, %v2750
    %v2752 = vpop.f32.mrb[0].mxu0
    %v2753 = vpop.f32.mrb[0].mxu0
    %v2754 = vadd.f32 0.0, %v2753
    %v2755 = vpop.f32.mrb[0].mxu0
    %2756 = vmatprep.mubr.bf16.mxu0 0
    %2757 = vmatmul.mubr.bf16.gmra.mrb[0].mxu0 %v2545
    %v2758 = vpop.f32.mrb[0].mxu0
    %v2759 = vadd.f32 0.0, %v2758
    %v2760 = vpop.f32.mrb[0].mxu0
    %v2761 = vpop.f32.mrb[0].mxu0
    %v2762 = vadd.f32 0.0, %v2761
    %v2763 = vpop.f32.mrb[0].mxu0
    %2764 = vmatprep.mubr.bf16.mxu0 0
    %2765 = vmatmul.mubr.bf16.gmra.mrb[0].mxu0 %v2548
    %v2766 = vpop.f32.mrb[0].mxu0
    %v2767 = vadd.f32 0.0, %v2766
    %v2768 = vpop.f32.mrb[0].mxu0
    %v2769 = vpop.f32.mrb[0].mxu0
    %v2770 = vadd.f32 0.0, %v2769
    %v2771 = vpop.f32.mrb[0].mxu0
    %2772 = vmatprep.mubr.bf16.mxu0 0
    %2773 = vmatmul.mubr.bf16.gmra.mrb[0].mxu0 %v2551
    %v2774 = vpop.f32.mrb[0].mxu0
    %v2775 = vadd.f32 0.0, %v2774
    %v2776 = vpop.f32.mrb[0].mxu0
    %v2777 = vpop.f32.mrb[0].mxu0
    %v2778 = vadd.f32 0.0, %v2777
    %v2779 = vpop.f32.mrb[0].mxu0
    %2780 = vmatprep.mubr.bf16.mxu0 0
    %2781 = vmatmul.mubr.bf16.gmra.mrb[0].mxu0 %v2554
    %v2782 = vpop.f32.mrb[0].mxu0
    %v2783 = vadd.f32 0.0, %v2782
    %v2784 = vpop.f32.mrb[0].mxu0
    %v2785 = vpop.f32.mrb[0].mxu0
    %v2786 = vadd.f32 0.0, %v2785
    %v2787 = vpop.f32.mrb[0].mxu0
    %2788 = vmatprep.mubr.bf16.mxu0 0
    %2789 = vmatmul.mubr.bf16.gmra.mrb[0].mxu0 %v2557
    %v2790 = vpop.f32.mrb[0].mxu0
    %v2791 = vadd.f32 0.0, %v2790
    %v2792 = vpop.f32.mrb[0].mxu0
    %v2793 = vpop.f32.mrb[0].mxu0
    %v2794 = vadd.f32 0.0, %v2793
    %v2795 = vpop.f32.mrb[0].mxu0
    %2796 = vmatprep.mubr.bf16.mxu0 0
    %2797 = vmatmul.mubr.bf16.gmra.mrb[0].mxu0 %v2560
    %v2798 = vpop.f32.mrb[0].mxu0
    %v2799 = vadd.f32 0.0, %v2798
    %v2800 = vpop.f32.mrb[0].mxu0
    %v2801 = vpop.f32.mrb[0].mxu0
    %v2802 = vadd.f32 0.0, %v2801
    %v2803 = vpop.f32.mrb[0].mxu0
    %2804 = vmatprep.mubr.bf16.mxu0 0
    %2805 = vmatmul.mubr.bf16.gmra.mrb[0].mxu0 %v2563
    %v2806 = vpop.f32.mrb[0].mxu0
    %v2807 = vadd.f32 0.0, %v2806
    %v2808 = vpop.f32.mrb[0].mxu0
    %v2809 = vpop.f32.mrb[0].mxu0
    %v2810 = vadd.f32 0.0, %v2809
    %v2811 = vpop.f32.mrb[0].mxu0
    %2812 = vmatprep.mubr.bf16.mxu0 0
    %2813 = vmatmul.mubr.bf16.gmra.mrb[0].mxu0 %v2566
    %v2814 = vpop.f32.mrb[0].mxu0
    %v2815 = vadd.f32 0.0, %v2814
    %v2816 = vpop.f32.mrb[0].mxu0
    %v2817 = vpop.f32.mrb[0].mxu0
    %v2818 = vadd.f32 0.0, %v2817
    %v2819 = vpop.f32.mrb[0].mxu0
    %2820 = vmatprep.mubr.bf16.mxu0 0
    %2821 = vmatmul.mubr.bf16.gmra.mrb[0].mxu0 %v2569
    %v2822 = vpop.f32.mrb[0].mxu0
    %v2823 = vadd.f32 0.0, %v2822
    %v2824 = vpop.f32.mrb[0].mxu0
    %v2825 = vpop.f32.mrb[0].mxu0
    %v2826 = vadd.f32 0.0, %v2825
    %v2827 = vpop.f32.mrb[0].mxu0
    %2828 = vmatprep.mubr.bf16.mxu0 0
    %2829 = vmatmul.mubr.bf16.gmra.mrb[0].mxu0 %v2572
    %v2830 = vpop.f32.mrb[0].mxu0
    %v2831 = vadd.f32 0.0, %v2830
    %v2832 = vpop.f32.mrb[0].mxu0
    %v2833 = vpop.f32.mrb[0].mxu0
    %v2834 = vadd.f32 0.0, %v2833
    %v2835 = vpop.f32.mrb[0].mxu0
    %2836 = vmatprep.mubr.bf16.mxu0 0
    %2837 = vmatmul.mubr.bf16.gmra.mrb[0].mxu0 %v2575
    %v2838 = vpop.f32.mrb[0].mxu0
    %v2839 = vadd.f32 0.0, %v2838
    %v2840 = vpop.f32.mrb[0].mxu0
    %v2841 = vpop.f32.mrb[0].mxu0
    %v2842 = vadd.f32 0.0, %v2841
    %v2843 = vpop.f32.mrb[0].mxu0
    %2844 = vmatprep.mubr.bf16.mxu0 0
    %2845 = vmatmul.mubr.bf16.gmra.mrb[0].mxu0 %v2578
    %v2846 = vpop.f32.mrb[0].mxu0
    %v2847 = vadd.f32 0.0, %v2846
    %v2848 = vpop.f32.mrb[0].mxu0
    %v2849 = vpop.f32.mrb[0].mxu0
    %v2850 = vadd.f32 0.0, %v2849
    %v2851 = vpop.f32.mrb[0].mxu0
    %2852 = vmatprep.mubr.bf16.mxu0 0
    %2853 = vmatmul.mubr.bf16.gmra.mrb[0].mxu0 %v2581
    %v2854 = vpop.f32.mrb[0].mxu0
    %v2855 = vadd.f32 0.0, %v2854
    %v2856 = vpop.f32.mrb[0].mxu0
    %v2857 = vpop.f32.mrb[0].mxu0
    %v2858 = vadd.f32 0.0, %v2857
    %v2859 = vpop.f32.mrb[0].mxu0
    %2860 = vmatprep.mubr.bf16.mxu0 0
    %2861 = vmatmul.mubr.bf16.gmra.mrb[0].mxu0 %v2584
    %v2862 = vpop.f32.mrb[0].mxu0
    %v2863 = vadd.f32 0.0, %v2862
    %v2864 = vpop.f32.mrb[0].mxu0
    %v2865 = vpop.f32.mrb[0].mxu0
    %v2866 = vadd.f32 0.0, %v2865
    %v2867 = vpop.f32.mrb[0].mxu0
    %2868 = vmatprep.mubr.bf16.mxu0 0
    %2869 = vmatmul.mubr.bf16.gmra.mrb[0].mxu0 %v2587
    %v2870 = vpop.f32.mrb[0].mxu0
    %v2871 = vadd.f32 0.0, %v2870
    %v2872 = vpop.f32.mrb[0].mxu0
    %v2873 = vpop.f32.mrb[0].mxu0
    %v2874 = vadd.f32 0.0, %v2873
    %v2875 = vpop.f32.mrb[0].mxu0
    %2876 = vmatprep.mubr.bf16.mxu0 0
    %2877 = vmatmul.mubr.bf16.gmra.mrb[0].mxu0 %v2590
    %v2878 = vpop.f32.mrb[0].mxu0
    %v2879 = vadd.f32 0.0, %v2878
    %v2880 = vpop.f32.mrb[0].mxu0
    %v2881 = vpop.f32.mrb[0].mxu0
    %v2882 = vadd.f32 0.0, %v2881
    %v2883 = vpop.f32.mrb[0].mxu0
    %2884 = vdwg.mxu0
    %v2885 = vld [vmem:[%s2] sm:$0x1]
    %v2887 = vlaneseq
    %v2888 = vshrl.u32 %v2887, 7
    %v2889 = vsub.s32 0, %v2888
    %v2890 = vrot.slane %v2885, %v2889
    %v2892 = vmul.f32 %v2631, %v2890
    %v2893 = vmul.f32 %v2634, %v2890
    %v2894 = vmul.f32 %v2639, %v2890
    %v2895 = vmul.f32 %v2642, %v2890
    %v2896 = vmul.f32 %v2647, %v2890
    %v2897 = vmul.f32 %v2650, %v2890
    %v2898 = vmul.f32 %v2655, %v2890
    %v2899 = vmul.f32 %v2658, %v2890
    %v2900 = vmul.f32 %v2663, %v2890
    %v2901 = vmul.f32 %v2666, %v2890
    %v2902 = vmul.f32 %v2671, %v2890
    %v2903 = vmul.f32 %v2674, %v2890
    %v2904 = vmul.f32 %v2679, %v2890
    %v2905 = vmul.f32 %v2682, %v2890
    %v2906 = vmul.f32 %v2687, %v2890
    %v2907 = vmul.f32 %v2690, %v2890
    %v2908 = vmul.f32 %v2695, %v2890
    %v2909 = vmul.f32 %v2698, %v2890
    %v2910 = vmul.f32 %v2703, %v2890
    %v2911 = vmul.f32 %v2706, %v2890
    %v2912 = vmul.f32 %v2711, %v2890
    %v2913 = vmul.f32 %v2714, %v2890
    %v2914 = vmul.f32 %v2719, %v2890
    %v2915 = vmul.f32 %v2722, %v2890
    %v2916 = vmul.f32 %v2727, %v2890
    %v2917 = vmul.f32 %v2730, %v2890
    %v2918 = vmul.f32 %v2735, %v2890
    %v2919 = vmul.f32 %v2738, %v2890
    %v2920 = vmul.f32 %v2743, %v2890
    %v2921 = vmul.f32 %v2746, %v2890
    %v2922 = vmul.f32 %v2751, %v2890
    %v2923 = vmul.f32 %v2754, %v2890
    %v2924 = vmul.f32 %v2759, %v2890
    %v2925 = vmul.f32 %v2762, %v2890
    %v2926 = vmul.f32 %v2767, %v2890
    %v2927 = vmul.f32 %v2770, %v2890
    %v2928 = vmul.f32 %v2775, %v2890
    %v2929 = vmul.f32 %v2778, %v2890
    %v2930 = vmul.f32 %v2783, %v2890
    %v2931 = vmul.f32 %v2786, %v2890
    %v2932 = vmul.f32 %v2791, %v2890
    %v2933 = vmul.f32 %v2794, %v2890
    %v2934 = vmul.f32 %v2799, %v2890
    %v2935 = vmul.f32 %v2802, %v2890
    %v2936 = vmul.f32 %v2807, %v2890
    %v2937 = vmul.f32 %v2810, %v2890
    %v2938 = vmul.f32 %v2815, %v2890
    %v2939 = vmul.f32 %v2818, %v2890
    %v2940 = vmul.f32 %v2823, %v2890
    %v2941 = vmul.f32 %v2826, %v2890
    %v2942 = vmul.f32 %v2831, %v2890
    %v2943 = vmul.f32 %v2834, %v2890
    %v2944 = vmul.f32 %v2839, %v2890
    %v2945 = vmul.f32 %v2842, %v2890
    %v2946 = vmul.f32 %v2847, %v2890
    %v2947 = vmul.f32 %v2850, %v2890
    %v2948 = vmul.f32 %v2855, %v2890
    %v2949 = vmul.f32 %v2858, %v2890
    %v2950 = vmul.f32 %v2863, %v2890
    %v2951 = vmul.f32 %v2866, %v2890
    %v2952 = vmul.f32 %v2871, %v2890
    %v2953 = vmul.f32 %v2874, %v2890
    %v2954 = vmul.f32 %v2879, %v2890
    %v2955 = vmul.f32 %v2882, %v2890
    %v2956 = vld [vmem:[%s3] sm:$0x1]
    %v2958 = vlaneseq
    %v2959 = vshrl.u32 %v2958, 7
    %v2960 = vsub.s32 0, %v2959
    %v2961 = vrot.slane %v2956, %v2960
    %v2963 = vadd.f32 %v2892, %v2961
    %v2964 = vadd.f32 %v2893, %v2961
    %v2965 = vadd.f32 %v2894, %v2961
    %v2966 = vadd.f32 %v2895, %v2961
    %v2967 = vadd.f32 %v2896, %v2961
    %v2968 = vadd.f32 %v2897, %v2961
    %v2969 = vadd.f32 %v2898, %v2961
    %v2970 = vadd.f32 %v2899, %v2961
    %v2971 = vadd.f32 %v2900, %v2961
    %v2972 = vadd.f32 %v2901, %v2961
    %v2973 = vadd.f32 %v2902, %v2961
    %v2974 = vadd.f32 %v2903, %v2961
    %v2975 = vadd.f32 %v2904, %v2961
    %v2976 = vadd.f32 %v2905, %v2961
    %v2977 = vadd.f32 %v2906, %v2961
    %v2978 = vadd.f32 %v2907, %v2961
    %v2979 = vadd.f32 %v2908, %v2961
    %v2980 = vadd.f32 %v2909, %v2961
    %v2981 = vadd.f32 %v2910, %v2961
    %v2982 = vadd.f32 %v2911, %v2961
    %v2983 = vadd.f32 %v2912, %v2961
    %v2984 = vadd.f32 %v2913, %v2961
    %v2985 = vadd.f32 %v2914, %v2961
    %v2986 = vadd.f32 %v2915, %v2961
    %v2987 = vadd.f32 %v2916, %v2961
    %v2988 = vadd.f32 %v2917, %v2961
    %v2989 = vadd.f32 %v2918, %v2961
    %v2990 = vadd.f32 %v2919, %v2961
    %v2991 = vadd.f32 %v2920, %v2961
    %v2992 = vadd.f32 %v2921, %v2961
    %v2993 = vadd.f32 %v2922, %v2961
    %v2994 = vadd.f32 %v2923, %v2961
    %v2995 = vadd.f32 %v2924, %v2961
    %v2996 = vadd.f32 %v2925, %v2961
    %v2997 = vadd.f32 %v2926, %v2961
    %v2998 = vadd.f32 %v2927, %v2961
    %v2999 = vadd.f32 %v2928, %v2961
    %v3000 = vadd.f32 %v2929, %v2961
    %v3001 = vadd.f32 %v2930, %v2961
    %v3002 = vadd.f32 %v2931, %v2961
    %v3003 = vadd.f32 %v2932, %v2961
    %v3004 = vadd.f32 %v2933, %v2961
    %v3005 = vadd.f32 %v2934, %v2961
    %v3006 = vadd.f32 %v2935, %v2961
    %v3007 = vadd.f32 %v2936, %v2961
    %v3008 = vadd.f32 %v2937, %v2961
    %v3009 = vadd.f32 %v2938, %v2961
    %v3010 = vadd.f32 %v2939, %v2961
    %v3011 = vadd.f32 %v2940, %v2961
    %v3012 = vadd.f32 %v2941, %v2961
    %v3013 = vadd.f32 %v2942, %v2961
    %v3014 = vadd.f32 %v2943, %v2961
    %v3015 = vadd.f32 %v2944, %v2961
    %v3016 = vadd.f32 %v2945, %v2961
    %v3017 = vadd.f32 %v2946, %v2961
    %v3018 = vadd.f32 %v2947, %v2961
    %v3019 = vadd.f32 %v2948, %v2961
    %v3020 = vadd.f32 %v2949, %v2961
    %v3021 = vadd.f32 %v2950, %v2961
    %v3022 = vadd.f32 %v2951, %v2961
    %v3023 = vadd.f32 %v2952, %v2961
    %v3024 = vadd.f32 %v2953, %v2961
    %v3025 = vadd.f32 %v2954, %v2961
    %v3026 = vadd.f32 %v2955, %v2961
    %v3027 = vmax.f32 %v2963, 0.0
    %v3028 = vmax.f32 %v2964, 0.0
    %v3029 = vmax.f32 %v2965, 0.0
    %v3030 = vmax.f32 %v2966, 0.0
    %v3031 = vmax.f32 %v2967, 0.0
    %v3032 = vmax.f32 %v2968, 0.0
    %v3033 = vmax.f32 %v2969, 0.0
    %v3034 = vmax.f32 %v2970, 0.0
    %v3035 = vmax.f32 %v2971, 0.0
    %v3036 = vmax.f32 %v2972, 0.0
    %v3037 = vmax.f32 %v2973, 0.0
    %v3038 = vmax.f32 %v2974, 0.0
    %v3039 = vmax.f32 %v2975, 0.0
    %v3040 = vmax.f32 %v2976, 0.0
    %v3041 = vmax.f32 %v2977, 0.0
    %v3042 = vmax.f32 %v2978, 0.0
    %v3043 = vmax.f32 %v2979, 0.0
    %v3044 = vmax.f32 %v2980, 0.0
    %v3045 = vmax.f32 %v2981, 0.0
    %v3046 = vmax.f32 %v2982, 0.0
    %v3047 = vmax.f32 %v2983, 0.0
    %v3048 = vmax.f32 %v2984, 0.0
    %v3049 = vmax.f32 %v2985, 0.0
    %v3050 = vmax.f32 %v2986, 0.0
    %v3051 = vmax.f32 %v2987, 0.0
    %v3052 = vmax.f32 %v2988, 0.0
    %v3053 = vmax.f32 %v2989, 0.0
    %v3054 = vmax.f32 %v2990, 0.0
    %v3055 = vmax.f32 %v2991, 0.0
    %v3056 = vmax.f32 %v2992, 0.0
    %v3057 = vmax.f32 %v2993, 0.0
    %v3058 = vmax.f32 %v2994, 0.0
    %v3059 = vmax.f32 %v2995, 0.0
    %v3060 = vmax.f32 %v2996, 0.0
    %v3061 = vmax.f32 %v2997, 0.0
    %v3062 = vmax.f32 %v2998, 0.0
    %v3063 = vmax.f32 %v2999, 0.0
    %v3064 = vmax.f32 %v3000, 0.0
    %v3065 = vmax.f32 %v3001, 0.0
    %v3066 = vmax.f32 %v3002, 0.0
    %v3067 = vmax.f32 %v3003, 0.0
    %v3068 = vmax.f32 %v3004, 0.0
    %v3069 = vmax.f32 %v3005, 0.0
    %v3070 = vmax.f32 %v3006, 0.0
    %v3071 = vmax.f32 %v3007, 0.0
    %v3072 = vmax.f32 %v3008, 0.0
    %v3073 = vmax.f32 %v3009, 0.0
    %v3074 = vmax.f32 %v3010, 0.0
    %v3075 = vmax.f32 %v3011, 0.0
    %v3076 = vmax.f32 %v3012, 0.0
    %v3077 = vmax.f32 %v3013, 0.0
    %v3078 = vmax.f32 %v3014, 0.0
    %v3079 = vmax.f32 %v3015, 0.0
    %v3080 = vmax.f32 %v3016, 0.0
    %v3081 = vmax.f32 %v3017, 0.0
    %v3082 = vmax.f32 %v3018, 0.0
    %v3083 = vmax.f32 %v3019, 0.0
    %v3084 = vmax.f32 %v3020, 0.0
    %v3085 = vmax.f32 %v3021, 0.0
    %v3086 = vmax.f32 %v3022, 0.0
    %v3087 = vmax.f32 %v3023, 0.0
    %v3088 = vmax.f32 %v3024, 0.0
    %v3089 = vmax.f32 %v3025, 0.0
    %v3090 = vmax.f32 %v3026, 0.0
    %v3091 = vmax.f32 %v3027, %v3029
    %v3092 = vmax.f32 %v3028, %v3030
    %v3093 = vmax.f32 %v3031, %v3033
    %v3094 = vmax.f32 %v3032, %v3034
    %v3095 = vmax.f32 %v3035, %v3037
    %v3096 = vmax.f32 %v3036, %v3038
    %v3097 = vmax.f32 %v3039, %v3041
    %v3098 = vmax.f32 %v3040, %v3042
    %v3099 = vmax.f32 %v3043, %v3045
    %v3100 = vmax.f32 %v3044, %v3046
    %v3101 = vmax.f32 %v3047, %v3049
    %v3102 = vmax.f32 %v3048, %v3050
    %v3103 = vmax.f32 %v3051, %v3053
    %v3104 = vmax.f32 %v3052, %v3054
    %v3105 = vmax.f32 %v3055, %v3057
    %v3106 = vmax.f32 %v3056, %v3058
    %v3107 = vmax.f32 %v3059, %v3061
    %v3108 = vmax.f32 %v3060, %v3062
    %v3109 = vmax.f32 %v3063, %v3065
    %v3110 = vmax.f32 %v3064, %v3066
    %v3111 = vmax.f32 %v3067, %v3069
    %v3112 = vmax.f32 %v3068, %v3070
    %v3113 = vmax.f32 %v3071, %v3073
    %v3114 = vmax.f32 %v3072, %v3074
    %v3115 = vmax.f32 %v3075, %v3077
    %v3116 = vmax.f32 %v3076, %v3078
    %v3117 = vmax.f32 %v3079, %v3081
    %v3118 = vmax.f32 %v3080, %v3082
    %v3119 = vmax.f32 %v3083, %v3085
    %v3120 = vmax.f32 %v3084, %v3086
    %v3121 = vmax.f32 %v3087, %v3089
    %v3122 = vmax.f32 %v3088, %v3090
    %3123 = vst [vmem:[#allocation4] sm:$0xff] %v3091
    %3124 = vst [vmem:[#allocation4 + $0x8] sm:$0xff] %v3092
    %3125 = vst [vmem:[#allocation4 + $0x10] sm:$0xff] %v3093
    %3126 = vst [vmem:[#allocation4 + $0x18] sm:$0xff] %v3094
    %3127 = vst [vmem:[#allocation4 + $0x20] sm:$0xff] %v3095
    %3128 = vst [vmem:[#allocation4 + $0x28] sm:$0xff] %v3096
    %3129 = vst [vmem:[#allocation4 + $0x30] sm:$0xff] %v3097
    %3130 = vst [vmem:[#allocation4 + $0x38] sm:$0xff] %v3098
    %3131 = vst [vmem:[#allocation4 + $0x40] sm:$0xff] %v3099
    %3132 = vst [vmem:[#allocation4 + $0x48] sm:$0xff] %v3100
    %3133 = vst [vmem:[#allocation4 + $0x50] sm:$0xff] %v3101
    %3134 = vst [vmem:[#allocation4 + $0x58] sm:$0xff] %v3102
    %3135 = vst [vmem:[#allocation4 + $0x60] sm:$0xff] %v3103
    %3136 = vst [vmem:[#allocation4 + $0x68] sm:$0xff] %v3104
    %3137 = vst [vmem:[#allocation4 + $0x70] sm:$0xff] %v3105
    %3138 = vst [vmem:[#allocation4 + $0x78] sm:$0xff] %v3106
    %3139 = vst [vmem:[#allocation4 + $0x80] sm:$0xff] %v3107
    %3140 = vst [vmem:[#allocation4 + $0x88] sm:$0xff] %v3108
    %3141 = vst [vmem:[#allocation4 + $0x90] sm:$0xff] %v3109
    %3142 = vst [vmem:[#allocation4 + $0x98] sm:$0xff] %v3110
    %3143 = vst [vmem:[#allocation4 + $0xa0] sm:$0xff] %v3111
    %3144 = vst [vmem:[#allocation4 + $0xa8] sm:$0xff] %v3112
    %3145 = vst [vmem:[#allocation4 + $0xb0] sm:$0xff] %v3113
    %3146 = vst [vmem:[#allocation4 + $0xb8] sm:$0xff] %v3114
    %3147 = vst [vmem:[#allocation4 + $0xc0] sm:$0xff] %v3115
    %3148 = vst [vmem:[#allocation4 + $0xc8] sm:$0xff] %v3116
    %3149 = vst [vmem:[#allocation4 + $0xd0] sm:$0xff] %v3117
    %3150 = vst [vmem:[#allocation4 + $0xd8] sm:$0xff] %v3118
    %3151 = vst [vmem:[#allocation4 + $0xe0] sm:$0xff] %v3119
    %3152 = vst [vmem:[#allocation4 + $0xe8] sm:$0xff] %v3120
    %3153 = vst [vmem:[#allocation4 + $0xf0] sm:$0xff] %v3121
    %3154 = vst [vmem:[#allocation4 + $0xf8] sm:$0xff] %v3122
    %v3155 = vld [vmem:[#allocation4] ss:$2 sm:$0xff]
    %s3156 = scalar_lea.vmem [#allocation4], 16
    %v3157 = vld [vmem:[%s3156] ss:$2 sm:$0xff]
    %s3158 = scalar_lea.vmem [#allocation4], 32
    %v3159 = vld [vmem:[%s3158] ss:$2 sm:$0xff]
    %s3160 = scalar_lea.vmem [#allocation4], 48
    %v3161 = vld [vmem:[%s3160] ss:$2 sm:$0xff]
    %s3162 = scalar_lea.vmem [#allocation4], 64
    %v3163 = vld [vmem:[%s3162] ss:$2 sm:$0xff]
    %s3164 = scalar_lea.vmem [#allocation4], 80
    %v3165 = vld [vmem:[%s3164] ss:$2 sm:$0xff]
    %s3166 = scalar_lea.vmem [#allocation4], 96
    %v3167 = vld [vmem:[%s3166] ss:$2 sm:$0xff]
    %s3168 = scalar_lea.vmem [#allocation4], 112
    %v3169 = vld [vmem:[%s3168] ss:$2 sm:$0xff]
    %s3170 = scalar_lea.vmem [#allocation4], 128
    %v3171 = vld [vmem:[%s3170] ss:$2 sm:$0xff]
    %s3172 = scalar_lea.vmem [#allocation4], 144
    %v3173 = vld [vmem:[%s3172] ss:$2 sm:$0xff]
    %s3174 = scalar_lea.vmem [#allocation4], 160
    %v3175 = vld [vmem:[%s3174] ss:$2 sm:$0xff]
    %s3176 = scalar_lea.vmem [#allocation4], 176
    %v3177 = vld [vmem:[%s3176] ss:$2 sm:$0xff]
    %s3178 = scalar_lea.vmem [#allocation4], 192
    %v3179 = vld [vmem:[%s3178] ss:$2 sm:$0xff]
    %s3180 = scalar_lea.vmem [#allocation4], 208
    %v3181 = vld [vmem:[%s3180] ss:$2 sm:$0xff]
    %s3182 = scalar_lea.vmem [#allocation4], 224
    %v3183 = vld [vmem:[%s3182] ss:$2 sm:$0xff]
    %s3184 = scalar_lea.vmem [#allocation4], 240
    %v3185 = vld [vmem:[%s3184] ss:$2 sm:$0xff]
    %s3186 = scalar_lea.vmem [#allocation4], 1
    %v3187 = vld [vmem:[%s3186] ss:$2 sm:$0xff]
    %s3188 = scalar_lea.vmem [#allocation4], 17
    %v3189 = vld [vmem:[%s3188] ss:$2 sm:$0xff]
    %s3190 = scalar_lea.vmem [#allocation4], 33
    %v3191 = vld [vmem:[%s3190] ss:$2 sm:$0xff]
    %s3192 = scalar_lea.vmem [#allocation4], 49
    %v3193 = vld [vmem:[%s3192] ss:$2 sm:$0xff]
    %s3194 = scalar_lea.vmem [#allocation4], 65
    %v3195 = vld [vmem:[%s3194] ss:$2 sm:$0xff]
    %s3196 = scalar_lea.vmem [#allocation4], 81
    %v3197 = vld [vmem:[%s3196] ss:$2 sm:$0xff]
    %s3198 = scalar_lea.vmem [#allocation4], 97
    %v3199 = vld [vmem:[%s3198] ss:$2 sm:$0xff]
    %s3200 = scalar_lea.vmem [#allocation4], 113
    %v3201 = vld [vmem:[%s3200] ss:$2 sm:$0xff]
    %s3202 = scalar_lea.vmem [#allocation4], 129
    %v3203 = vld [vmem:[%s3202] ss:$2 sm:$0xff]
    %s3204 = scalar_lea.vmem [#allocation4], 145
    %v3205 = vld [vmem:[%s3204] ss:$2 sm:$0xff]
    %s3206 = scalar_lea.vmem [#allocation4], 161
    %v3207 = vld [vmem:[%s3206] ss:$2 sm:$0xff]
    %s3208 = scalar_lea.vmem [#allocation4], 177
    %v3209 = vld [vmem:[%s3208] ss:$2 sm:$0xff]
    %s3210 = scalar_lea.vmem [#allocation4], 193
    %v3211 = vld [vmem:[%s3210] ss:$2 sm:$0xff]
    %s3212 = scalar_lea.vmem [#allocation4], 209
    %v3213 = vld [vmem:[%s3212] ss:$2 sm:$0xff]
    %s3214 = scalar_lea.vmem [#allocation4], 225
    %v3215 = vld [vmem:[%s3214] ss:$2 sm:$0xff]
    %s3216 = scalar_lea.vmem [#allocation4], 241
    %v3217 = vld [vmem:[%s3216] ss:$2 sm:$0xff]
    %v3218 = vmax.f32 %v3155, %v3187
    %v3219 = vmax.f32 %v3157, %v3189
    %v3220 = vmax.f32 %v3159, %v3191
    %v3221 = vmax.f32 %v3161, %v3193
    %v3222 = vmax.f32 %v3163, %v3195
    %v3223 = vmax.f32 %v3165, %v3197
    %v3224 = vmax.f32 %v3167, %v3199
    %v3225 = vmax.f32 %v3169, %v3201
    %v3226 = vmax.f32 %v3171, %v3203
    %v3227 = vmax.f32 %v3173, %v3205
    %v3228 = vmax.f32 %v3175, %v3207
    %v3229 = vmax.f32 %v3177, %v3209
    %v3230 = vmax.f32 %v3179, %v3211
    %v3231 = vmax.f32 %v3181, %v3213
    %v3232 = vmax.f32 %v3183, %v3215
    %v3233 = vmax.f32 %v3185, %v3217
    %3234 = vst [vmem:[#allocation5] sm:$0xff] %v3218
    %3235 = vst [vmem:[#allocation5 + $0x8] sm:$0xff] %v3219
    %3236 = vst [vmem:[#allocation5 + $0x10] sm:$0xff] %v3220
    %3237 = vst [vmem:[#allocation5 + $0x18] sm:$0xff] %v3221
    %3238 = vst [vmem:[#allocation5 + $0x20] sm:$0xff] %v3222
    %3239 = vst [vmem:[#allocation5 + $0x28] sm:$0xff] %v3223
    %3240 = vst [vmem:[#allocation5 + $0x30] sm:$0xff] %v3224
    %3241 = vst [vmem:[#allocation5 + $0x38] sm:$0xff] %v3225
    %3242 = vst [vmem:[#allocation5 + $0x40] sm:$0xff] %v3226
    %3243 = vst [vmem:[#allocation5 + $0x48] sm:$0xff] %v3227
    %3244 = vst [vmem:[#allocation5 + $0x50] sm:$0xff] %v3228
    %3245 = vst [vmem:[#allocation5 + $0x58] sm:$0xff] %v3229
    %3246 = vst [vmem:[#allocation5 + $0x60] sm:$0xff] %v3230
    %3247 = vst [vmem:[#allocation5 + $0x68] sm:$0xff] %v3231
    %3248 = vst [vmem:[#allocation5 + $0x70] sm:$0xff] %v3232
    %3249 = vst [vmem:[#allocation5 + $0x78] sm:$0xff] %v3233
    // Predicated region
    $region18: #{tpu_custom_call.1} parent=1 // pred_check
      _
    $region19: #{tpu_custom_call.1} parent=1 // pred_check_branch
      %3251 = sbr.rel (0) target = $region21
    $region20: #{tpu_custom_call.1} parent=1 // pred_region
      %s3253 = ssub.s32 2048, 2048
      %3254 = vsyncadd [#allocation6], %s3253
      %s3255 = sshll.u32 [#allocation5], 4
      %s3256 = int_to_ptr.vmem [resolvable:$true] %s3255
      %3261 = dma.vmem_to_hbm [thread:$0]  %s3256, 2048, %s4, [#allocation6], 128, 128, 8
    $region21: #{tpu_custom_call.1} parent=1 // pred_fallthru
      _
    // Predicated region
    $region22: #{tpu_custom_call.1} parent=1 // pred_check
      _
    $region23: #{tpu_custom_call.1} parent=1 // pred_check_branch
      %3263 = sbr.rel (0) target = $region25
    $region24: #{tpu_custom_call.1} parent=1 // pred_region
      %3264 = dma.done [#allocation6], 2048
    $region25: #{tpu_custom_call.1} parent=1 // pred_fallthru
      _
    %3265 = vsyncpa [#allocation6], 1

</llo_original>
